<compile_context>
chip_gen: v5e
topology: v5e:2x2
jax: 0.10.0
libtpu: 0.0.40
codegen_flags: <defaults>
</compile_context>

<pallas_src>
import jax
import jax.numpy as jnp
from jax.experimental import pallas as pl
from jax.experimental.pallas import tpu as pltpu

IN_DIM = 3 * 32 * 32            # 3072 (already a multiple of 128)
H1, H2, H3, OUT = 200, 100, 55, 10
H1P, H2P, H3P, OUTP = 256, 128, 128, 128   # lane-padded widths


def _round_up(x, m):
    return ((x + m - 1) // m) * m


def _pick_tb_max():
    """Batch-tile cap: 512 is safe on 64 MiB-VMEM v7x; go bigger on 128 MiB parts."""
    try:
        vmem_bytes = pltpu.get_tpu_info().vmem_capacity_bytes
        return 1024 if vmem_bytes >= (96 << 20) else 512
    except Exception:
        return 512


def dnn8_kernel(x_ref,
                w1_ref, b1_ref,
                w2_ref, b2_ref,
                w3_ref, b3_ref,
                w4_ref, b4_ref,
                o_ref):
    # Fused 4-layer MLP on one batch tile. Weights/biases are VMEM-resident
    # (constant index_map); dots accumulate in f32, activations carried in the
    # (possibly bf16) compute dtype of the weights.
    cdt = w1_ref.dtype
    x = x_ref[...]

    h = jnp.dot(x, w1_ref[...], preferred_element_type=jnp.float32) + b1_ref[...]
    h = jnp.maximum(h, 0.0).astype(cdt)

    h = jnp.dot(h, w2_ref[...], preferred_element_type=jnp.float32) + b2_ref[...]
    h = jnp.maximum(h, 0.0).astype(cdt)

    h = jnp.dot(h, w3_ref[...], preferred_element_type=jnp.float32) + b3_ref[...]
    h = jnp.maximum(h, 0.0).astype(cdt)

    h = jnp.dot(h, w4_ref[...], preferred_element_type=jnp.float32) + b4_ref[...]

    o_ref[...] = h.astype(o_ref.dtype)


def _pad_linear(w, b, in_pad, out_pad, compute_dtype):
    """PyTorch-style W [out, in], b [out] -> padded [in_pad, out_pad] W^T and [1, out_pad] b."""
    out_dim, in_dim = w.shape
    wt = jnp.zeros((in_pad, out_pad), jnp.float32)
    wt = wt.at[:in_dim, :out_dim].set(w.T)
    br = jnp.zeros((1, out_pad), jnp.float32)
    br = br.at[0, :out_dim].set(b)
    return wt.astype(compute_dtype), br  # bias stays f32 (added post-accumulation)


def dnn8_forward(x, params, compute_dtype=jnp.bfloat16):
    """x: [B, 3, 32, 32] float32 (NCHW). Returns logits [B, 10] float32."""
    B = x.shape[0]
    x_flat = x.reshape(B, IN_DIM)  # same flatten order as torch.flatten(x, 1)

    # Batch tiling: TB a multiple of 128 (MXU/sublane friendly), batch zero-padded
    # to a multiple of TB so the grid divides exactly.
    TB = min(_pick_tb_max(), _round_up(B, 128))
    B_pad = _round_up(B, TB)
    if B_pad != B:
        x_flat = jnp.pad(x_flat, ((0, B_pad - B), (0, 0)))
    x_flat = x_flat.astype(compute_dtype)

    (w1, b1), (w2, b2), (w3, b3), (w4, b4) = params
    w1t, b1r = _pad_linear(w1, b1, IN_DIM, H1P, compute_dtype)
    w2t, b2r = _pad_linear(w2, b2, H1P,    H2P, compute_dtype)
    w3t, b3r = _pad_linear(w3, b3, H2P,    H3P, compute_dtype)
    w4t, b4r = _pad_linear(w4, b4, H3P,   OUTP, compute_dtype)

    grid = (B_pad // TB,)
    resident = lambda i: (0, 0)   # weights/biases: same block every step -> DMA'd once

    dtype_bytes = jnp.dtype(compute_dtype).itemsize
    flops = 2 * B_pad * (IN_DIM * H1P + H1P * H2P + H2P * H3P + H3P * OUTP)
    bytes_accessed = (
        B_pad * IN_DIM * dtype_bytes                                    # x
        + (IN_DIM * H1P + H1P * H2P + H2P * H3P + H3P * OUTP) * dtype_bytes  # weights
        + (H1P + H2P + H3P + OUTP) * 4                                  # biases
        + B_pad * OUTP * 4                                              # output
    )

    out = pl.pallas_call(
        dnn8_kernel,
        out_shape=jax.ShapeDtypeStruct((B_pad, OUTP), jnp.float32),
        grid=grid,
        in_specs=[
            pl.BlockSpec((TB, IN_DIM), lambda i: (i, 0)),   # x: tiled along batch
            pl.BlockSpec((IN_DIM, H1P), resident),
            pl.BlockSpec((1, H1P), resident),
            pl.BlockSpec((H1P, H2P), resident),
            pl.BlockSpec((1, H2P), resident),
            pl.BlockSpec((H2P, H3P), resident),
            pl.BlockSpec((1, H3P), resident),
            pl.BlockSpec((H3P, OUTP), resident),
            pl.BlockSpec((1, OUTP), resident),
        ],
        out_specs=pl.BlockSpec((TB, OUTP), lambda i: (i, 0)),
        compiler_params=pltpu.CompilerParams(
            dimension_semantics=("parallel",),
        ),
        cost_estimate=pl.CostEstimate(
            flops=flops, transcendentals=0, bytes_accessed=bytes_accessed),
    )(x_flat, w1t, b1r, w2t, b2r, w3t, b3r, w4t, b4r)

    return out[:B, :OUT]


def init_params(key):
    """Deterministic init mimicking nn.Linear default (uniform(-1/sqrt(in), 1/sqrt(in)))."""
    dims = [(IN_DIM, H1), (H1, H2), (H2, H3), (H3, OUT)]
    params = []
    for (fan_in, fan_out) in dims:
        key, kw, kb = jax.random.split(key, 3)
        bound = 1.0 / jnp.sqrt(fan_in)
        w = jax.random.uniform(kw, (fan_out, fan_in), jnp.float32, -bound, bound)
        b = jax.random.uniform(kb, (fan_out,), jnp.float32, -bound, bound)
        params.append((w, b))
    return params


def reference_forward(x, params):
    """Plain-JAX f32 reference with identical semantics (for sanity check)."""
    B = x.shape[0]
    h = x.reshape(B, IN_DIM)
    (w1, b1), (w2, b2), (w3, b3), (w4, b4) = params
    h = jnp.maximum(h @ w1.T + b1, 0.0)
    h = jnp.maximum(h @ w2.T + b2, 0.0)
    h = jnp.maximum(h @ w3.T + b3, 0.0)
    h = h @ w4.T + b4
    return h


if __name__ == "__main__":
    key = jax.random.PRNGKey(0)
    key, kx = jax.random.split(key)

    B = 2
    x = jax.random.normal(kx, (B, 3, 32, 32), dtype=jnp.float32)
    params = init_params(key)
    ref = reference_forward(x, params)

    # f32 compute path: must match the reference tightly.
    out_f32 = jax.block_until_ready(dnn8_forward(x, params, compute_dtype=jnp.float32))
    assert out_f32.shape == (B, OUT)
    assert jnp.allclose(out_f32, ref, atol=1e-4, rtol=1e-4)

    # bf16 compute path (default / fast): f32 accumulation, looser tolerance.
    out_bf16 = jax.block_until_ready(dnn8_forward(x, params))
    assert out_bf16.shape == (B, OUT)
    assert jnp.allclose(out_bf16, ref, atol=5e-2, rtol=5e-2)

    print("KERNEL_OK")
</pallas_src>

<mosaic_0001>
module attributes {stable_mosaic.version = 11 : i64} {
  func.func @dnn8_kernel(%arg0: i32, %arg1: memref<128x3072xf32, #tpu.memory_space<vmem>>, %arg2: memref<3072x256xf32, #tpu.memory_space<vmem>>, %arg3: memref<1x256xf32, #tpu.memory_space<vmem>>, %arg4: memref<256x128xf32, #tpu.memory_space<vmem>>, %arg5: memref<1x128xf32, #tpu.memory_space<vmem>>, %arg6: memref<128x128xf32, #tpu.memory_space<vmem>>, %arg7: memref<1x128xf32, #tpu.memory_space<vmem>>, %arg8: memref<128x128xf32, #tpu.memory_space<vmem>>, %arg9: memref<1x128xf32, #tpu.memory_space<vmem>>, %arg10: memref<128x128xf32, #tpu.memory_space<vmem>>) attributes {dimension_semantics = [#tpu.dimension_semantics<parallel>], iteration_bounds = array<i64: 1>, scalar_prefetch = 0 : i64, scratch_operands = 0 : i64, tpu.core_type = #tpu.core_type<tc>, window_params = [{transform_indices = @transform_0, window_bounds = array<i64: 128, 3072>}, {pipeline_mode = #tpu.pipeline_mode<synchronous>, transform_indices = @transform_1, window_bounds = array<i64: 3072, 256>}, {pipeline_mode = #tpu.pipeline_mode<synchronous>, transform_indices = @transform_2, window_bounds = array<i64: 1, 256>}, {pipeline_mode = #tpu.pipeline_mode<synchronous>, transform_indices = @transform_3, window_bounds = array<i64: 256, 128>}, {pipeline_mode = #tpu.pipeline_mode<synchronous>, transform_indices = @transform_4, window_bounds = array<i64: 1, 128>}, {pipeline_mode = #tpu.pipeline_mode<synchronous>, transform_indices = @transform_5, window_bounds = array<i64: 128, 128>}, {pipeline_mode = #tpu.pipeline_mode<synchronous>, transform_indices = @transform_6, window_bounds = array<i64: 1, 128>}, {pipeline_mode = #tpu.pipeline_mode<synchronous>, transform_indices = @transform_7, window_bounds = array<i64: 128, 128>}, {pipeline_mode = #tpu.pipeline_mode<synchronous>, transform_indices = @transform_8, window_bounds = array<i64: 1, 128>}, {transform_indices = @transform_9, window_bounds = array<i64: 128, 128>}]} {
    %c0 = arith.constant 0 : index
    %c0_0 = arith.constant 0 : index
    %0 = vector.load %arg1[%c0, %c0_0] : memref<128x3072xf32, #tpu.memory_space<vmem>>, vector<128x3072xf32>
    %c0_1 = arith.constant 0 : index
    %c0_2 = arith.constant 0 : index
    %1 = vector.load %arg2[%c0_1, %c0_2] : memref<3072x256xf32, #tpu.memory_space<vmem>>, vector<3072x256xf32>
    %cst = arith.constant dense<0.000000e+00> : vector<128x256xf32>
    %2 = tpu.matmul %0, %1, %cst {dimension_numbers = #tpu.dot_dimension_numbers<[1], [0], [0], [1], [0, 0, 1, 1], [], []>} : vector<128x3072xf32>, vector<3072x256xf32>, vector<128x256xf32> -> vector<128x256xf32>
    %c0_3 = arith.constant 0 : index
    %c0_4 = arith.constant 0 : index
    %3 = vector.load %arg3[%c0_3, %c0_4] : memref<1x256xf32, #tpu.memory_space<vmem>>, vector<1x256xf32>
    %4 = vector.broadcast %3 : vector<1x256xf32> to vector<128x256xf32>
    %5 = arith.addf %2, %4 : vector<128x256xf32>
    %cst_5 = arith.constant 0.000000e+00 : f32
    %6 = vector.broadcast %cst_5 : f32 to vector<128x256xf32>
    %7 = arith.maximumf %5, %6 : vector<128x256xf32>
    %c0_6 = arith.constant 0 : index
    %c0_7 = arith.constant 0 : index
    %8 = vector.load %arg4[%c0_6, %c0_7] : memref<256x128xf32, #tpu.memory_space<vmem>>, vector<256x128xf32>
    %cst_8 = arith.constant dense<0.000000e+00> : vector<128x128xf32>
    %9 = tpu.matmul %7, %8, %cst_8 {dimension_numbers = #tpu.dot_dimension_numbers<[1], [0], [0], [1], [0, 0, 1, 1], [], []>} : vector<128x256xf32>, vector<256x128xf32>, vector<128x128xf32> -> vector<128x128xf32>
    %c0_9 = arith.constant 0 : index
    %c0_10 = arith.constant 0 : index
    %10 = vector.load %arg5[%c0_9, %c0_10] : memref<1x128xf32, #tpu.memory_space<vmem>>, vector<1x128xf32>
    %11 = vector.broadcast %10 : vector<1x128xf32> to vector<128x128xf32>
    %12 = arith.addf %9, %11 : vector<128x128xf32>
    %cst_11 = arith.constant 0.000000e+00 : f32
    %13 = vector.broadcast %cst_11 : f32 to vector<128x128xf32>
    %14 = arith.maximumf %12, %13 : vector<128x128xf32>
    %c0_12 = arith.constant 0 : index
    %c0_13 = arith.constant 0 : index
    %15 = vector.load %arg6[%c0_12, %c0_13] : memref<128x128xf32, #tpu.memory_space<vmem>>, vector<128x128xf32>
    %cst_14 = arith.constant dense<0.000000e+00> : vector<128x128xf32>
    %16 = tpu.matmul %14, %15, %cst_14 {dimension_numbers = #tpu.dot_dimension_numbers<[1], [0], [0], [1], [0, 0, 1, 1], [], []>} : vector<128x128xf32>, vector<128x128xf32>, vector<128x128xf32> -> vector<128x128xf32>
    %c0_15 = arith.constant 0 : index
    %c0_16 = arith.constant 0 : index
    %17 = vector.load %arg7[%c0_15, %c0_16] : memref<1x128xf32, #tpu.memory_space<vmem>>, vector<1x128xf32>
    %18 = vector.broadcast %17 : vector<1x128xf32> to vector<128x128xf32>
    %19 = arith.addf %16, %18 : vector<128x128xf32>
    %cst_17 = arith.constant 0.000000e+00 : f32
    %20 = vector.broadcast %cst_17 : f32 to vector<128x128xf32>
    %21 = arith.maximumf %19, %20 : vector<128x128xf32>
    %c0_18 = arith.constant 0 : index
    %c0_19 = arith.constant 0 : index
    %22 = vector.load %arg8[%c0_18, %c0_19] : memref<128x128xf32, #tpu.memory_space<vmem>>, vector<128x128xf32>
    %cst_20 = arith.constant dense<0.000000e+00> : vector<128x128xf32>
    %23 = tpu.matmul %21, %22, %cst_20 {dimension_numbers = #tpu.dot_dimension_numbers<[1], [0], [0], [1], [0, 0, 1, 1], [], []>} : vector<128x128xf32>, vector<128x128xf32>, vector<128x128xf32> -> vector<128x128xf32>
    %c0_21 = arith.constant 0 : index
    %c0_22 = arith.constant 0 : index
    %24 = vector.load %arg9[%c0_21, %c0_22] : memref<1x128xf32, #tpu.memory_space<vmem>>, vector<1x128xf32>
    %25 = vector.broadcast %24 : vector<1x128xf32> to vector<128x128xf32>
    %26 = arith.addf %23, %25 : vector<128x128xf32>
    %c0_23 = arith.constant 0 : index
    %c0_24 = arith.constant 0 : index
    %27 = vector.load %arg10[%c0_23, %c0_24] : memref<128x128xf32, #tpu.memory_space<vmem>>, vector<128x128xf32>
    tpu.vector_store %arg10[%c0_23, %c0_24], %26 {strides = array<i32>} : memref<128x128xf32, #tpu.memory_space<vmem>>, vector<128x128xf32>,
    return
  }
  func.func @transform_0(%arg0: i32) -> (i32, i32) {
    %c0_i32 = arith.constant 0 : i32
    %c0_i32_0 = arith.constant 0 : i32
    return %arg0, %c0_i32 : i32, i32
  }
  func.func @transform_1(%arg0: i32) -> (i32, i32) {
    %c0_i32 = arith.constant 0 : i32
    %c0_i32_0 = arith.constant 0 : i32
    %c0_i32_1 = arith.constant 0 : i32
    return %c0_i32, %c0_i32_0 : i32, i32
  }
  func.func @transform_2(%arg0: i32) -> (i32, i32) {
    %c0_i32 = arith.constant 0 : i32
    %c0_i32_0 = arith.constant 0 : i32
    %c0_i32_1 = arith.constant 0 : i32
    return %c0_i32, %c0_i32_0 : i32, i32
  }
  func.func @transform_3(%arg0: i32) -> (i32, i32) {
    %c0_i32 = arith.constant 0 : i32
    %c0_i32_0 = arith.constant 0 : i32
    %c0_i32_1 = arith.constant 0 : i32
    return %c0_i32, %c0_i32_0 : i32, i32
  }
  func.func @transform_4(%arg0: i32) -> (i32, i32) {
    %c0_i32 = arith.constant 0 : i32
    %c0_i32_0 = arith.constant 0 : i32
    %c0_i32_1 = arith.constant 0 : i32
    return %c0_i32, %c0_i32_0 : i32, i32
  }
  func.func @transform_5(%arg0: i32) -> (i32, i32) {
    %c0_i32 = arith.constant 0 : i32
    %c0_i32_0 = arith.constant 0 : i32
    %c0_i32_1 = arith.constant 0 : i32
    return %c0_i32, %c0_i32_0 : i32, i32
  }
  func.func @transform_6(%arg0: i32) -> (i32, i32) {
    %c0_i32 = arith.constant 0 : i32
    %c0_i32_0 = arith.constant 0 : i32
    %c0_i32_1 = arith.constant 0 : i32
    return %c0_i32, %c0_i32_0 : i32, i32
  }
  func.func @transform_7(%arg0: i32) -> (i32, i32) {
    %c0_i32 = arith.constant 0 : i32
    %c0_i32_0 = arith.constant 0 : i32
    %c0_i32_1 = arith.constant 0 : i32
    return %c0_i32, %c0_i32_0 : i32, i32
  }
  func.func @transform_8(%arg0: i32) -> (i32, i32) {
    %c0_i32 = arith.constant 0 : i32
    %c0_i32_0 = arith.constant 0 : i32
    %c0_i32_1 = arith.constant 0 : i32
    return %c0_i32, %c0_i32_0 : i32, i32
  }
  func.func @transform_9(%arg0: i32) -> (i32, i32) {
    %c0_i32 = arith.constant 0 : i32
    %c0_i32_0 = arith.constant 0 : i32
    return %arg0, %c0_i32 : i32, i32
  }
}

</mosaic_0001>

<llo_original>
// kernel: tpu_custom_call.1
$region0: #{tpu_custom_call.1}
  #allocation0 [shape = 'u32[]', space=smem, size = 0x4, offset = 0x4, fixed_abs, tag = 'smem constant byte address 0x4 - core index']
  #allocation1 [shape = 'u32[72,128]{1,0:T(1,128)}', space=vmem, size = 0x9000, scoped, tag = 'internal scratch']
  %s0 = inlined_call_operand.hbm [shape: f32[128,3072], index: 0, kind: input, shape index: {}]
  %s1 = inlined_call_operand.hbm [shape: f32[3072,256], index: 1, kind: input, shape index: {}]
  %s2 = inlined_call_operand.hbm [shape: f32[1,256], index: 2, kind: input, shape index: {}]
  %s3 = inlined_call_operand.hbm [shape: f32[256,128], index: 3, kind: input, shape index: {}]
  %s4 = inlined_call_operand.hbm [shape: f32[1,128], index: 4, kind: input, shape index: {}]
  %s5 = inlined_call_operand.hbm [shape: f32[128,128], index: 5, kind: input, shape index: {}]
  %s6 = inlined_call_operand.hbm [shape: f32[1,128], index: 6, kind: input, shape index: {}]
  %s7 = inlined_call_operand.hbm [shape: f32[128,128], index: 7, kind: input, shape index: {}]
  %s8 = inlined_call_operand.hbm [shape: f32[1,128], index: 8, kind: input, shape index: {}]
  %s9 = inlined_call_operand.hbm [shape: f32[128,128], index: 9, kind: output, shape index: {}]
  %s10 = sld [smem:[#allocation0]]
  $region82: #{tpu_custom_call.1} parent=0
    _
  %s12 = ssub.s32 1, %s10
  %s13 = scalar_select 0, %s12, %s10
  $region1: #{tpu_custom_call.1} parent=0
    #allocation2 [shape = 'u8[1572864]{0}', space=vmem, size = 0x180000, scoped, tag = 'input window, operand 0, single buffered']
    #allocation3 [shape = 's32[1]{0}', space=sflag, size = 0x4, scoped, tag = 'scoped memory for tpu_custom_call.1']
    #allocation4 [shape = 's32[1]{0}', space=sflag, size = 0x4, scoped, tag = 'scoped memory for tpu_custom_call.1']
    #allocation5 [shape = 'u8[3145728]{0}', space=vmem, size = 0x300000, scoped, tag = 'input window, operand 1, single buffered']
    #allocation6 [shape = 's32[1]{0}', space=sflag, size = 0x4, scoped, tag = 'scoped memory for tpu_custom_call.1']
    #allocation7 [shape = 'u8[1024]{0}', space=vmem, size = 0x400, scoped, tag = 'input window, operand 2, single buffered']
    #allocation8 [shape = 'u8[131072]{0}', space=vmem, size = 0x20000, scoped, tag = 'input window, operand 3, single buffered']
    #allocation9 [shape = 's32[1]{0}', space=sflag, size = 0x4, scoped, tag = 'scoped memory for tpu_custom_call.1']
    #allocation10 [shape = 'u8[512]{0}', space=vmem, size = 0x400, scoped, tag = 'input window, operand 4, single buffered']
    #allocation11 [shape = 'u8[65536]{0}', space=vmem, size = 0x10000, scoped, tag = 'input window, operand 5, single buffered']
    #allocation12 [shape = 's32[1]{0}', space=sflag, size = 0x4, scoped, tag = 'scoped memory for tpu_custom_call.1']
    #allocation13 [shape = 'u8[512]{0}', space=vmem, size = 0x400, scoped, tag = 'input window, operand 6, single buffered']
    #allocation14 [shape = 'u8[65536]{0}', space=vmem, size = 0x10000, scoped, tag = 'input window, operand 7, single buffered']
    #allocation15 [shape = 's32[1]{0}', space=sflag, size = 0x4, scoped, tag = 'scoped memory for tpu_custom_call.1']
    #allocation16 [shape = 'u8[512]{0}', space=vmem, size = 0x400, scoped, tag = 'input window, operand 8, single buffered']
    #allocation17 [shape = 'u8[65536]{0}', space=vmem, size = 0x10000, scoped, tag = 'output window, operand 0, single buffered']
    %14 = vsyncpa [#allocation3], 0
    %15 = vsyncpa [#allocation6], 0
    %16 = vsyncpa [#allocation9], 0
    %17 = vsyncpa [#allocation12], 0
    %18 = vsyncpa [#allocation15], 0
    %19 = vsyncpa [#allocation4], 0
    // Predicated region
    $region2: #{tpu_custom_call.1} parent=1 // pred_check
      _
    $region3: #{tpu_custom_call.1} parent=1 // pred_check_branch
      %21 = sbr.rel (0) target = $region5
    $region4: #{tpu_custom_call.1} parent=1 // pred_region
      %23 = vsyncadd [#allocation3], 0
      %s24 = sshll.u32 %s0, 4
      %s25 = int_to_ptr.hbm [resolvable:$true] %s24
      %s26 = sshll.u32 [#allocation2], 4
      %s27 = int_to_ptr.vmem [resolvable:$true] %s26
      %32 = dma.hbm_to_vmem [thread:$0]  %s25, 49152, %s27, [#allocation3], 3072, 3072, 192
    $region5: #{tpu_custom_call.1} parent=1 // pred_fallthru
      _
    // Predicated region
    $region6: #{tpu_custom_call.1} parent=1 // pred_check
      _
    $region7: #{tpu_custom_call.1} parent=1 // pred_check_branch
      %34 = sbr.rel (0) target = $region9
    $region8: #{tpu_custom_call.1} parent=1 // pred_region
      %36 = vsyncadd [#allocation6], 0
      %s37 = sshll.u32 %s1, 4
      %s38 = int_to_ptr.hbm [resolvable:$true] %s37
      %s39 = sshll.u32 [#allocation5], 4
      %s40 = int_to_ptr.vmem [resolvable:$true] %s39
      %45 = dma.hbm_to_vmem [thread:$0]  %s38, 98304, %s40, [#allocation6], 256, 256, 16
    $region9: #{tpu_custom_call.1} parent=1 // pred_fallthru
      _
    // Predicated region
    $region10: #{tpu_custom_call.1} parent=1 // pred_check
      _
    $region11: #{tpu_custom_call.1} parent=1 // pred_check_branch
      %47 = sbr.rel (0) target = $region13
    $region12: #{tpu_custom_call.1} parent=1 // pred_region
      %49 = vsyncadd [#allocation6], 0
      %s51 = sshll.u32 %s2, 4
      %s52 = int_to_ptr.hbm [resolvable:$true] %s51
      %s53 = sshll.u32 [#allocation7], 4
      %s54 = int_to_ptr.vmem [resolvable:$true] %s53
      %56 = dma.hbm_to_vmem [thread:$0]  %s52, 32, %s54, [#allocation6]
    $region13: #{tpu_custom_call.1} parent=1 // pred_fallthru
      _
    // Predicated region
    $region14: #{tpu_custom_call.1} parent=1 // pred_check
      _
    $region15: #{tpu_custom_call.1} parent=1 // pred_check_branch
      %58 = sbr.rel (0) target = $region17
    $region16: #{tpu_custom_call.1} parent=1 // pred_region
      %60 = vsyncadd [#allocation9], 0
      %s61 = sshll.u32 %s3, 4
      %s62 = int_to_ptr.hbm [resolvable:$true] %s61
      %s63 = sshll.u32 [#allocation8], 4
      %s64 = int_to_ptr.vmem [resolvable:$true] %s63
      %69 = dma.hbm_to_vmem [thread:$0]  %s62, 4096, %s64, [#allocation9], 128, 128, 8
    $region17: #{tpu_custom_call.1} parent=1 // pred_fallthru
      _
    // Predicated region
    $region18: #{tpu_custom_call.1} parent=1 // pred_check
      _
    $region19: #{tpu_custom_call.1} parent=1 // pred_check_branch
      %71 = sbr.rel (0) target = $region21
    $region20: #{tpu_custom_call.1} parent=1 // pred_region
      %73 = vsyncadd [#allocation9], 0
      %s75 = sshll.u32 %s4, 4
      %s76 = int_to_ptr.hbm [resolvable:$true] %s75
      %s77 = sshll.u32 [#allocation10], 4
      %s78 = int_to_ptr.vmem [resolvable:$true] %s77
      %80 = dma.hbm_to_vmem [thread:$0]  %s76, 16, %s78, [#allocation9]
    $region21: #{tpu_custom_call.1} parent=1 // pred_fallthru
      _
    // Predicated region
    $region22: #{tpu_custom_call.1} parent=1 // pred_check
      _
    $region23: #{tpu_custom_call.1} parent=1 // pred_check_branch
      %82 = sbr.rel (0) target = $region25
    $region24: #{tpu_custom_call.1} parent=1 // pred_region
      %84 = vsyncadd [#allocation12], 0
      %s85 = sshll.u32 %s5, 4
      %s86 = int_to_ptr.hbm [resolvable:$true] %s85
      %s87 = sshll.u32 [#allocation11], 4
      %s88 = int_to_ptr.vmem [resolvable:$true] %s87
      %93 = dma.hbm_to_vmem [thread:$0]  %s86, 2048, %s88, [#allocation12], 128, 128, 8
    $region25: #{tpu_custom_call.1} parent=1 // pred_fallthru
      _
    // Predicated region
    $region26: #{tpu_custom_call.1} parent=1 // pred_check
      _
    $region27: #{tpu_custom_call.1} parent=1 // pred_check_branch
      %95 = sbr.rel (0) target = $region29
    $region28: #{tpu_custom_call.1} parent=1 // pred_region
      %97 = vsyncadd [#allocation12], 0
      %s99 = sshll.u32 %s6, 4
      %s100 = int_to_ptr.hbm [resolvable:$true] %s99
      %s101 = sshll.u32 [#allocation13], 4
      %s102 = int_to_ptr.vmem [resolvable:$true] %s101
      %104 = dma.hbm_to_vmem [thread:$0]  %s100, 16, %s102, [#allocation12]
    $region29: #{tpu_custom_call.1} parent=1 // pred_fallthru
      _
    // Predicated region
    $region30: #{tpu_custom_call.1} parent=1 // pred_check
      _
    $region31: #{tpu_custom_call.1} parent=1 // pred_check_branch
      %106 = sbr.rel (0) target = $region33
    $region32: #{tpu_custom_call.1} parent=1 // pred_region
      %108 = vsyncadd [#allocation15], 0
      %s109 = sshll.u32 %s7, 4
      %s110 = int_to_ptr.hbm [resolvable:$true] %s109
      %s111 = sshll.u32 [#allocation14], 4
      %s112 = int_to_ptr.vmem [resolvable:$true] %s111
      %117 = dma.hbm_to_vmem [thread:$0]  %s110, 2048, %s112, [#allocation15], 128, 128, 8
    $region33: #{tpu_custom_call.1} parent=1 // pred_fallthru
      _
    // Predicated region
    $region34: #{tpu_custom_call.1} parent=1 // pred_check
      _
    $region35: #{tpu_custom_call.1} parent=1 // pred_check_branch
      %119 = sbr.rel (0) target = $region37
    $region36: #{tpu_custom_call.1} parent=1 // pred_region
      %121 = vsyncadd [#allocation15], 0
      %s123 = sshll.u32 %s8, 4
      %s124 = int_to_ptr.hbm [resolvable:$true] %s123
      %s125 = sshll.u32 [#allocation16], 4
      %s126 = int_to_ptr.vmem [resolvable:$true] %s125
      %128 = dma.hbm_to_vmem [thread:$0]  %s124, 16, %s126, [#allocation15]
    $region37: #{tpu_custom_call.1} parent=1 // pred_fallthru
      _
    // Predicated region
    $region38: #{tpu_custom_call.1} parent=1 // pred_check
      _
    $region39: #{tpu_custom_call.1} parent=1 // pred_check_branch
      %130 = sbr.rel (0) target = $region41
    $region40: #{tpu_custom_call.1} parent=1 // pred_region
      %132 = dma.done [#allocation3], 49152
    $region41: #{tpu_custom_call.1} parent=1 // pred_fallthru
      _
    // Predicated region
    $region42: #{tpu_custom_call.1} parent=1 // pred_check
      _
    $region43: #{tpu_custom_call.1} parent=1 // pred_check_branch
      %134 = sbr.rel (0) target = $region45
    $region44: #{tpu_custom_call.1} parent=1 // pred_region
      %136 = dma.done [#allocation6], 98304
    $region45: #{tpu_custom_call.1} parent=1 // pred_fallthru
      _
    // Predicated region
    $region46: #{tpu_custom_call.1} parent=1 // pred_check
      _
    $region47: #{tpu_custom_call.1} parent=1 // pred_check_branch
      %138 = sbr.rel (0) target = $region49
    $region48: #{tpu_custom_call.1} parent=1 // pred_region
      %140 = dma.done [#allocation6], 32
    $region49: #{tpu_custom_call.1} parent=1 // pred_fallthru
      _
    // Predicated region
    $region50: #{tpu_custom_call.1} parent=1 // pred_check
      _
    $region51: #{tpu_custom_call.1} parent=1 // pred_check_branch
      %142 = sbr.rel (0) target = $region53
    $region52: #{tpu_custom_call.1} parent=1 // pred_region
      %144 = dma.done [#allocation9], 4096
    $region53: #{tpu_custom_call.1} parent=1 // pred_fallthru
      _
    // Predicated region
    $region54: #{tpu_custom_call.1} parent=1 // pred_check
      _
    $region55: #{tpu_custom_call.1} parent=1 // pred_check_branch
      %146 = sbr.rel (0) target = $region57
    $region56: #{tpu_custom_call.1} parent=1 // pred_region
      %148 = dma.done [#allocation9], 16
    $region57: #{tpu_custom_call.1} parent=1 // pred_fallthru
      _
    // Predicated region
    $region58: #{tpu_custom_call.1} parent=1 // pred_check
      _
    $region59: #{tpu_custom_call.1} parent=1 // pred_check_branch
      %150 = sbr.rel (0) target = $region61
    $region60: #{tpu_custom_call.1} parent=1 // pred_region
      %152 = dma.done [#allocation12], 2048
    $region61: #{tpu_custom_call.1} parent=1 // pred_fallthru
      _
    // Predicated region
    $region62: #{tpu_custom_call.1} parent=1 // pred_check
      _
    $region63: #{tpu_custom_call.1} parent=1 // pred_check_branch
      %154 = sbr.rel (0) target = $region65
    $region64: #{tpu_custom_call.1} parent=1 // pred_region
      %156 = dma.done [#allocation12], 16
    $region65: #{tpu_custom_call.1} parent=1 // pred_fallthru
      _
    // Predicated region
    $region66: #{tpu_custom_call.1} parent=1 // pred_check
      _
    $region67: #{tpu_custom_call.1} parent=1 // pred_check_branch
      %158 = sbr.rel (0) target = $region69
    $region68: #{tpu_custom_call.1} parent=1 // pred_region
      %160 = dma.done [#allocation15], 2048
    $region69: #{tpu_custom_call.1} parent=1 // pred_fallthru
      _
    // Predicated region
    $region70: #{tpu_custom_call.1} parent=1 // pred_check
      _
    $region71: #{tpu_custom_call.1} parent=1 // pred_check_branch
      %162 = sbr.rel (0) target = $region73
    $region72: #{tpu_custom_call.1} parent=1 // pred_region
      %164 = dma.done [#allocation15], 16
    $region73: #{tpu_custom_call.1} parent=1 // pred_fallthru
      _
    %v165 = vld [vmem:[#allocation2] sm:$0xff]
    %v166 = vld [vmem:[#allocation2 + $0x8] sm:$0xff]
    %v167 = vld [vmem:[#allocation2 + $0x10] sm:$0xff]
    %v168 = vld [vmem:[#allocation2 + $0x18] sm:$0xff]
    %v169 = vld [vmem:[#allocation2 + $0x20] sm:$0xff]
    %v170 = vld [vmem:[#allocation2 + $0x28] sm:$0xff]
    %v171 = vld [vmem:[#allocation2 + $0x30] sm:$0xff]
    %v172 = vld [vmem:[#allocation2 + $0x38] sm:$0xff]
    %v173 = vld [vmem:[#allocation2 + $0x40] sm:$0xff]
    %v174 = vld [vmem:[#allocation2 + $0x48] sm:$0xff]
    %v175 = vld [vmem:[#allocation2 + $0x50] sm:$0xff]
    %v176 = vld [vmem:[#allocation2 + $0x58] sm:$0xff]
    %v177 = vld [vmem:[#allocation2 + $0x60] sm:$0xff]
    %v178 = vld [vmem:[#allocation2 + $0x68] sm:$0xff]
    %v179 = vld [vmem:[#allocation2 + $0x70] sm:$0xff]
    %v180 = vld [vmem:[#allocation2 + $0x78] sm:$0xff]
    %v181 = vld [vmem:[#allocation2 + $0x80] sm:$0xff]
    %v182 = vld [vmem:[#allocation2 + $0x88] sm:$0xff]
    %v183 = vld [vmem:[#allocation2 + $0x90] sm:$0xff]
    %v184 = vld [vmem:[#allocation2 + $0x98] sm:$0xff]
    %v185 = vld [vmem:[#allocation2 + $0xa0] sm:$0xff]
    %v186 = vld [vmem:[#allocation2 + $0xa8] sm:$0xff]
    %v187 = vld [vmem:[#allocation2 + $0xb0] sm:$0xff]
    %v188 = vld [vmem:[#allocation2 + $0xb8] sm:$0xff]
    %v189 = vld [vmem:[#allocation2 + $0xc0] sm:$0xff]
    %v190 = vld [vmem:[#allocation2 + $0xc8] sm:$0xff]
    %v191 = vld [vmem:[#allocation2 + $0xd0] sm:$0xff]
    %v192 = vld [vmem:[#allocation2 + $0xd8] sm:$0xff]
    %v193 = vld [vmem:[#allocation2 + $0xe0] sm:$0xff]
    %v194 = vld [vmem:[#allocation2 + $0xe8] sm:$0xff]
    %v195 = vld [vmem:[#allocation2 + $0xf0] sm:$0xff]
    %v196 = vld [vmem:[#allocation2 + $0xf8] sm:$0xff]
    %v197 = vld [vmem:[#allocation2 + $0x100] sm:$0xff]
    %v198 = vld [vmem:[#allocation2 + $0x108] sm:$0xff]
    %v199 = vld [vmem:[#allocation2 + $0x110] sm:$0xff]
    %v200 = vld [vmem:[#allocation2 + $0x118] sm:$0xff]
    %v201 = vld [vmem:[#allocation2 + $0x120] sm:$0xff]
    %v202 = vld [vmem:[#allocation2 + $0x128] sm:$0xff]
    %v203 = vld [vmem:[#allocation2 + $0x130] sm:$0xff]
    %v204 = vld [vmem:[#allocation2 + $0x138] sm:$0xff]
    %v205 = vld [vmem:[#allocation2 + $0x140] sm:$0xff]
    %v206 = vld [vmem:[#allocation2 + $0x148] sm:$0xff]
    %v207 = vld [vmem:[#allocation2 + $0x150] sm:$0xff]
    %v208 = vld [vmem:[#allocation2 + $0x158] sm:$0xff]
    %v209 = vld [vmem:[#allocation2 + $0x160] sm:$0xff]
    %v210 = vld [vmem:[#allocation2 + $0x168] sm:$0xff]
    %v211 = vld [vmem:[#allocation2 + $0x170] sm:$0xff]
    %v212 = vld [vmem:[#allocation2 + $0x178] sm:$0xff]
    %v213 = vld [vmem:[#allocation2 + $0x180] sm:$0xff]
    %v214 = vld [vmem:[#allocation2 + $0x188] sm:$0xff]
    %v215 = vld [vmem:[#allocation2 + $0x190] sm:$0xff]
    %v216 = vld [vmem:[#allocation2 + $0x198] sm:$0xff]
    %v217 = vld [vmem:[#allocation2 + $0x1a0] sm:$0xff]
    %v218 = vld [vmem:[#allocation2 + $0x1a8] sm:$0xff]
    %v219 = vld [vmem:[#allocation2 + $0x1b0] sm:$0xff]
    %v220 = vld [vmem:[#allocation2 + $0x1b8] sm:$0xff]
    %v221 = vld [vmem:[#allocation2 + $0x1c0] sm:$0xff]
    %v222 = vld [vmem:[#allocation2 + $0x1c8] sm:$0xff]
    %v223 = vld [vmem:[#allocation2 + $0x1d0] sm:$0xff]
    %v224 = vld [vmem:[#allocation2 + $0x1d8] sm:$0xff]
    %v225 = vld [vmem:[#allocation2 + $0x1e0] sm:$0xff]
    %v226 = vld [vmem:[#allocation2 + $0x1e8] sm:$0xff]
    %v227 = vld [vmem:[#allocation2 + $0x1f0] sm:$0xff]
    %v228 = vld [vmem:[#allocation2 + $0x1f8] sm:$0xff]
    %v229 = vld [vmem:[#allocation2 + $0x200] sm:$0xff]
    %v230 = vld [vmem:[#allocation2 + $0x208] sm:$0xff]
    %v231 = vld [vmem:[#allocation2 + $0x210] sm:$0xff]
    %v232 = vld [vmem:[#allocation2 + $0x218] sm:$0xff]
    %v233 = vld [vmem:[#allocation2 + $0x220] sm:$0xff]
    %v234 = vld [vmem:[#allocation2 + $0x228] sm:$0xff]
    %v235 = vld [vmem:[#allocation2 + $0x230] sm:$0xff]
    %v236 = vld [vmem:[#allocation2 + $0x238] sm:$0xff]
    %v237 = vld [vmem:[#allocation2 + $0x240] sm:$0xff]
    %v238 = vld [vmem:[#allocation2 + $0x248] sm:$0xff]
    %v239 = vld [vmem:[#allocation2 + $0x250] sm:$0xff]
    %v240 = vld [vmem:[#allocation2 + $0x258] sm:$0xff]
    %v241 = vld [vmem:[#allocation2 + $0x260] sm:$0xff]
    %v242 = vld [vmem:[#allocation2 + $0x268] sm:$0xff]
    %v243 = vld [vmem:[#allocation2 + $0x270] sm:$0xff]
    %v244 = vld [vmem:[#allocation2 + $0x278] sm:$0xff]
    %v245 = vld [vmem:[#allocation2 + $0x280] sm:$0xff]
    %v246 = vld [vmem:[#allocation2 + $0x288] sm:$0xff]
    %v247 = vld [vmem:[#allocation2 + $0x290] sm:$0xff]
    %v248 = vld [vmem:[#allocation2 + $0x298] sm:$0xff]
    %v249 = vld [vmem:[#allocation2 + $0x2a0] sm:$0xff]
    %v250 = vld [vmem:[#allocation2 + $0x2a8] sm:$0xff]
    %v251 = vld [vmem:[#allocation2 + $0x2b0] sm:$0xff]
    %v252 = vld [vmem:[#allocation2 + $0x2b8] sm:$0xff]
    %v253 = vld [vmem:[#allocation2 + $0x2c0] sm:$0xff]
    %v254 = vld [vmem:[#allocation2 + $0x2c8] sm:$0xff]
    %v255 = vld [vmem:[#allocation2 + $0x2d0] sm:$0xff]
    %v256 = vld [vmem:[#allocation2 + $0x2d8] sm:$0xff]
    %v257 = vld [vmem:[#allocation2 + $0x2e0] sm:$0xff]
    %v258 = vld [vmem:[#allocation2 + $0x2e8] sm:$0xff]
    %v259 = vld [vmem:[#allocation2 + $0x2f0] sm:$0xff]
    %v260 = vld [vmem:[#allocation2 + $0x2f8] sm:$0xff]
    %v261 = vld [vmem:[#allocation2 + $0x300] sm:$0xff]
    %v262 = vld [vmem:[#allocation2 + $0x308] sm:$0xff]
    %v263 = vld [vmem:[#allocation2 + $0x310] sm:$0xff]
    %v264 = vld [vmem:[#allocation2 + $0x318] sm:$0xff]
    %v265 = vld [vmem:[#allocation2 + $0x320] sm:$0xff]
    %v266 = vld [vmem:[#allocation2 + $0x328] sm:$0xff]
    %v267 = vld [vmem:[#allocation2 + $0x330] sm:$0xff]
    %v268 = vld [vmem:[#allocation2 + $0x338] sm:$0xff]
    %v269 = vld [vmem:[#allocation2 + $0x340] sm:$0xff]
    %v270 = vld [vmem:[#allocation2 + $0x348] sm:$0xff]
    %v271 = vld [vmem:[#allocation2 + $0x350] sm:$0xff]
    %v272 = vld [vmem:[#allocation2 + $0x358] sm:$0xff]
    %v273 = vld [vmem:[#allocation2 + $0x360] sm:$0xff]
    %v274 = vld [vmem:[#allocation2 + $0x368] sm:$0xff]
    %v275 = vld [vmem:[#allocation2 + $0x370] sm:$0xff]
    %v276 = vld [vmem:[#allocation2 + $0x378] sm:$0xff]
    %v277 = vld [vmem:[#allocation2 + $0x380] sm:$0xff]
    %v278 = vld [vmem:[#allocation2 + $0x388] sm:$0xff]
    %v279 = vld [vmem:[#allocation2 + $0x390] sm:$0xff]
    %v280 = vld [vmem:[#allocation2 + $0x398] sm:$0xff]
    %v281 = vld [vmem:[#allocation2 + $0x3a0] sm:$0xff]
    %v282 = vld [vmem:[#allocation2 + $0x3a8] sm:$0xff]
    %v283 = vld [vmem:[#allocation2 + $0x3b0] sm:$0xff]
    %v284 = vld [vmem:[#allocation2 + $0x3b8] sm:$0xff]
    %v285 = vld [vmem:[#allocation2 + $0x3c0] sm:$0xff]
    %v286 = vld [vmem:[#allocation2 + $0x3c8] sm:$0xff]
    %v287 = vld [vmem:[#allocation2 + $0x3d0] sm:$0xff]
    %v288 = vld [vmem:[#allocation2 + $0x3d8] sm:$0xff]
    %v289 = vld [vmem:[#allocation2 + $0x3e0] sm:$0xff]
    %v290 = vld [vmem:[#allocation2 + $0x3e8] sm:$0xff]
    %v291 = vld [vmem:[#allocation2 + $0x3f0] sm:$0xff]
    %v292 = vld [vmem:[#allocation2 + $0x3f8] sm:$0xff]
    %v293 = vld [vmem:[#allocation2 + $0x400] sm:$0xff]
    %v294 = vld [vmem:[#allocation2 + $0x408] sm:$0xff]
    %v295 = vld [vmem:[#allocation2 + $0x410] sm:$0xff]
    %v296 = vld [vmem:[#allocation2 + $0x418] sm:$0xff]
    %v297 = vld [vmem:[#allocation2 + $0x420] sm:$0xff]
    %v298 = vld [vmem:[#allocation2 + $0x428] sm:$0xff]
    %v299 = vld [vmem:[#allocation2 + $0x430] sm:$0xff]
    %v300 = vld [vmem:[#allocation2 + $0x438] sm:$0xff]
    %v301 = vld [vmem:[#allocation2 + $0x440] sm:$0xff]
    %v302 = vld [vmem:[#allocation2 + $0x448] sm:$0xff]
    %v303 = vld [vmem:[#allocation2 + $0x450] sm:$0xff]
    %v304 = vld [vmem:[#allocation2 + $0x458] sm:$0xff]
    %v305 = vld [vmem:[#allocation2 + $0x460] sm:$0xff]
    %v306 = vld [vmem:[#allocation2 + $0x468] sm:$0xff]
    %v307 = vld [vmem:[#allocation2 + $0x470] sm:$0xff]
    %v308 = vld [vmem:[#allocation2 + $0x478] sm:$0xff]
    %v309 = vld [vmem:[#allocation2 + $0x480] sm:$0xff]
    %v310 = vld [vmem:[#allocation2 + $0x488] sm:$0xff]
    %v311 = vld [vmem:[#allocation2 + $0x490] sm:$0xff]
    %v312 = vld [vmem:[#allocation2 + $0x498] sm:$0xff]
    %v313 = vld [vmem:[#allocation2 + $0x4a0] sm:$0xff]
    %v314 = vld [vmem:[#allocation2 + $0x4a8] sm:$0xff]
    %v315 = vld [vmem:[#allocation2 + $0x4b0] sm:$0xff]
    %v316 = vld [vmem:[#allocation2 + $0x4b8] sm:$0xff]
    %v317 = vld [vmem:[#allocation2 + $0x4c0] sm:$0xff]
    %v318 = vld [vmem:[#allocation2 + $0x4c8] sm:$0xff]
    %v319 = vld [vmem:[#allocation2 + $0x4d0] sm:$0xff]
    %v320 = vld [vmem:[#allocation2 + $0x4d8] sm:$0xff]
    %v321 = vld [vmem:[#allocation2 + $0x4e0] sm:$0xff]
    %v322 = vld [vmem:[#allocation2 + $0x4e8] sm:$0xff]
    %v323 = vld [vmem:[#allocation2 + $0x4f0] sm:$0xff]
    %v324 = vld [vmem:[#allocation2 + $0x4f8] sm:$0xff]
    %v325 = vld [vmem:[#allocation2 + $0x500] sm:$0xff]
    %v326 = vld [vmem:[#allocation2 + $0x508] sm:$0xff]
    %v327 = vld [vmem:[#allocation2 + $0x510] sm:$0xff]
    %v328 = vld [vmem:[#allocation2 + $0x518] sm:$0xff]
    %v329 = vld [vmem:[#allocation2 + $0x520] sm:$0xff]
    %v330 = vld [vmem:[#allocation2 + $0x528] sm:$0xff]
    %v331 = vld [vmem:[#allocation2 + $0x530] sm:$0xff]
    %v332 = vld [vmem:[#allocation2 + $0x538] sm:$0xff]
    %v333 = vld [vmem:[#allocation2 + $0x540] sm:$0xff]
    %v334 = vld [vmem:[#allocation2 + $0x548] sm:$0xff]
    %v335 = vld [vmem:[#allocation2 + $0x550] sm:$0xff]
    %v336 = vld [vmem:[#allocation2 + $0x558] sm:$0xff]
    %v337 = vld [vmem:[#allocation2 + $0x560] sm:$0xff]
    %v338 = vld [vmem:[#allocation2 + $0x568] sm:$0xff]
    %v339 = vld [vmem:[#allocation2 + $0x570] sm:$0xff]
    %v340 = vld [vmem:[#allocation2 + $0x578] sm:$0xff]
    %v341 = vld [vmem:[#allocation2 + $0x580] sm:$0xff]
    %v342 = vld [vmem:[#allocation2 + $0x588] sm:$0xff]
    %v343 = vld [vmem:[#allocation2 + $0x590] sm:$0xff]
    %v344 = vld [vmem:[#allocation2 + $0x598] sm:$0xff]
    %v345 = vld [vmem:[#allocation2 + $0x5a0] sm:$0xff]
    %v346 = vld [vmem:[#allocation2 + $0x5a8] sm:$0xff]
    %v347 = vld [vmem:[#allocation2 + $0x5b0] sm:$0xff]
    %v348 = vld [vmem:[#allocation2 + $0x5b8] sm:$0xff]
    %v349 = vld [vmem:[#allocation2 + $0x5c0] sm:$0xff]
    %v350 = vld [vmem:[#allocation2 + $0x5c8] sm:$0xff]
    %v351 = vld [vmem:[#allocation2 + $0x5d0] sm:$0xff]
    %v352 = vld [vmem:[#allocation2 + $0x5d8] sm:$0xff]
    %v353 = vld [vmem:[#allocation2 + $0x5e0] sm:$0xff]
    %v354 = vld [vmem:[#allocation2 + $0x5e8] sm:$0xff]
    %v355 = vld [vmem:[#allocation2 + $0x5f0] sm:$0xff]
    %v356 = vld [vmem:[#allocation2 + $0x5f8] sm:$0xff]
    %v357 = vld [vmem:[#allocation2 + $0x600] sm:$0xff]
    %v358 = vld [vmem:[#allocation2 + $0x608] sm:$0xff]
    %v359 = vld [vmem:[#allocation2 + $0x610] sm:$0xff]
    %v360 = vld [vmem:[#allocation2 + $0x618] sm:$0xff]
    %v361 = vld [vmem:[#allocation2 + $0x620] sm:$0xff]
    %v362 = vld [vmem:[#allocation2 + $0x628] sm:$0xff]
    %v363 = vld [vmem:[#allocation2 + $0x630] sm:$0xff]
    %v364 = vld [vmem:[#allocation2 + $0x638] sm:$0xff]
    %v365 = vld [vmem:[#allocation2 + $0x640] sm:$0xff]
    %v366 = vld [vmem:[#allocation2 + $0x648] sm:$0xff]
    %v367 = vld [vmem:[#allocation2 + $0x650] sm:$0xff]
    %v368 = vld [vmem:[#allocation2 + $0x658] sm:$0xff]
    %v369 = vld [vmem:[#allocation2 + $0x660] sm:$0xff]
    %v370 = vld [vmem:[#allocation2 + $0x668] sm:$0xff]
    %v371 = vld [vmem:[#allocation2 + $0x670] sm:$0xff]
    %v372 = vld [vmem:[#allocation2 + $0x678] sm:$0xff]
    %v373 = vld [vmem:[#allocation2 + $0x680] sm:$0xff]
    %v374 = vld [vmem:[#allocation2 + $0x688] sm:$0xff]
    %v375 = vld [vmem:[#allocation2 + $0x690] sm:$0xff]
    %v376 = vld [vmem:[#allocation2 + $0x698] sm:$0xff]
    %v377 = vld [vmem:[#allocation2 + $0x6a0] sm:$0xff]
    %v378 = vld [vmem:[#allocation2 + $0x6a8] sm:$0xff]
    %v379 = vld [vmem:[#allocation2 + $0x6b0] sm:$0xff]
    %v380 = vld [vmem:[#allocation2 + $0x6b8] sm:$0xff]
    %v381 = vld [vmem:[#allocation2 + $0x6c0] sm:$0xff]
    %v382 = vld [vmem:[#allocation2 + $0x6c8] sm:$0xff]
    %v383 = vld [vmem:[#allocation2 + $0x6d0] sm:$0xff]
    %v384 = vld [vmem:[#allocation2 + $0x6d8] sm:$0xff]
    %v385 = vld [vmem:[#allocation2 + $0x6e0] sm:$0xff]
    %v386 = vld [vmem:[#allocation2 + $0x6e8] sm:$0xff]
    %v387 = vld [vmem:[#allocation2 + $0x6f0] sm:$0xff]
    %v388 = vld [vmem:[#allocation2 + $0x6f8] sm:$0xff]
    %v389 = vld [vmem:[#allocation2 + $0x700] sm:$0xff]
    %v390 = vld [vmem:[#allocation2 + $0x708] sm:$0xff]
    %v391 = vld [vmem:[#allocation2 + $0x710] sm:$0xff]
    %v392 = vld [vmem:[#allocation2 + $0x718] sm:$0xff]
    %v393 = vld [vmem:[#allocation2 + $0x720] sm:$0xff]
    %v394 = vld [vmem:[#allocation2 + $0x728] sm:$0xff]
    %v395 = vld [vmem:[#allocation2 + $0x730] sm:$0xff]
    %v396 = vld [vmem:[#allocation2 + $0x738] sm:$0xff]
    %v397 = vld [vmem:[#allocation2 + $0x740] sm:$0xff]
    %v398 = vld [vmem:[#allocation2 + $0x748] sm:$0xff]
    %v399 = vld [vmem:[#allocation2 + $0x750] sm:$0xff]
    %v400 = vld [vmem:[#allocation2 + $0x758] sm:$0xff]
    %v401 = vld [vmem:[#allocation2 + $0x760] sm:$0xff]
    %v402 = vld [vmem:[#allocation2 + $0x768] sm:$0xff]
    %v403 = vld [vmem:[#allocation2 + $0x770] sm:$0xff]
    %v404 = vld [vmem:[#allocation2 + $0x778] sm:$0xff]
    %v405 = vld [vmem:[#allocation2 + $0x780] sm:$0xff]
    %v406 = vld [vmem:[#allocation2 + $0x788] sm:$0xff]
    %v407 = vld [vmem:[#allocation2 + $0x790] sm:$0xff]
    %v408 = vld [vmem:[#allocation2 + $0x798] sm:$0xff]
    %v409 = vld [vmem:[#allocation2 + $0x7a0] sm:$0xff]
    %v410 = vld [vmem:[#allocation2 + $0x7a8] sm:$0xff]
    %v411 = vld [vmem:[#allocation2 + $0x7b0] sm:$0xff]
    %v412 = vld [vmem:[#allocation2 + $0x7b8] sm:$0xff]
    %v413 = vld [vmem:[#allocation2 + $0x7c0] sm:$0xff]
    %v414 = vld [vmem:[#allocation2 + $0x7c8] sm:$0xff]
    %v415 = vld [vmem:[#allocation2 + $0x7d0] sm:$0xff]
    %v416 = vld [vmem:[#allocation2 + $0x7d8] sm:$0xff]
    %v417 = vld [vmem:[#allocation2 + $0x7e0] sm:$0xff]
    %v418 = vld [vmem:[#allocation2 + $0x7e8] sm:$0xff]
    %v419 = vld [vmem:[#allocation2 + $0x7f0] sm:$0xff]
    %v420 = vld [vmem:[#allocation2 + $0x7f8] sm:$0xff]
    %v421 = vld [vmem:[#allocation2 + $0x800] sm:$0xff]
    %v422 = vld [vmem:[#allocation2 + $0x808] sm:$0xff]
    %v423 = vld [vmem:[#allocation2 + $0x810] sm:$0xff]
    %v424 = vld [vmem:[#allocation2 + $0x818] sm:$0xff]
    %v425 = vld [vmem:[#allocation2 + $0x820] sm:$0xff]
    %v426 = vld [vmem:[#allocation2 + $0x828] sm:$0xff]
    %v427 = vld [vmem:[#allocation2 + $0x830] sm:$0xff]
    %v428 = vld [vmem:[#allocation2 + $0x838] sm:$0xff]
    %v429 = vld [vmem:[#allocation2 + $0x840] sm:$0xff]
    %v430 = vld [vmem:[#allocation2 + $0x848] sm:$0xff]
    %v431 = vld [vmem:[#allocation2 + $0x850] sm:$0xff]
    %v432 = vld [vmem:[#allocation2 + $0x858] sm:$0xff]
    %v433 = vld [vmem:[#allocation2 + $0x860] sm:$0xff]
    %v434 = vld [vmem:[#allocation2 + $0x868] sm:$0xff]
    %v435 = vld [vmem:[#allocation2 + $0x870] sm:$0xff]
    %v436 = vld [vmem:[#allocation2 + $0x878] sm:$0xff]
    %v437 = vld [vmem:[#allocation2 + $0x880] sm:$0xff]
    %v438 = vld [vmem:[#allocation2 + $0x888] sm:$0xff]
    %v439 = vld [vmem:[#allocation2 + $0x890] sm:$0xff]
    %v440 = vld [vmem:[#allocation2 + $0x898] sm:$0xff]
    %v441 = vld [vmem:[#allocation2 + $0x8a0] sm:$0xff]
    %v442 = vld [vmem:[#allocation2 + $0x8a8] sm:$0xff]
    %v443 = vld [vmem:[#allocation2 + $0x8b0] sm:$0xff]
    %v444 = vld [vmem:[#allocation2 + $0x8b8] sm:$0xff]
    %v445 = vld [vmem:[#allocation2 + $0x8c0] sm:$0xff]
    %v446 = vld [vmem:[#allocation2 + $0x8c8] sm:$0xff]
    %v447 = vld [vmem:[#allocation2 + $0x8d0] sm:$0xff]
    %v448 = vld [vmem:[#allocation2 + $0x8d8] sm:$0xff]
    %v449 = vld [vmem:[#allocation2 + $0x8e0] sm:$0xff]
    %v450 = vld [vmem:[#allocation2 + $0x8e8] sm:$0xff]
    %v451 = vld [vmem:[#allocation2 + $0x8f0] sm:$0xff]
    %v452 = vld [vmem:[#allocation2 + $0x8f8] sm:$0xff]
    %v453 = vld [vmem:[#allocation2 + $0x900] sm:$0xff]
    %v454 = vld [vmem:[#allocation2 + $0x908] sm:$0xff]
    %v455 = vld [vmem:[#allocation2 + $0x910] sm:$0xff]
    %v456 = vld [vmem:[#allocation2 + $0x918] sm:$0xff]
    %v457 = vld [vmem:[#allocation2 + $0x920] sm:$0xff]
    %v458 = vld [vmem:[#allocation2 + $0x928] sm:$0xff]
    %v459 = vld [vmem:[#allocation2 + $0x930] sm:$0xff]
    %v460 = vld [vmem:[#allocation2 + $0x938] sm:$0xff]
    %v461 = vld [vmem:[#allocation2 + $0x940] sm:$0xff]
    %v462 = vld [vmem:[#allocation2 + $0x948] sm:$0xff]
    %v463 = vld [vmem:[#allocation2 + $0x950] sm:$0xff]
    %v464 = vld [vmem:[#allocation2 + $0x958] sm:$0xff]
    %v465 = vld [vmem:[#allocation2 + $0x960] sm:$0xff]
    %v466 = vld [vmem:[#allocation2 + $0x968] sm:$0xff]
    %v467 = vld [vmem:[#allocation2 + $0x970] sm:$0xff]
    %v468 = vld [vmem:[#allocation2 + $0x978] sm:$0xff]
    %v469 = vld [vmem:[#allocation2 + $0x980] sm:$0xff]
    %v470 = vld [vmem:[#allocation2 + $0x988] sm:$0xff]
    %v471 = vld [vmem:[#allocation2 + $0x990] sm:$0xff]
    %v472 = vld [vmem:[#allocation2 + $0x998] sm:$0xff]
    %v473 = vld [vmem:[#allocation2 + $0x9a0] sm:$0xff]
    %v474 = vld [vmem:[#allocation2 + $0x9a8] sm:$0xff]
    %v475 = vld [vmem:[#allocation2 + $0x9b0] sm:$0xff]
    %v476 = vld [vmem:[#allocation2 + $0x9b8] sm:$0xff]
    %v477 = vld [vmem:[#allocation2 + $0x9c0] sm:$0xff]
    %v478 = vld [vmem:[#allocation2 + $0x9c8] sm:$0xff]
    %v479 = vld [vmem:[#allocation2 + $0x9d0] sm:$0xff]
    %v480 = vld [vmem:[#allocation2 + $0x9d8] sm:$0xff]
    %v481 = vld [vmem:[#allocation2 + $0x9e0] sm:$0xff]
    %v482 = vld [vmem:[#allocation2 + $0x9e8] sm:$0xff]
    %v483 = vld [vmem:[#allocation2 + $0x9f0] sm:$0xff]
    %v484 = vld [vmem:[#allocation2 + $0x9f8] sm:$0xff]
    %v485 = vld [vmem:[#allocation2 + $0xa00] sm:$0xff]
    %v486 = vld [vmem:[#allocation2 + $0xa08] sm:$0xff]
    %v487 = vld [vmem:[#allocation2 + $0xa10] sm:$0xff]
    %v488 = vld [vmem:[#allocation2 + $0xa18] sm:$0xff]
    %v489 = vld [vmem:[#allocation2 + $0xa20] sm:$0xff]
    %v490 = vld [vmem:[#allocation2 + $0xa28] sm:$0xff]
    %v491 = vld [vmem:[#allocation2 + $0xa30] sm:$0xff]
    %v492 = vld [vmem:[#allocation2 + $0xa38] sm:$0xff]
    %v493 = vld [vmem:[#allocation2 + $0xa40] sm:$0xff]
    %v494 = vld [vmem:[#allocation2 + $0xa48] sm:$0xff]
    %v495 = vld [vmem:[#allocation2 + $0xa50] sm:$0xff]
    %v496 = vld [vmem:[#allocation2 + $0xa58] sm:$0xff]
    %v497 = vld [vmem:[#allocation2 + $0xa60] sm:$0xff]
    %v498 = vld [vmem:[#allocation2 + $0xa68] sm:$0xff]
    %v499 = vld [vmem:[#allocation2 + $0xa70] sm:$0xff]
    %v500 = vld [vmem:[#allocation2 + $0xa78] sm:$0xff]
    %v501 = vld [vmem:[#allocation2 + $0xa80] sm:$0xff]
    %v502 = vld [vmem:[#allocation2 + $0xa88] sm:$0xff]
    %v503 = vld [vmem:[#allocation2 + $0xa90] sm:$0xff]
    %v504 = vld [vmem:[#allocation2 + $0xa98] sm:$0xff]
    %v505 = vld [vmem:[#allocation2 + $0xaa0] sm:$0xff]
    %v506 = vld [vmem:[#allocation2 + $0xaa8] sm:$0xff]
    %v507 = vld [vmem:[#allocation2 + $0xab0] sm:$0xff]
    %v508 = vld [vmem:[#allocation2 + $0xab8] sm:$0xff]
    %v509 = vld [vmem:[#allocation2 + $0xac0] sm:$0xff]
    %v510 = vld [vmem:[#allocation2 + $0xac8] sm:$0xff]
    %v511 = vld [vmem:[#allocation2 + $0xad0] sm:$0xff]
    %v512 = vld [vmem:[#allocation2 + $0xad8] sm:$0xff]
    %v513 = vld [vmem:[#allocation2 + $0xae0] sm:$0xff]
    %v514 = vld [vmem:[#allocation2 + $0xae8] sm:$0xff]
    %v515 = vld [vmem:[#allocation2 + $0xaf0] sm:$0xff]
    %v516 = vld [vmem:[#allocation2 + $0xaf8] sm:$0xff]
    %v517 = vld [vmem:[#allocation2 + $0xb00] sm:$0xff]
    %v518 = vld [vmem:[#allocation2 + $0xb08] sm:$0xff]
    %v519 = vld [vmem:[#allocation2 + $0xb10] sm:$0xff]
    %v520 = vld [vmem:[#allocation2 + $0xb18] sm:$0xff]
    %v521 = vld [vmem:[#allocation2 + $0xb20] sm:$0xff]
    %v522 = vld [vmem:[#allocation2 + $0xb28] sm:$0xff]
    %v523 = vld [vmem:[#allocation2 + $0xb30] sm:$0xff]
    %v524 = vld [vmem:[#allocation2 + $0xb38] sm:$0xff]
    %v525 = vld [vmem:[#allocation2 + $0xb40] sm:$0xff]
    %v526 = vld [vmem:[#allocation2 + $0xb48] sm:$0xff]
    %v527 = vld [vmem:[#allocation2 + $0xb50] sm:$0xff]
    %v528 = vld [vmem:[#allocation2 + $0xb58] sm:$0xff]
    %v529 = vld [vmem:[#allocation2 + $0xb60] sm:$0xff]
    %v530 = vld [vmem:[#allocation2 + $0xb68] sm:$0xff]
    %v531 = vld [vmem:[#allocation2 + $0xb70] sm:$0xff]
    %v532 = vld [vmem:[#allocation2 + $0xb78] sm:$0xff]
    %v533 = vld [vmem:[#allocation2 + $0xb80] sm:$0xff]
    %v534 = vld [vmem:[#allocation2 + $0xb88] sm:$0xff]
    %v535 = vld [vmem:[#allocation2 + $0xb90] sm:$0xff]
    %v536 = vld [vmem:[#allocation2 + $0xb98] sm:$0xff]
    %v537 = vld [vmem:[#allocation2 + $0xba0] sm:$0xff]
    %v538 = vld [vmem:[#allocation2 + $0xba8] sm:$0xff]
    %v539 = vld [vmem:[#allocation2 + $0xbb0] sm:$0xff]
    %v540 = vld [vmem:[#allocation2 + $0xbb8] sm:$0xff]
    %v541 = vld [vmem:[#allocation2 + $0xbc0] sm:$0xff]
    %v542 = vld [vmem:[#allocation2 + $0xbc8] sm:$0xff]
    %v543 = vld [vmem:[#allocation2 + $0xbd0] sm:$0xff]
    %v544 = vld [vmem:[#allocation2 + $0xbd8] sm:$0xff]
    %v545 = vld [vmem:[#allocation2 + $0xbe0] sm:$0xff]
    %v546 = vld [vmem:[#allocation2 + $0xbe8] sm:$0xff]
    %v547 = vld [vmem:[#allocation2 + $0xbf0] sm:$0xff]
    %v548 = vld [vmem:[#allocation2 + $0xbf8] sm:$0xff]
    %v549 = vld [vmem:[#allocation5] sm:$0xff]
    %v550 = vld [vmem:[#allocation5 + $0x8] sm:$0xff]
    %v551 = vld [vmem:[#allocation5 + $0x10] sm:$0xff]
    %v552 = vld [vmem:[#allocation5 + $0x18] sm:$0xff]
    %v553 = vld [vmem:[#allocation5 + $0x20] sm:$0xff]
    %v554 = vld [vmem:[#allocation5 + $0x28] sm:$0xff]
    %v555 = vld [vmem:[#allocation5 + $0x30] sm:$0xff]
    %v556 = vld [vmem:[#allocation5 + $0x38] sm:$0xff]
    %v557 = vld [vmem:[#allocation5 + $0x40] sm:$0xff]
    %v558 = vld [vmem:[#allocation5 + $0x48] sm:$0xff]
    %v559 = vld [vmem:[#allocation5 + $0x50] sm:$0xff]
    %v560 = vld [vmem:[#allocation5 + $0x58] sm:$0xff]
    %v561 = vld [vmem:[#allocation5 + $0x60] sm:$0xff]
    %v562 = vld [vmem:[#allocation5 + $0x68] sm:$0xff]
    %v563 = vld [vmem:[#allocation5 + $0x70] sm:$0xff]
    %v564 = vld [vmem:[#allocation5 + $0x78] sm:$0xff]
    %v565 = vld [vmem:[#allocation5 + $0x80] sm:$0xff]
    %v566 = vld [vmem:[#allocation5 + $0x88] sm:$0xff]
    %v567 = vld [vmem:[#allocation5 + $0x90] sm:$0xff]
    %v568 = vld [vmem:[#allocation5 + $0x98] sm:$0xff]
    %v569 = vld [vmem:[#allocation5 + $0xa0] sm:$0xff]
    %v570 = vld [vmem:[#allocation5 + $0xa8] sm:$0xff]
    %v571 = vld [vmem:[#allocation5 + $0xb0] sm:$0xff]
    %v572 = vld [vmem:[#allocation5 + $0xb8] sm:$0xff]
    %v573 = vld [vmem:[#allocation5 + $0xc0] sm:$0xff]
    %v574 = vld [vmem:[#allocation5 + $0xc8] sm:$0xff]
    %v575 = vld [vmem:[#allocation5 + $0xd0] sm:$0xff]
    %v576 = vld [vmem:[#allocation5 + $0xd8] sm:$0xff]
    %v577 = vld [vmem:[#allocation5 + $0xe0] sm:$0xff]
    %v578 = vld [vmem:[#allocation5 + $0xe8] sm:$0xff]
    %v579 = vld [vmem:[#allocation5 + $0xf0] sm:$0xff]
    %v580 = vld [vmem:[#allocation5 + $0xf8] sm:$0xff]
    %v581 = vld [vmem:[#allocation5 + $0x100] sm:$0xff]
    %v582 = vld [vmem:[#allocation5 + $0x108] sm:$0xff]
    %v583 = vld [vmem:[#allocation5 + $0x110] sm:$0xff]
    %v584 = vld [vmem:[#allocation5 + $0x118] sm:$0xff]
    %v585 = vld [vmem:[#allocation5 + $0x120] sm:$0xff]
    %v586 = vld [vmem:[#allocation5 + $0x128] sm:$0xff]
    %v587 = vld [vmem:[#allocation5 + $0x130] sm:$0xff]
    %v588 = vld [vmem:[#allocation5 + $0x138] sm:$0xff]
    %v589 = vld [vmem:[#allocation5 + $0x140] sm:$0xff]
    %v590 = vld [vmem:[#allocation5 + $0x148] sm:$0xff]
    %v591 = vld [vmem:[#allocation5 + $0x150] sm:$0xff]
    %v592 = vld [vmem:[#allocation5 + $0x158] sm:$0xff]
    %v593 = vld [vmem:[#allocation5 + $0x160] sm:$0xff]
    %v594 = vld [vmem:[#allocation5 + $0x168] sm:$0xff]
    %v595 = vld [vmem:[#allocation5 + $0x170] sm:$0xff]
    %v596 = vld [vmem:[#allocation5 + $0x178] sm:$0xff]
    %v597 = vld [vmem:[#allocation5 + $0x180] sm:$0xff]
    %v598 = vld [vmem:[#allocation5 + $0x188] sm:$0xff]
    %v599 = vld [vmem:[#allocation5 + $0x190] sm:$0xff]
    %v600 = vld [vmem:[#allocation5 + $0x198] sm:$0xff]
    %v601 = vld [vmem:[#allocation5 + $0x1a0] sm:$0xff]
    %v602 = vld [vmem:[#allocation5 + $0x1a8] sm:$0xff]
    %v603 = vld [vmem:[#allocation5 + $0x1b0] sm:$0xff]
    %v604 = vld [vmem:[#allocation5 + $0x1b8] sm:$0xff]
    %v605 = vld [vmem:[#allocation5 + $0x1c0] sm:$0xff]
    %v606 = vld [vmem:[#allocation5 + $0x1c8] sm:$0xff]
    %v607 = vld [vmem:[#allocation5 + $0x1d0] sm:$0xff]
    %v608 = vld [vmem:[#allocation5 + $0x1d8] sm:$0xff]
    %v609 = vld [vmem:[#allocation5 + $0x1e0] sm:$0xff]
    %v610 = vld [vmem:[#allocation5 + $0x1e8] sm:$0xff]
    %v611 = vld [vmem:[#allocation5 + $0x1f0] sm:$0xff]
    %v612 = vld [vmem:[#allocation5 + $0x1f8] sm:$0xff]
    %v613 = vld [vmem:[#allocation5 + $0x200] sm:$0xff]
    %v614 = vld [vmem:[#allocation5 + $0x208] sm:$0xff]
    %v615 = vld [vmem:[#allocation5 + $0x210] sm:$0xff]
    %v616 = vld [vmem:[#allocation5 + $0x218] sm:$0xff]
    %v617 = vld [vmem:[#allocation5 + $0x220] sm:$0xff]
    %v618 = vld [vmem:[#allocation5 + $0x228] sm:$0xff]
    %v619 = vld [vmem:[#allocation5 + $0x230] sm:$0xff]
    %v620 = vld [vmem:[#allocation5 + $0x238] sm:$0xff]
    %v621 = vld [vmem:[#allocation5 + $0x240] sm:$0xff]
    %v622 = vld [vmem:[#allocation5 + $0x248] sm:$0xff]
    %v623 = vld [vmem:[#allocation5 + $0x250] sm:$0xff]
    %v624 = vld [vmem:[#allocation5 + $0x258] sm:$0xff]
    %v625 = vld [vmem:[#allocation5 + $0x260] sm:$0xff]
    %v626 = vld [vmem:[#allocation5 + $0x268] sm:$0xff]
    %v627 = vld [vmem:[#allocation5 + $0x270] sm:$0xff]
    %v628 = vld [vmem:[#allocation5 + $0x278] sm:$0xff]
    %v629 = vld [vmem:[#allocation5 + $0x280] sm:$0xff]
    %v630 = vld [vmem:[#allocation5 + $0x288] sm:$0xff]
    %v631 = vld [vmem:[#allocation5 + $0x290] sm:$0xff]
    %v632 = vld [vmem:[#allocation5 + $0x298] sm:$0xff]
    %v633 = vld [vmem:[#allocation5 + $0x2a0] sm:$0xff]
    %v634 = vld [vmem:[#allocation5 + $0x2a8] sm:$0xff]
    %v635 = vld [vmem:[#allocation5 + $0x2b0] sm:$0xff]
    %v636 = vld [vmem:[#allocation5 + $0x2b8] sm:$0xff]
    %v637 = vld [vmem:[#allocation5 + $0x2c0] sm:$0xff]
    %v638 = vld [vmem:[#allocation5 + $0x2c8] sm:$0xff]
    %v639 = vld [vmem:[#allocation5 + $0x2d0] sm:$0xff]
    %v640 = vld [vmem:[#allocation5 + $0x2d8] sm:$0xff]
    %v641 = vld [vmem:[#allocation5 + $0x2e0] sm:$0xff]
    %v642 = vld [vmem:[#allocation5 + $0x2e8] sm:$0xff]
    %v643 = vld [vmem:[#allocation5 + $0x2f0] sm:$0xff]
    %v644 = vld [vmem:[#allocation5 + $0x2f8] sm:$0xff]
    %v645 = vld [vmem:[#allocation5 + $0x300] sm:$0xff]
    %v646 = vld [vmem:[#allocation5 + $0x308] sm:$0xff]
    %v647 = vld [vmem:[#allocation5 + $0x310] sm:$0xff]
    %v648 = vld [vmem:[#allocation5 + $0x318] sm:$0xff]
    %v649 = vld [vmem:[#allocation5 + $0x320] sm:$0xff]
    %v650 = vld [vmem:[#allocation5 + $0x328] sm:$0xff]
    %v651 = vld [vmem:[#allocation5 + $0x330] sm:$0xff]
    %v652 = vld [vmem:[#allocation5 + $0x338] sm:$0xff]
    %v653 = vld [vmem:[#allocation5 + $0x340] sm:$0xff]
    %v654 = vld [vmem:[#allocation5 + $0x348] sm:$0xff]
    %v655 = vld [vmem:[#allocation5 + $0x350] sm:$0xff]
    %v656 = vld [vmem:[#allocation5 + $0x358] sm:$0xff]
    %v657 = vld [vmem:[#allocation5 + $0x360] sm:$0xff]
    %v658 = vld [vmem:[#allocation5 + $0x368] sm:$0xff]
    %v659 = vld [vmem:[#allocation5 + $0x370] sm:$0xff]
    %v660 = vld [vmem:[#allocation5 + $0x378] sm:$0xff]
    %v661 = vld [vmem:[#allocation5 + $0x380] sm:$0xff]
    %v662 = vld [vmem:[#allocation5 + $0x388] sm:$0xff]
    %v663 = vld [vmem:[#allocation5 + $0x390] sm:$0xff]
    %v664 = vld [vmem:[#allocation5 + $0x398] sm:$0xff]
    %v665 = vld [vmem:[#allocation5 + $0x3a0] sm:$0xff]
    %v666 = vld [vmem:[#allocation5 + $0x3a8] sm:$0xff]
    %v667 = vld [vmem:[#allocation5 + $0x3b0] sm:$0xff]
    %v668 = vld [vmem:[#allocation5 + $0x3b8] sm:$0xff]
    %v669 = vld [vmem:[#allocation5 + $0x3c0] sm:$0xff]
    %v670 = vld [vmem:[#allocation5 + $0x3c8] sm:$0xff]
    %v671 = vld [vmem:[#allocation5 + $0x3d0] sm:$0xff]
    %v672 = vld [vmem:[#allocation5 + $0x3d8] sm:$0xff]
    %v673 = vld [vmem:[#allocation5 + $0x3e0] sm:$0xff]
    %v674 = vld [vmem:[#allocation5 + $0x3e8] sm:$0xff]
    %v675 = vld [vmem:[#allocation5 + $0x3f0] sm:$0xff]
    %v676 = vld [vmem:[#allocation5 + $0x3f8] sm:$0xff]
    %v677 = vld [vmem:[#allocation5 + $0x400] sm:$0xff]
    %v678 = vld [vmem:[#allocation5 + $0x408] sm:$0xff]
    %v679 = vld [vmem:[#allocation5 + $0x410] sm:$0xff]
    %v680 = vld [vmem:[#allocation5 + $0x418] sm:$0xff]
    %v681 = vld [vmem:[#allocation5 + $0x420] sm:$0xff]
    %v682 = vld [vmem:[#allocation5 + $0x428] sm:$0xff]
    %v683 = vld [vmem:[#allocation5 + $0x430] sm:$0xff]
    %v684 = vld [vmem:[#allocation5 + $0x438] sm:$0xff]
    %v685 = vld [vmem:[#allocation5 + $0x440] sm:$0xff]
    %v686 = vld [vmem:[#allocation5 + $0x448] sm:$0xff]
    %v687 = vld [vmem:[#allocation5 + $0x450] sm:$0xff]
    %v688 = vld [vmem:[#allocation5 + $0x458] sm:$0xff]
    %v689 = vld [vmem:[#allocation5 + $0x460] sm:$0xff]
    %v690 = vld [vmem:[#allocation5 + $0x468] sm:$0xff]
    %v691 = vld [vmem:[#allocation5 + $0x470] sm:$0xff]
    %v692 = vld [vmem:[#allocation5 + $0x478] sm:$0xff]
    %v693 = vld [vmem:[#allocation5 + $0x480] sm:$0xff]
    %v694 = vld [vmem:[#allocation5 + $0x488] sm:$0xff]
    %v695 = vld [vmem:[#allocation5 + $0x490] sm:$0xff]
    %v696 = vld [vmem:[#allocation5 + $0x498] sm:$0xff]
    %v697 = vld [vmem:[#allocation5 + $0x4a0] sm:$0xff]
    %v698 = vld [vmem:[#allocation5 + $0x4a8] sm:$0xff]
    %v699 = vld [vmem:[#allocation5 + $0x4b0] sm:$0xff]
    %v700 = vld [vmem:[#allocation5 + $0x4b8] sm:$0xff]
    %v701 = vld [vmem:[#allocation5 + $0x4c0] sm:$0xff]
    %v702 = vld [vmem:[#allocation5 + $0x4c8] sm:$0xff]
    %v703 = vld [vmem:[#allocation5 + $0x4d0] sm:$0xff]
    %v704 = vld [vmem:[#allocation5 + $0x4d8] sm:$0xff]
    %v705 = vld [vmem:[#allocation5 + $0x4e0] sm:$0xff]
    %v706 = vld [vmem:[#allocation5 + $0x4e8] sm:$0xff]
    %v707 = vld [vmem:[#allocation5 + $0x4f0] sm:$0xff]
    %v708 = vld [vmem:[#allocation5 + $0x4f8] sm:$0xff]
    %v709 = vld [vmem:[#allocation5 + $0x500] sm:$0xff]
    %v710 = vld [vmem:[#allocation5 + $0x508] sm:$0xff]
    %v711 = vld [vmem:[#allocation5 + $0x510] sm:$0xff]
    %v712 = vld [vmem:[#allocation5 + $0x518] sm:$0xff]
    %v713 = vld [vmem:[#allocation5 + $0x520] sm:$0xff]
    %v714 = vld [vmem:[#allocation5 + $0x528] sm:$0xff]
    %v715 = vld [vmem:[#allocation5 + $0x530] sm:$0xff]
    %v716 = vld [vmem:[#allocation5 + $0x538] sm:$0xff]
    %v717 = vld [vmem:[#allocation5 + $0x540] sm:$0xff]
    %v718 = vld [vmem:[#allocation5 + $0x548] sm:$0xff]
    %v719 = vld [vmem:[#allocation5 + $0x550] sm:$0xff]
    %v720 = vld [vmem:[#allocation5 + $0x558] sm:$0xff]
    %v721 = vld [vmem:[#allocation5 + $0x560] sm:$0xff]
    %v722 = vld [vmem:[#allocation5 + $0x568] sm:$0xff]
    %v723 = vld [vmem:[#allocation5 + $0x570] sm:$0xff]
    %v724 = vld [vmem:[#allocation5 + $0x578] sm:$0xff]
    %v725 = vld [vmem:[#allocation5 + $0x580] sm:$0xff]
    %v726 = vld [vmem:[#allocation5 + $0x588] sm:$0xff]
    %v727 = vld [vmem:[#allocation5 + $0x590] sm:$0xff]
    %v728 = vld [vmem:[#allocation5 + $0x598] sm:$0xff]
    %v729 = vld [vmem:[#allocation5 + $0x5a0] sm:$0xff]
    %v730 = vld [vmem:[#allocation5 + $0x5a8] sm:$0xff]
    %v731 = vld [vmem:[#allocation5 + $0x5b0] sm:$0xff]
    %v732 = vld [vmem:[#allocation5 + $0x5b8] sm:$0xff]
    %v733 = vld [vmem:[#allocation5 + $0x5c0] sm:$0xff]
    %v734 = vld [vmem:[#allocation5 + $0x5c8] sm:$0xff]
    %v735 = vld [vmem:[#allocation5 + $0x5d0] sm:$0xff]
    %v736 = vld [vmem:[#allocation5 + $0x5d8] sm:$0xff]
    %v737 = vld [vmem:[#allocation5 + $0x5e0] sm:$0xff]
    %v738 = vld [vmem:[#allocation5 + $0x5e8] sm:$0xff]
    %v739 = vld [vmem:[#allocation5 + $0x5f0] sm:$0xff]
    %v740 = vld [vmem:[#allocation5 + $0x5f8] sm:$0xff]
    %v741 = vld [vmem:[#allocation5 + $0x600] sm:$0xff]
    %v742 = vld [vmem:[#allocation5 + $0x608] sm:$0xff]
    %v743 = vld [vmem:[#allocation5 + $0x610] sm:$0xff]
    %v744 = vld [vmem:[#allocation5 + $0x618] sm:$0xff]
    %v745 = vld [vmem:[#allocation5 + $0x620] sm:$0xff]
    %v746 = vld [vmem:[#allocation5 + $0x628] sm:$0xff]
    %v747 = vld [vmem:[#allocation5 + $0x630] sm:$0xff]
    %v748 = vld [vmem:[#allocation5 + $0x638] sm:$0xff]
    %v749 = vld [vmem:[#allocation5 + $0x640] sm:$0xff]
    %v750 = vld [vmem:[#allocation5 + $0x648] sm:$0xff]
    %v751 = vld [vmem:[#allocation5 + $0x650] sm:$0xff]
    %v752 = vld [vmem:[#allocation5 + $0x658] sm:$0xff]
    %v753 = vld [vmem:[#allocation5 + $0x660] sm:$0xff]
    %v754 = vld [vmem:[#allocation5 + $0x668] sm:$0xff]
    %v755 = vld [vmem:[#allocation5 + $0x670] sm:$0xff]
    %v756 = vld [vmem:[#allocation5 + $0x678] sm:$0xff]
    %v757 = vld [vmem:[#allocation5 + $0x680] sm:$0xff]
    %v758 = vld [vmem:[#allocation5 + $0x688] sm:$0xff]
    %v759 = vld [vmem:[#allocation5 + $0x690] sm:$0xff]
    %v760 = vld [vmem:[#allocation5 + $0x698] sm:$0xff]
    %v761 = vld [vmem:[#allocation5 + $0x6a0] sm:$0xff]
    %v762 = vld [vmem:[#allocation5 + $0x6a8] sm:$0xff]
    %v763 = vld [vmem:[#allocation5 + $0x6b0] sm:$0xff]
    %v764 = vld [vmem:[#allocation5 + $0x6b8] sm:$0xff]
    %v765 = vld [vmem:[#allocation5 + $0x6c0] sm:$0xff]
    %v766 = vld [vmem:[#allocation5 + $0x6c8] sm:$0xff]
    %v767 = vld [vmem:[#allocation5 + $0x6d0] sm:$0xff]
    %v768 = vld [vmem:[#allocation5 + $0x6d8] sm:$0xff]
    %v769 = vld [vmem:[#allocation5 + $0x6e0] sm:$0xff]
    %v770 = vld [vmem:[#allocation5 + $0x6e8] sm:$0xff]
    %v771 = vld [vmem:[#allocation5 + $0x6f0] sm:$0xff]
    %v772 = vld [vmem:[#allocation5 + $0x6f8] sm:$0xff]
    %v773 = vld [vmem:[#allocation5 + $0x700] sm:$0xff]
    %v774 = vld [vmem:[#allocation5 + $0x708] sm:$0xff]
    %v775 = vld [vmem:[#allocation5 + $0x710] sm:$0xff]
    %v776 = vld [vmem:[#allocation5 + $0x718] sm:$0xff]
    %v777 = vld [vmem:[#allocation5 + $0x720] sm:$0xff]
    %v778 = vld [vmem:[#allocation5 + $0x728] sm:$0xff]
    %v779 = vld [vmem:[#allocation5 + $0x730] sm:$0xff]
    %v780 = vld [vmem:[#allocation5 + $0x738] sm:$0xff]
    %v781 = vld [vmem:[#allocation5 + $0x740] sm:$0xff]
    %v782 = vld [vmem:[#allocation5 + $0x748] sm:$0xff]
    %v783 = vld [vmem:[#allocation5 + $0x750] sm:$0xff]
    %v784 = vld [vmem:[#allocation5 + $0x758] sm:$0xff]
    %v785 = vld [vmem:[#allocation5 + $0x760] sm:$0xff]
    %v786 = vld [vmem:[#allocation5 + $0x768] sm:$0xff]
    %v787 = vld [vmem:[#allocation5 + $0x770] sm:$0xff]
    %v788 = vld [vmem:[#allocation5 + $0x778] sm:$0xff]
    %v789 = vld [vmem:[#allocation5 + $0x780] sm:$0xff]
    %v790 = vld [vmem:[#allocation5 + $0x788] sm:$0xff]
    %v791 = vld [vmem:[#allocation5 + $0x790] sm:$0xff]
    %v792 = vld [vmem:[#allocation5 + $0x798] sm:$0xff]
    %v793 = vld [vmem:[#allocation5 + $0x7a0] sm:$0xff]
    %v794 = vld [vmem:[#allocation5 + $0x7a8] sm:$0xff]
    %v795 = vld [vmem:[#allocation5 + $0x7b0] sm:$0xff]
    %v796 = vld [vmem:[#allocation5 + $0x7b8] sm:$0xff]
    %v797 = vld [vmem:[#allocation5 + $0x7c0] sm:$0xff]
    %v798 = vld [vmem:[#allocation5 + $0x7c8] sm:$0xff]
    %v799 = vld [vmem:[#allocation5 + $0x7d0] sm:$0xff]
    %v800 = vld [vmem:[#allocation5 + $0x7d8] sm:$0xff]
    %v801 = vld [vmem:[#allocation5 + $0x7e0] sm:$0xff]
    %v802 = vld [vmem:[#allocation5 + $0x7e8] sm:$0xff]
    %v803 = vld [vmem:[#allocation5 + $0x7f0] sm:$0xff]
    %v804 = vld [vmem:[#allocation5 + $0x7f8] sm:$0xff]
    %v805 = vld [vmem:[#allocation5 + $0x800] sm:$0xff]
    %v806 = vld [vmem:[#allocation5 + $0x808] sm:$0xff]
    %v807 = vld [vmem:[#allocation5 + $0x810] sm:$0xff]
    %v808 = vld [vmem:[#allocation5 + $0x818] sm:$0xff]
    %v809 = vld [vmem:[#allocation5 + $0x820] sm:$0xff]
    %v810 = vld [vmem:[#allocation5 + $0x828] sm:$0xff]
    %v811 = vld [vmem:[#allocation5 + $0x830] sm:$0xff]
    %v812 = vld [vmem:[#allocation5 + $0x838] sm:$0xff]
    %v813 = vld [vmem:[#allocation5 + $0x840] sm:$0xff]
    %v814 = vld [vmem:[#allocation5 + $0x848] sm:$0xff]
    %v815 = vld [vmem:[#allocation5 + $0x850] sm:$0xff]
    %v816 = vld [vmem:[#allocation5 + $0x858] sm:$0xff]
    %v817 = vld [vmem:[#allocation5 + $0x860] sm:$0xff]
    %v818 = vld [vmem:[#allocation5 + $0x868] sm:$0xff]
    %v819 = vld [vmem:[#allocation5 + $0x870] sm:$0xff]
    %v820 = vld [vmem:[#allocation5 + $0x878] sm:$0xff]
    %v821 = vld [vmem:[#allocation5 + $0x880] sm:$0xff]
    %v822 = vld [vmem:[#allocation5 + $0x888] sm:$0xff]
    %v823 = vld [vmem:[#allocation5 + $0x890] sm:$0xff]
    %v824 = vld [vmem:[#allocation5 + $0x898] sm:$0xff]
    %v825 = vld [vmem:[#allocation5 + $0x8a0] sm:$0xff]
    %v826 = vld [vmem:[#allocation5 + $0x8a8] sm:$0xff]
    %v827 = vld [vmem:[#allocation5 + $0x8b0] sm:$0xff]
    %v828 = vld [vmem:[#allocation5 + $0x8b8] sm:$0xff]
    %v829 = vld [vmem:[#allocation5 + $0x8c0] sm:$0xff]
    %v830 = vld [vmem:[#allocation5 + $0x8c8] sm:$0xff]
    %v831 = vld [vmem:[#allocation5 + $0x8d0] sm:$0xff]
    %v832 = vld [vmem:[#allocation5 + $0x8d8] sm:$0xff]
    %v833 = vld [vmem:[#allocation5 + $0x8e0] sm:$0xff]
    %v834 = vld [vmem:[#allocation5 + $0x8e8] sm:$0xff]
    %v835 = vld [vmem:[#allocation5 + $0x8f0] sm:$0xff]
    %v836 = vld [vmem:[#allocation5 + $0x8f8] sm:$0xff]
    %v837 = vld [vmem:[#allocation5 + $0x900] sm:$0xff]
    %v838 = vld [vmem:[#allocation5 + $0x908] sm:$0xff]
    %v839 = vld [vmem:[#allocation5 + $0x910] sm:$0xff]
    %v840 = vld [vmem:[#allocation5 + $0x918] sm:$0xff]
    %v841 = vld [vmem:[#allocation5 + $0x920] sm:$0xff]
    %v842 = vld [vmem:[#allocation5 + $0x928] sm:$0xff]
    %v843 = vld [vmem:[#allocation5 + $0x930] sm:$0xff]
    %v844 = vld [vmem:[#allocation5 + $0x938] sm:$0xff]
    %v845 = vld [vmem:[#allocation5 + $0x940] sm:$0xff]
    %v846 = vld [vmem:[#allocation5 + $0x948] sm:$0xff]
    %v847 = vld [vmem:[#allocation5 + $0x950] sm:$0xff]
    %v848 = vld [vmem:[#allocation5 + $0x958] sm:$0xff]
    %v849 = vld [vmem:[#allocation5 + $0x960] sm:$0xff]
    %v850 = vld [vmem:[#allocation5 + $0x968] sm:$0xff]
    %v851 = vld [vmem:[#allocation5 + $0x970] sm:$0xff]
    %v852 = vld [vmem:[#allocation5 + $0x978] sm:$0xff]
    %v853 = vld [vmem:[#allocation5 + $0x980] sm:$0xff]
    %v854 = vld [vmem:[#allocation5 + $0x988] sm:$0xff]
    %v855 = vld [vmem:[#allocation5 + $0x990] sm:$0xff]
    %v856 = vld [vmem:[#allocation5 + $0x998] sm:$0xff]
    %v857 = vld [vmem:[#allocation5 + $0x9a0] sm:$0xff]
    %v858 = vld [vmem:[#allocation5 + $0x9a8] sm:$0xff]
    %v859 = vld [vmem:[#allocation5 + $0x9b0] sm:$0xff]
    %v860 = vld [vmem:[#allocation5 + $0x9b8] sm:$0xff]
    %v861 = vld [vmem:[#allocation5 + $0x9c0] sm:$0xff]
    %v862 = vld [vmem:[#allocation5 + $0x9c8] sm:$0xff]
    %v863 = vld [vmem:[#allocation5 + $0x9d0] sm:$0xff]
    %v864 = vld [vmem:[#allocation5 + $0x9d8] sm:$0xff]
    %v865 = vld [vmem:[#allocation5 + $0x9e0] sm:$0xff]
    %v866 = vld [vmem:[#allocation5 + $0x9e8] sm:$0xff]
    %v867 = vld [vmem:[#allocation5 + $0x9f0] sm:$0xff]
    %v868 = vld [vmem:[#allocation5 + $0x9f8] sm:$0xff]
    %v869 = vld [vmem:[#allocation5 + $0xa00] sm:$0xff]
    %v870 = vld [vmem:[#allocation5 + $0xa08] sm:$0xff]
    %v871 = vld [vmem:[#allocation5 + $0xa10] sm:$0xff]
    %v872 = vld [vmem:[#allocation5 + $0xa18] sm:$0xff]
    %v873 = vld [vmem:[#allocation5 + $0xa20] sm:$0xff]
    %v874 = vld [vmem:[#allocation5 + $0xa28] sm:$0xff]
    %v875 = vld [vmem:[#allocation5 + $0xa30] sm:$0xff]
    %v876 = vld [vmem:[#allocation5 + $0xa38] sm:$0xff]
    %v877 = vld [vmem:[#allocation5 + $0xa40] sm:$0xff]
    %v878 = vld [vmem:[#allocation5 + $0xa48] sm:$0xff]
    %v879 = vld [vmem:[#allocation5 + $0xa50] sm:$0xff]
    %v880 = vld [vmem:[#allocation5 + $0xa58] sm:$0xff]
    %v881 = vld [vmem:[#allocation5 + $0xa60] sm:$0xff]
    %v882 = vld [vmem:[#allocation5 + $0xa68] sm:$0xff]
    %v883 = vld [vmem:[#allocation5 + $0xa70] sm:$0xff]
    %v884 = vld [vmem:[#allocation5 + $0xa78] sm:$0xff]
    %v885 = vld [vmem:[#allocation5 + $0xa80] sm:$0xff]
    %v886 = vld [vmem:[#allocation5 + $0xa88] sm:$0xff]
    %v887 = vld [vmem:[#allocation5 + $0xa90] sm:$0xff]
    %v888 = vld [vmem:[#allocation5 + $0xa98] sm:$0xff]
    %v889 = vld [vmem:[#allocation5 + $0xaa0] sm:$0xff]
    %v890 = vld [vmem:[#allocation5 + $0xaa8] sm:$0xff]
    %v891 = vld [vmem:[#allocation5 + $0xab0] sm:$0xff]
    %v892 = vld [vmem:[#allocation5 + $0xab8] sm:$0xff]
    %v893 = vld [vmem:[#allocation5 + $0xac0] sm:$0xff]
    %v894 = vld [vmem:[#allocation5 + $0xac8] sm:$0xff]
    %v895 = vld [vmem:[#allocation5 + $0xad0] sm:$0xff]
    %v896 = vld [vmem:[#allocation5 + $0xad8] sm:$0xff]
    %v897 = vld [vmem:[#allocation5 + $0xae0] sm:$0xff]
    %v898 = vld [vmem:[#allocation5 + $0xae8] sm:$0xff]
    %v899 = vld [vmem:[#allocation5 + $0xaf0] sm:$0xff]
    %v900 = vld [vmem:[#allocation5 + $0xaf8] sm:$0xff]
    %v901 = vld [vmem:[#allocation5 + $0xb00] sm:$0xff]
    %v902 = vld [vmem:[#allocation5 + $0xb08] sm:$0xff]
    %v903 = vld [vmem:[#allocation5 + $0xb10] sm:$0xff]
    %v904 = vld [vmem:[#allocation5 + $0xb18] sm:$0xff]
    %v905 = vld [vmem:[#allocation5 + $0xb20] sm:$0xff]
    %v906 = vld [vmem:[#allocation5 + $0xb28] sm:$0xff]
    %v907 = vld [vmem:[#allocation5 + $0xb30] sm:$0xff]
    %v908 = vld [vmem:[#allocation5 + $0xb38] sm:$0xff]
    %v909 = vld [vmem:[#allocation5 + $0xb40] sm:$0xff]
    %v910 = vld [vmem:[#allocation5 + $0xb48] sm:$0xff]
    %v911 = vld [vmem:[#allocation5 + $0xb50] sm:$0xff]
    %v912 = vld [vmem:[#allocation5 + $0xb58] sm:$0xff]
    %v913 = vld [vmem:[#allocation5 + $0xb60] sm:$0xff]
    %v914 = vld [vmem:[#allocation5 + $0xb68] sm:$0xff]
    %v915 = vld [vmem:[#allocation5 + $0xb70] sm:$0xff]
    %v916 = vld [vmem:[#allocation5 + $0xb78] sm:$0xff]
    %v917 = vld [vmem:[#allocation5 + $0xb80] sm:$0xff]
    %v918 = vld [vmem:[#allocation5 + $0xb88] sm:$0xff]
    %v919 = vld [vmem:[#allocation5 + $0xb90] sm:$0xff]
    %v920 = vld [vmem:[#allocation5 + $0xb98] sm:$0xff]
    %v921 = vld [vmem:[#allocation5 + $0xba0] sm:$0xff]
    %v922 = vld [vmem:[#allocation5 + $0xba8] sm:$0xff]
    %v923 = vld [vmem:[#allocation5 + $0xbb0] sm:$0xff]
    %v924 = vld [vmem:[#allocation5 + $0xbb8] sm:$0xff]
    %v925 = vld [vmem:[#allocation5 + $0xbc0] sm:$0xff]
    %v926 = vld [vmem:[#allocation5 + $0xbc8] sm:$0xff]
    %v927 = vld [vmem:[#allocation5 + $0xbd0] sm:$0xff]
    %v928 = vld [vmem:[#allocation5 + $0xbd8] sm:$0xff]
    %v929 = vld [vmem:[#allocation5 + $0xbe0] sm:$0xff]
    %v930 = vld [vmem:[#allocation5 + $0xbe8] sm:$0xff]
    %v931 = vld [vmem:[#allocation5 + $0xbf0] sm:$0xff]
    %v932 = vld [vmem:[#allocation5 + $0xbf8] sm:$0xff]
    %v933 = vld [vmem:[#allocation5 + $0xc00] sm:$0xff]
    %v934 = vld [vmem:[#allocation5 + $0xc08] sm:$0xff]
    %v935 = vld [vmem:[#allocation5 + $0xc10] sm:$0xff]
    %v936 = vld [vmem:[#allocation5 + $0xc18] sm:$0xff]
    %v937 = vld [vmem:[#allocation5 + $0xc20] sm:$0xff]
    %v938 = vld [vmem:[#allocation5 + $0xc28] sm:$0xff]
    %v939 = vld [vmem:[#allocation5 + $0xc30] sm:$0xff]
    %v940 = vld [vmem:[#allocation5 + $0xc38] sm:$0xff]
    %v941 = vld [vmem:[#allocation5 + $0xc40] sm:$0xff]
    %v942 = vld [vmem:[#allocation5 + $0xc48] sm:$0xff]
    %v943 = vld [vmem:[#allocation5 + $0xc50] sm:$0xff]
    %v944 = vld [vmem:[#allocation5 + $0xc58] sm:$0xff]
    %v945 = vld [vmem:[#allocation5 + $0xc60] sm:$0xff]
    %v946 = vld [vmem:[#allocation5 + $0xc68] sm:$0xff]
    %v947 = vld [vmem:[#allocation5 + $0xc70] sm:$0xff]
    %v948 = vld [vmem:[#allocation5 + $0xc78] sm:$0xff]
    %v949 = vld [vmem:[#allocation5 + $0xc80] sm:$0xff]
    %v950 = vld [vmem:[#allocation5 + $0xc88] sm:$0xff]
    %v951 = vld [vmem:[#allocation5 + $0xc90] sm:$0xff]
    %v952 = vld [vmem:[#allocation5 + $0xc98] sm:$0xff]
    %v953 = vld [vmem:[#allocation5 + $0xca0] sm:$0xff]
    %v954 = vld [vmem:[#allocation5 + $0xca8] sm:$0xff]
    %v955 = vld [vmem:[#allocation5 + $0xcb0] sm:$0xff]
    %v956 = vld [vmem:[#allocation5 + $0xcb8] sm:$0xff]
    %v957 = vld [vmem:[#allocation5 + $0xcc0] sm:$0xff]
    %v958 = vld [vmem:[#allocation5 + $0xcc8] sm:$0xff]
    %v959 = vld [vmem:[#allocation5 + $0xcd0] sm:$0xff]
    %v960 = vld [vmem:[#allocation5 + $0xcd8] sm:$0xff]
    %v961 = vld [vmem:[#allocation5 + $0xce0] sm:$0xff]
    %v962 = vld [vmem:[#allocation5 + $0xce8] sm:$0xff]
    %v963 = vld [vmem:[#allocation5 + $0xcf0] sm:$0xff]
    %v964 = vld [vmem:[#allocation5 + $0xcf8] sm:$0xff]
    %v965 = vld [vmem:[#allocation5 + $0xd00] sm:$0xff]
    %v966 = vld [vmem:[#allocation5 + $0xd08] sm:$0xff]
    %v967 = vld [vmem:[#allocation5 + $0xd10] sm:$0xff]
    %v968 = vld [vmem:[#allocation5 + $0xd18] sm:$0xff]
    %v969 = vld [vmem:[#allocation5 + $0xd20] sm:$0xff]
    %v970 = vld [vmem:[#allocation5 + $0xd28] sm:$0xff]
    %v971 = vld [vmem:[#allocation5 + $0xd30] sm:$0xff]
    %v972 = vld [vmem:[#allocation5 + $0xd38] sm:$0xff]
    %v973 = vld [vmem:[#allocation5 + $0xd40] sm:$0xff]
    %v974 = vld [vmem:[#allocation5 + $0xd48] sm:$0xff]
    %v975 = vld [vmem:[#allocation5 + $0xd50] sm:$0xff]
    %v976 = vld [vmem:[#allocation5 + $0xd58] sm:$0xff]
    %v977 = vld [vmem:[#allocation5 + $0xd60] sm:$0xff]
    %v978 = vld [vmem:[#allocation5 + $0xd68] sm:$0xff]
    %v979 = vld [vmem:[#allocation5 + $0xd70] sm:$0xff]
    %v980 = vld [vmem:[#allocation5 + $0xd78] sm:$0xff]
    %v981 = vld [vmem:[#allocation5 + $0xd80] sm:$0xff]
    %v982 = vld [vmem:[#allocation5 + $0xd88] sm:$0xff]
    %v983 = vld [vmem:[#allocation5 + $0xd90] sm:$0xff]
    %v984 = vld [vmem:[#allocation5 + $0xd98] sm:$0xff]
    %v985 = vld [vmem:[#allocation5 + $0xda0] sm:$0xff]
    %v986 = vld [vmem:[#allocation5 + $0xda8] sm:$0xff]
    %v987 = vld [vmem:[#allocation5 + $0xdb0] sm:$0xff]
    %v988 = vld [vmem:[#allocation5 + $0xdb8] sm:$0xff]
    %v989 = vld [vmem:[#allocation5 + $0xdc0] sm:$0xff]
    %v990 = vld [vmem:[#allocation5 + $0xdc8] sm:$0xff]
    %v991 = vld [vmem:[#allocation5 + $0xdd0] sm:$0xff]
    %v992 = vld [vmem:[#allocation5 + $0xdd8] sm:$0xff]
    %v993 = vld [vmem:[#allocation5 + $0xde0] sm:$0xff]
    %v994 = vld [vmem:[#allocation5 + $0xde8] sm:$0xff]
    %v995 = vld [vmem:[#allocation5 + $0xdf0] sm:$0xff]
    %v996 = vld [vmem:[#allocation5 + $0xdf8] sm:$0xff]
    %v997 = vld [vmem:[#allocation5 + $0xe00] sm:$0xff]
    %v998 = vld [vmem:[#allocation5 + $0xe08] sm:$0xff]
    %v999 = vld [vmem:[#allocation5 + $0xe10] sm:$0xff]
    %v1000 = vld [vmem:[#allocation5 + $0xe18] sm:$0xff]
    %v1001 = vld [vmem:[#allocation5 + $0xe20] sm:$0xff]
    %v1002 = vld [vmem:[#allocation5 + $0xe28] sm:$0xff]
    %v1003 = vld [vmem:[#allocation5 + $0xe30] sm:$0xff]
    %v1004 = vld [vmem:[#allocation5 + $0xe38] sm:$0xff]
    %v1005 = vld [vmem:[#allocation5 + $0xe40] sm:$0xff]
    %v1006 = vld [vmem:[#allocation5 + $0xe48] sm:$0xff]
    %v1007 = vld [vmem:[#allocation5 + $0xe50] sm:$0xff]
    %v1008 = vld [vmem:[#allocation5 + $0xe58] sm:$0xff]
    %v1009 = vld [vmem:[#allocation5 + $0xe60] sm:$0xff]
    %v1010 = vld [vmem:[#allocation5 + $0xe68] sm:$0xff]
    %v1011 = vld [vmem:[#allocation5 + $0xe70] sm:$0xff]
    %v1012 = vld [vmem:[#allocation5 + $0xe78] sm:$0xff]
    %v1013 = vld [vmem:[#allocation5 + $0xe80] sm:$0xff]
    %v1014 = vld [vmem:[#allocation5 + $0xe88] sm:$0xff]
    %v1015 = vld [vmem:[#allocation5 + $0xe90] sm:$0xff]
    %v1016 = vld [vmem:[#allocation5 + $0xe98] sm:$0xff]
    %v1017 = vld [vmem:[#allocation5 + $0xea0] sm:$0xff]
    %v1018 = vld [vmem:[#allocation5 + $0xea8] sm:$0xff]
    %v1019 = vld [vmem:[#allocation5 + $0xeb0] sm:$0xff]
    %v1020 = vld [vmem:[#allocation5 + $0xeb8] sm:$0xff]
    %v1021 = vld [vmem:[#allocation5 + $0xec0] sm:$0xff]
    %v1022 = vld [vmem:[#allocation5 + $0xec8] sm:$0xff]
    %v1023 = vld [vmem:[#allocation5 + $0xed0] sm:$0xff]
    %v1024 = vld [vmem:[#allocation5 + $0xed8] sm:$0xff]
    %v1025 = vld [vmem:[#allocation5 + $0xee0] sm:$0xff]
    %v1026 = vld [vmem:[#allocation5 + $0xee8] sm:$0xff]
    %v1027 = vld [vmem:[#allocation5 + $0xef0] sm:$0xff]
    %v1028 = vld [vmem:[#allocation5 + $0xef8] sm:$0xff]
    %v1029 = vld [vmem:[#allocation5 + $0xf00] sm:$0xff]
    %v1030 = vld [vmem:[#allocation5 + $0xf08] sm:$0xff]
    %v1031 = vld [vmem:[#allocation5 + $0xf10] sm:$0xff]
    %v1032 = vld [vmem:[#allocation5 + $0xf18] sm:$0xff]
    %v1033 = vld [vmem:[#allocation5 + $0xf20] sm:$0xff]
    %v1034 = vld [vmem:[#allocation5 + $0xf28] sm:$0xff]
    %v1035 = vld [vmem:[#allocation5 + $0xf30] sm:$0xff]
    %v1036 = vld [vmem:[#allocation5 + $0xf38] sm:$0xff]
    %v1037 = vld [vmem:[#allocation5 + $0xf40] sm:$0xff]
    %v1038 = vld [vmem:[#allocation5 + $0xf48] sm:$0xff]
    %v1039 = vld [vmem:[#allocation5 + $0xf50] sm:$0xff]
    %v1040 = vld [vmem:[#allocation5 + $0xf58] sm:$0xff]
    %v1041 = vld [vmem:[#allocation5 + $0xf60] sm:$0xff]
    %v1042 = vld [vmem:[#allocation5 + $0xf68] sm:$0xff]
    %v1043 = vld [vmem:[#allocation5 + $0xf70] sm:$0xff]
    %v1044 = vld [vmem:[#allocation5 + $0xf78] sm:$0xff]
    %v1045 = vld [vmem:[#allocation5 + $0xf80] sm:$0xff]
    %v1046 = vld [vmem:[#allocation5 + $0xf88] sm:$0xff]
    %v1047 = vld [vmem:[#allocation5 + $0xf90] sm:$0xff]
    %v1048 = vld [vmem:[#allocation5 + $0xf98] sm:$0xff]
    %v1049 = vld [vmem:[#allocation5 + $0xfa0] sm:$0xff]
    %v1050 = vld [vmem:[#allocation5 + $0xfa8] sm:$0xff]
    %v1051 = vld [vmem:[#allocation5 + $0xfb0] sm:$0xff]
    %v1052 = vld [vmem:[#allocation5 + $0xfb8] sm:$0xff]
    %v1053 = vld [vmem:[#allocation5 + $0xfc0] sm:$0xff]
    %v1054 = vld [vmem:[#allocation5 + $0xfc8] sm:$0xff]
    %v1055 = vld [vmem:[#allocation5 + $0xfd0] sm:$0xff]
    %v1056 = vld [vmem:[#allocation5 + $0xfd8] sm:$0xff]
    %v1057 = vld [vmem:[#allocation5 + $0xfe0] sm:$0xff]
    %v1058 = vld [vmem:[#allocation5 + $0xfe8] sm:$0xff]
    %v1059 = vld [vmem:[#allocation5 + $0xff0] sm:$0xff]
    %v1060 = vld [vmem:[#allocation5 + $0xff8] sm:$0xff]
    %v1061 = vld [vmem:[#allocation5 + $0x1000] sm:$0xff]
    %v1062 = vld [vmem:[#allocation5 + $0x1008] sm:$0xff]
    %v1063 = vld [vmem:[#allocation5 + $0x1010] sm:$0xff]
    %v1064 = vld [vmem:[#allocation5 + $0x1018] sm:$0xff]
    %v1065 = vld [vmem:[#allocation5 + $0x1020] sm:$0xff]
    %v1066 = vld [vmem:[#allocation5 + $0x1028] sm:$0xff]
    %v1067 = vld [vmem:[#allocation5 + $0x1030] sm:$0xff]
    %v1068 = vld [vmem:[#allocation5 + $0x1038] sm:$0xff]
    %v1069 = vld [vmem:[#allocation5 + $0x1040] sm:$0xff]
    %v1070 = vld [vmem:[#allocation5 + $0x1048] sm:$0xff]
    %v1071 = vld [vmem:[#allocation5 + $0x1050] sm:$0xff]
    %v1072 = vld [vmem:[#allocation5 + $0x1058] sm:$0xff]
    %v1073 = vld [vmem:[#allocation5 + $0x1060] sm:$0xff]
    %v1074 = vld [vmem:[#allocation5 + $0x1068] sm:$0xff]
    %v1075 = vld [vmem:[#allocation5 + $0x1070] sm:$0xff]
    %v1076 = vld [vmem:[#allocation5 + $0x1078] sm:$0xff]
    %v1077 = vld [vmem:[#allocation5 + $0x1080] sm:$0xff]
    %v1078 = vld [vmem:[#allocation5 + $0x1088] sm:$0xff]
    %v1079 = vld [vmem:[#allocation5 + $0x1090] sm:$0xff]
    %v1080 = vld [vmem:[#allocation5 + $0x1098] sm:$0xff]
    %v1081 = vld [vmem:[#allocation5 + $0x10a0] sm:$0xff]
    %v1082 = vld [vmem:[#allocation5 + $0x10a8] sm:$0xff]
    %v1083 = vld [vmem:[#allocation5 + $0x10b0] sm:$0xff]
    %v1084 = vld [vmem:[#allocation5 + $0x10b8] sm:$0xff]
    %v1085 = vld [vmem:[#allocation5 + $0x10c0] sm:$0xff]
    %v1086 = vld [vmem:[#allocation5 + $0x10c8] sm:$0xff]
    %v1087 = vld [vmem:[#allocation5 + $0x10d0] sm:$0xff]
    %v1088 = vld [vmem:[#allocation5 + $0x10d8] sm:$0xff]
    %v1089 = vld [vmem:[#allocation5 + $0x10e0] sm:$0xff]
    %v1090 = vld [vmem:[#allocation5 + $0x10e8] sm:$0xff]
    %v1091 = vld [vmem:[#allocation5 + $0x10f0] sm:$0xff]
    %v1092 = vld [vmem:[#allocation5 + $0x10f8] sm:$0xff]
    %v1093 = vld [vmem:[#allocation5 + $0x1100] sm:$0xff]
    %v1094 = vld [vmem:[#allocation5 + $0x1108] sm:$0xff]
    %v1095 = vld [vmem:[#allocation5 + $0x1110] sm:$0xff]
    %v1096 = vld [vmem:[#allocation5 + $0x1118] sm:$0xff]
    %v1097 = vld [vmem:[#allocation5 + $0x1120] sm:$0xff]
    %v1098 = vld [vmem:[#allocation5 + $0x1128] sm:$0xff]
    %v1099 = vld [vmem:[#allocation5 + $0x1130] sm:$0xff]
    %v1100 = vld [vmem:[#allocation5 + $0x1138] sm:$0xff]
    %v1101 = vld [vmem:[#allocation5 + $0x1140] sm:$0xff]
    %v1102 = vld [vmem:[#allocation5 + $0x1148] sm:$0xff]
    %v1103 = vld [vmem:[#allocation5 + $0x1150] sm:$0xff]
    %v1104 = vld [vmem:[#allocation5 + $0x1158] sm:$0xff]
    %v1105 = vld [vmem:[#allocation5 + $0x1160] sm:$0xff]
    %v1106 = vld [vmem:[#allocation5 + $0x1168] sm:$0xff]
    %v1107 = vld [vmem:[#allocation5 + $0x1170] sm:$0xff]
    %v1108 = vld [vmem:[#allocation5 + $0x1178] sm:$0xff]
    %v1109 = vld [vmem:[#allocation5 + $0x1180] sm:$0xff]
    %v1110 = vld [vmem:[#allocation5 + $0x1188] sm:$0xff]
    %v1111 = vld [vmem:[#allocation5 + $0x1190] sm:$0xff]
    %v1112 = vld [vmem:[#allocation5 + $0x1198] sm:$0xff]
    %v1113 = vld [vmem:[#allocation5 + $0x11a0] sm:$0xff]
    %v1114 = vld [vmem:[#allocation5 + $0x11a8] sm:$0xff]
    %v1115 = vld [vmem:[#allocation5 + $0x11b0] sm:$0xff]
    %v1116 = vld [vmem:[#allocation5 + $0x11b8] sm:$0xff]
    %v1117 = vld [vmem:[#allocation5 + $0x11c0] sm:$0xff]
    %v1118 = vld [vmem:[#allocation5 + $0x11c8] sm:$0xff]
    %v1119 = vld [vmem:[#allocation5 + $0x11d0] sm:$0xff]
    %v1120 = vld [vmem:[#allocation5 + $0x11d8] sm:$0xff]
    %v1121 = vld [vmem:[#allocation5 + $0x11e0] sm:$0xff]
    %v1122 = vld [vmem:[#allocation5 + $0x11e8] sm:$0xff]
    %v1123 = vld [vmem:[#allocation5 + $0x11f0] sm:$0xff]
    %v1124 = vld [vmem:[#allocation5 + $0x11f8] sm:$0xff]
    %v1125 = vld [vmem:[#allocation5 + $0x1200] sm:$0xff]
    %v1126 = vld [vmem:[#allocation5 + $0x1208] sm:$0xff]
    %v1127 = vld [vmem:[#allocation5 + $0x1210] sm:$0xff]
    %v1128 = vld [vmem:[#allocation5 + $0x1218] sm:$0xff]
    %v1129 = vld [vmem:[#allocation5 + $0x1220] sm:$0xff]
    %v1130 = vld [vmem:[#allocation5 + $0x1228] sm:$0xff]
    %v1131 = vld [vmem:[#allocation5 + $0x1230] sm:$0xff]
    %v1132 = vld [vmem:[#allocation5 + $0x1238] sm:$0xff]
    %v1133 = vld [vmem:[#allocation5 + $0x1240] sm:$0xff]
    %v1134 = vld [vmem:[#allocation5 + $0x1248] sm:$0xff]
    %v1135 = vld [vmem:[#allocation5 + $0x1250] sm:$0xff]
    %v1136 = vld [vmem:[#allocation5 + $0x1258] sm:$0xff]
    %v1137 = vld [vmem:[#allocation5 + $0x1260] sm:$0xff]
    %v1138 = vld [vmem:[#allocation5 + $0x1268] sm:$0xff]
    %v1139 = vld [vmem:[#allocation5 + $0x1270] sm:$0xff]
    %v1140 = vld [vmem:[#allocation5 + $0x1278] sm:$0xff]
    %v1141 = vld [vmem:[#allocation5 + $0x1280] sm:$0xff]
    %v1142 = vld [vmem:[#allocation5 + $0x1288] sm:$0xff]
    %v1143 = vld [vmem:[#allocation5 + $0x1290] sm:$0xff]
    %v1144 = vld [vmem:[#allocation5 + $0x1298] sm:$0xff]
    %v1145 = vld [vmem:[#allocation5 + $0x12a0] sm:$0xff]
    %v1146 = vld [vmem:[#allocation5 + $0x12a8] sm:$0xff]
    %v1147 = vld [vmem:[#allocation5 + $0x12b0] sm:$0xff]
    %v1148 = vld [vmem:[#allocation5 + $0x12b8] sm:$0xff]
    %v1149 = vld [vmem:[#allocation5 + $0x12c0] sm:$0xff]
    %v1150 = vld [vmem:[#allocation5 + $0x12c8] sm:$0xff]
    %v1151 = vld [vmem:[#allocation5 + $0x12d0] sm:$0xff]
    %v1152 = vld [vmem:[#allocation5 + $0x12d8] sm:$0xff]
    %v1153 = vld [vmem:[#allocation5 + $0x12e0] sm:$0xff]
    %v1154 = vld [vmem:[#allocation5 + $0x12e8] sm:$0xff]
    %v1155 = vld [vmem:[#allocation5 + $0x12f0] sm:$0xff]
    %v1156 = vld [vmem:[#allocation5 + $0x12f8] sm:$0xff]
    %v1157 = vld [vmem:[#allocation5 + $0x1300] sm:$0xff]
    %v1158 = vld [vmem:[#allocation5 + $0x1308] sm:$0xff]
    %v1159 = vld [vmem:[#allocation5 + $0x1310] sm:$0xff]
    %v1160 = vld [vmem:[#allocation5 + $0x1318] sm:$0xff]
    %v1161 = vld [vmem:[#allocation5 + $0x1320] sm:$0xff]
    %v1162 = vld [vmem:[#allocation5 + $0x1328] sm:$0xff]
    %v1163 = vld [vmem:[#allocation5 + $0x1330] sm:$0xff]
    %v1164 = vld [vmem:[#allocation5 + $0x1338] sm:$0xff]
    %v1165 = vld [vmem:[#allocation5 + $0x1340] sm:$0xff]
    %v1166 = vld [vmem:[#allocation5 + $0x1348] sm:$0xff]
    %v1167 = vld [vmem:[#allocation5 + $0x1350] sm:$0xff]
    %v1168 = vld [vmem:[#allocation5 + $0x1358] sm:$0xff]
    %v1169 = vld [vmem:[#allocation5 + $0x1360] sm:$0xff]
    %v1170 = vld [vmem:[#allocation5 + $0x1368] sm:$0xff]
    %v1171 = vld [vmem:[#allocation5 + $0x1370] sm:$0xff]
    %v1172 = vld [vmem:[#allocation5 + $0x1378] sm:$0xff]
    %v1173 = vld [vmem:[#allocation5 + $0x1380] sm:$0xff]
    %v1174 = vld [vmem:[#allocation5 + $0x1388] sm:$0xff]
    %v1175 = vld [vmem:[#allocation5 + $0x1390] sm:$0xff]
    %v1176 = vld [vmem:[#allocation5 + $0x1398] sm:$0xff]
    %v1177 = vld [vmem:[#allocation5 + $0x13a0] sm:$0xff]
    %v1178 = vld [vmem:[#allocation5 + $0x13a8] sm:$0xff]
    %v1179 = vld [vmem:[#allocation5 + $0x13b0] sm:$0xff]
    %v1180 = vld [vmem:[#allocation5 + $0x13b8] sm:$0xff]
    %v1181 = vld [vmem:[#allocation5 + $0x13c0] sm:$0xff]
    %v1182 = vld [vmem:[#allocation5 + $0x13c8] sm:$0xff]
    %v1183 = vld [vmem:[#allocation5 + $0x13d0] sm:$0xff]
    %v1184 = vld [vmem:[#allocation5 + $0x13d8] sm:$0xff]
    %v1185 = vld [vmem:[#allocation5 + $0x13e0] sm:$0xff]
    %v1186 = vld [vmem:[#allocation5 + $0x13e8] sm:$0xff]
    %v1187 = vld [vmem:[#allocation5 + $0x13f0] sm:$0xff]
    %v1188 = vld [vmem:[#allocation5 + $0x13f8] sm:$0xff]
    %v1189 = vld [vmem:[#allocation5 + $0x1400] sm:$0xff]
    %v1190 = vld [vmem:[#allocation5 + $0x1408] sm:$0xff]
    %v1191 = vld [vmem:[#allocation5 + $0x1410] sm:$0xff]
    %v1192 = vld [vmem:[#allocation5 + $0x1418] sm:$0xff]
    %v1193 = vld [vmem:[#allocation5 + $0x1420] sm:$0xff]
    %v1194 = vld [vmem:[#allocation5 + $0x1428] sm:$0xff]
    %v1195 = vld [vmem:[#allocation5 + $0x1430] sm:$0xff]
    %v1196 = vld [vmem:[#allocation5 + $0x1438] sm:$0xff]
    %v1197 = vld [vmem:[#allocation5 + $0x1440] sm:$0xff]
    %v1198 = vld [vmem:[#allocation5 + $0x1448] sm:$0xff]
    %v1199 = vld [vmem:[#allocation5 + $0x1450] sm:$0xff]
    %v1200 = vld [vmem:[#allocation5 + $0x1458] sm:$0xff]
    %v1201 = vld [vmem:[#allocation5 + $0x1460] sm:$0xff]
    %v1202 = vld [vmem:[#allocation5 + $0x1468] sm:$0xff]
    %v1203 = vld [vmem:[#allocation5 + $0x1470] sm:$0xff]
    %v1204 = vld [vmem:[#allocation5 + $0x1478] sm:$0xff]
    %v1205 = vld [vmem:[#allocation5 + $0x1480] sm:$0xff]
    %v1206 = vld [vmem:[#allocation5 + $0x1488] sm:$0xff]
    %v1207 = vld [vmem:[#allocation5 + $0x1490] sm:$0xff]
    %v1208 = vld [vmem:[#allocation5 + $0x1498] sm:$0xff]
    %v1209 = vld [vmem:[#allocation5 + $0x14a0] sm:$0xff]
    %v1210 = vld [vmem:[#allocation5 + $0x14a8] sm:$0xff]
    %v1211 = vld [vmem:[#allocation5 + $0x14b0] sm:$0xff]
    %v1212 = vld [vmem:[#allocation5 + $0x14b8] sm:$0xff]
    %v1213 = vld [vmem:[#allocation5 + $0x14c0] sm:$0xff]
    %v1214 = vld [vmem:[#allocation5 + $0x14c8] sm:$0xff]
    %v1215 = vld [vmem:[#allocation5 + $0x14d0] sm:$0xff]
    %v1216 = vld [vmem:[#allocation5 + $0x14d8] sm:$0xff]
    %v1217 = vld [vmem:[#allocation5 + $0x14e0] sm:$0xff]
    %v1218 = vld [vmem:[#allocation5 + $0x14e8] sm:$0xff]
    %v1219 = vld [vmem:[#allocation5 + $0x14f0] sm:$0xff]
    %v1220 = vld [vmem:[#allocation5 + $0x14f8] sm:$0xff]
    %v1221 = vld [vmem:[#allocation5 + $0x1500] sm:$0xff]
    %v1222 = vld [vmem:[#allocation5 + $0x1508] sm:$0xff]
    %v1223 = vld [vmem:[#allocation5 + $0x1510] sm:$0xff]
    %v1224 = vld [vmem:[#allocation5 + $0x1518] sm:$0xff]
    %v1225 = vld [vmem:[#allocation5 + $0x1520] sm:$0xff]
    %v1226 = vld [vmem:[#allocation5 + $0x1528] sm:$0xff]
    %v1227 = vld [vmem:[#allocation5 + $0x1530] sm:$0xff]
    %v1228 = vld [vmem:[#allocation5 + $0x1538] sm:$0xff]
    %v1229 = vld [vmem:[#allocation5 + $0x1540] sm:$0xff]
    %v1230 = vld [vmem:[#allocation5 + $0x1548] sm:$0xff]
    %v1231 = vld [vmem:[#allocation5 + $0x1550] sm:$0xff]
    %v1232 = vld [vmem:[#allocation5 + $0x1558] sm:$0xff]
    %v1233 = vld [vmem:[#allocation5 + $0x1560] sm:$0xff]
    %v1234 = vld [vmem:[#allocation5 + $0x1568] sm:$0xff]
    %v1235 = vld [vmem:[#allocation5 + $0x1570] sm:$0xff]
    %v1236 = vld [vmem:[#allocation5 + $0x1578] sm:$0xff]
    %v1237 = vld [vmem:[#allocation5 + $0x1580] sm:$0xff]
    %v1238 = vld [vmem:[#allocation5 + $0x1588] sm:$0xff]
    %v1239 = vld [vmem:[#allocation5 + $0x1590] sm:$0xff]
    %v1240 = vld [vmem:[#allocation5 + $0x1598] sm:$0xff]
    %v1241 = vld [vmem:[#allocation5 + $0x15a0] sm:$0xff]
    %v1242 = vld [vmem:[#allocation5 + $0x15a8] sm:$0xff]
    %v1243 = vld [vmem:[#allocation5 + $0x15b0] sm:$0xff]
    %v1244 = vld [vmem:[#allocation5 + $0x15b8] sm:$0xff]
    %v1245 = vld [vmem:[#allocation5 + $0x15c0] sm:$0xff]
    %v1246 = vld [vmem:[#allocation5 + $0x15c8] sm:$0xff]
    %v1247 = vld [vmem:[#allocation5 + $0x15d0] sm:$0xff]
    %v1248 = vld [vmem:[#allocation5 + $0x15d8] sm:$0xff]
    %v1249 = vld [vmem:[#allocation5 + $0x15e0] sm:$0xff]
    %v1250 = vld [vmem:[#allocation5 + $0x15e8] sm:$0xff]
    %v1251 = vld [vmem:[#allocation5 + $0x15f0] sm:$0xff]
    %v1252 = vld [vmem:[#allocation5 + $0x15f8] sm:$0xff]
    %v1253 = vld [vmem:[#allocation5 + $0x1600] sm:$0xff]
    %v1254 = vld [vmem:[#allocation5 + $0x1608] sm:$0xff]
    %v1255 = vld [vmem:[#allocation5 + $0x1610] sm:$0xff]
    %v1256 = vld [vmem:[#allocation5 + $0x1618] sm:$0xff]
    %v1257 = vld [vmem:[#allocation5 + $0x1620] sm:$0xff]
    %v1258 = vld [vmem:[#allocation5 + $0x1628] sm:$0xff]
    %v1259 = vld [vmem:[#allocation5 + $0x1630] sm:$0xff]
    %v1260 = vld [vmem:[#allocation5 + $0x1638] sm:$0xff]
    %v1261 = vld [vmem:[#allocation5 + $0x1640] sm:$0xff]
    %v1262 = vld [vmem:[#allocation5 + $0x1648] sm:$0xff]
    %v1263 = vld [vmem:[#allocation5 + $0x1650] sm:$0xff]
    %v1264 = vld [vmem:[#allocation5 + $0x1658] sm:$0xff]
    %v1265 = vld [vmem:[#allocation5 + $0x1660] sm:$0xff]
    %v1266 = vld [vmem:[#allocation5 + $0x1668] sm:$0xff]
    %v1267 = vld [vmem:[#allocation5 + $0x1670] sm:$0xff]
    %v1268 = vld [vmem:[#allocation5 + $0x1678] sm:$0xff]
    %v1269 = vld [vmem:[#allocation5 + $0x1680] sm:$0xff]
    %v1270 = vld [vmem:[#allocation5 + $0x1688] sm:$0xff]
    %v1271 = vld [vmem:[#allocation5 + $0x1690] sm:$0xff]
    %v1272 = vld [vmem:[#allocation5 + $0x1698] sm:$0xff]
    %v1273 = vld [vmem:[#allocation5 + $0x16a0] sm:$0xff]
    %v1274 = vld [vmem:[#allocation5 + $0x16a8] sm:$0xff]
    %v1275 = vld [vmem:[#allocation5 + $0x16b0] sm:$0xff]
    %v1276 = vld [vmem:[#allocation5 + $0x16b8] sm:$0xff]
    %v1277 = vld [vmem:[#allocation5 + $0x16c0] sm:$0xff]
    %v1278 = vld [vmem:[#allocation5 + $0x16c8] sm:$0xff]
    %v1279 = vld [vmem:[#allocation5 + $0x16d0] sm:$0xff]
    %v1280 = vld [vmem:[#allocation5 + $0x16d8] sm:$0xff]
    %v1281 = vld [vmem:[#allocation5 + $0x16e0] sm:$0xff]
    %v1282 = vld [vmem:[#allocation5 + $0x16e8] sm:$0xff]
    %v1283 = vld [vmem:[#allocation5 + $0x16f0] sm:$0xff]
    %v1284 = vld [vmem:[#allocation5 + $0x16f8] sm:$0xff]
    %v1285 = vld [vmem:[#allocation5 + $0x1700] sm:$0xff]
    %v1286 = vld [vmem:[#allocation5 + $0x1708] sm:$0xff]
    %v1287 = vld [vmem:[#allocation5 + $0x1710] sm:$0xff]
    %v1288 = vld [vmem:[#allocation5 + $0x1718] sm:$0xff]
    %v1289 = vld [vmem:[#allocation5 + $0x1720] sm:$0xff]
    %v1290 = vld [vmem:[#allocation5 + $0x1728] sm:$0xff]
    %v1291 = vld [vmem:[#allocation5 + $0x1730] sm:$0xff]
    %v1292 = vld [vmem:[#allocation5 + $0x1738] sm:$0xff]
    %v1293 = vld [vmem:[#allocation5 + $0x1740] sm:$0xff]
    %v1294 = vld [vmem:[#allocation5 + $0x1748] sm:$0xff]
    %v1295 = vld [vmem:[#allocation5 + $0x1750] sm:$0xff]
    %v1296 = vld [vmem:[#allocation5 + $0x1758] sm:$0xff]
    %v1297 = vld [vmem:[#allocation5 + $0x1760] sm:$0xff]
    %v1298 = vld [vmem:[#allocation5 + $0x1768] sm:$0xff]
    %v1299 = vld [vmem:[#allocation5 + $0x1770] sm:$0xff]
    %v1300 = vld [vmem:[#allocation5 + $0x1778] sm:$0xff]
    %v1301 = vld [vmem:[#allocation5 + $0x1780] sm:$0xff]
    %v1302 = vld [vmem:[#allocation5 + $0x1788] sm:$0xff]
    %v1303 = vld [vmem:[#allocation5 + $0x1790] sm:$0xff]
    %v1304 = vld [vmem:[#allocation5 + $0x1798] sm:$0xff]
    %v1305 = vld [vmem:[#allocation5 + $0x17a0] sm:$0xff]
    %v1306 = vld [vmem:[#allocation5 + $0x17a8] sm:$0xff]
    %v1307 = vld [vmem:[#allocation5 + $0x17b0] sm:$0xff]
    %v1308 = vld [vmem:[#allocation5 + $0x17b8] sm:$0xff]
    %v1309 = vld [vmem:[#allocation5 + $0x17c0] sm:$0xff]
    %v1310 = vld [vmem:[#allocation5 + $0x17c8] sm:$0xff]
    %v1311 = vld [vmem:[#allocation5 + $0x17d0] sm:$0xff]
    %v1312 = vld [vmem:[#allocation5 + $0x17d8] sm:$0xff]
    %v1313 = vld [vmem:[#allocation5 + $0x17e0] sm:$0xff]
    %v1314 = vld [vmem:[#allocation5 + $0x17e8] sm:$0xff]
    %v1315 = vld [vmem:[#allocation5 + $0x17f0] sm:$0xff]
    %v1316 = vld [vmem:[#allocation5 + $0x17f8] sm:$0xff]
    %v1317 = vld [vmem:[#allocation7] sm:$0x3]
    %v1319 = vperm.slane %v1317, 0
    %v1320 = vperm.slane %v1317, 1
    %1323 = vmatpush.msra.mxu0 %v579
    %1324 = vmatpush.msra.mxu0 %v577
    %1325 = vmatpush.msra.mxu0 %v575
    %1326 = vmatpush.msra.mxu0 %v573
    %1327 = vmatpush.msra.mxu0 %v571
    %1328 = vmatpush.msra.mxu0 %v569
    %1329 = vmatpush.msra.mxu0 %v567
    %1330 = vmatpush.msra.mxu0 %v565
    %1331 = vmatpush.msra.mxu0 %v563
    %1332 = vmatpush.msra.mxu0 %v561
    %1333 = vmatpush.msra.mxu0 %v559
    %1334 = vmatpush.msra.mxu0 %v557
    %1335 = vmatpush.msra.mxu0 %v555
    %1336 = vmatpush.msra.mxu0 %v553
    %1337 = vmatpush.msra.mxu0 %v551
    %1338 = vmatpush.msra.mxu0 %v549
    %1339 = vmatmul.f32.gmra.mxu0 %v165
    %v1340 = vpop.f32.mrf.mxu0
    %v1341 = vadd.f32 %v1319, %v1340
    %1342 = vmatmul.f32.gmra.mxu0 %v189
    %v1343 = vpop.f32.mrf.mxu0
    %v1344 = vadd.f32 %v1319, %v1343
    %1345 = vmatmul.f32.gmra.mxu0 %v213
    %v1346 = vpop.f32.mrf.mxu0
    %v1347 = vadd.f32 %v1319, %v1346
    %1348 = vmatmul.f32.gmra.mxu0 %v237
    %v1349 = vpop.f32.mrf.mxu0
    %v1350 = vadd.f32 %v1319, %v1349
    %1351 = vmatmul.f32.gmra.mxu0 %v261
    %v1352 = vpop.f32.mrf.mxu0
    %v1353 = vadd.f32 %v1319, %v1352
    %1354 = vmatmul.f32.gmra.mxu0 %v285
    %v1355 = vpop.f32.mrf.mxu0
    %v1356 = vadd.f32 %v1319, %v1355
    %1357 = vmatmul.f32.gmra.mxu0 %v309
    %v1358 = vpop.f32.mrf.mxu0
    %v1359 = vadd.f32 %v1319, %v1358
    %1360 = vmatmul.f32.gmra.mxu0 %v333
    %v1361 = vpop.f32.mrf.mxu0
    %v1362 = vadd.f32 %v1319, %v1361
    %1363 = vmatmul.f32.gmra.mxu0 %v357
    %v1364 = vpop.f32.mrf.mxu0
    %v1365 = vadd.f32 %v1319, %v1364
    %1366 = vmatmul.f32.gmra.mxu0 %v381
    %v1367 = vpop.f32.mrf.mxu0
    %v1368 = vadd.f32 %v1319, %v1367
    %1369 = vmatmul.f32.gmra.mxu0 %v405
    %v1370 = vpop.f32.mrf.mxu0
    %v1371 = vadd.f32 %v1319, %v1370
    %1372 = vmatmul.f32.gmra.mxu0 %v429
    %v1373 = vpop.f32.mrf.mxu0
    %v1374 = vadd.f32 %v1319, %v1373
    %1375 = vmatmul.f32.gmra.mxu0 %v453
    %v1376 = vpop.f32.mrf.mxu0
    %v1377 = vadd.f32 %v1319, %v1376
    %1378 = vmatmul.f32.gmra.mxu0 %v477
    %v1379 = vpop.f32.mrf.mxu0
    %v1380 = vadd.f32 %v1319, %v1379
    %1381 = vmatmul.f32.gmra.mxu0 %v501
    %v1382 = vpop.f32.mrf.mxu0
    %v1383 = vadd.f32 %v1319, %v1382
    %1384 = vmatmul.f32.gmra.mxu0 %v525
    %v1385 = vpop.f32.mrf.mxu0
    %v1386 = vadd.f32 %v1319, %v1385
    %1387 = vdwg.mxu0
    %1388 = vmatpush.msra.mxu0 %v611
    %1389 = vmatpush.msra.mxu0 %v609
    %1390 = vmatpush.msra.mxu0 %v607
    %1391 = vmatpush.msra.mxu0 %v605
    %1392 = vmatpush.msra.mxu0 %v603
    %1393 = vmatpush.msra.mxu0 %v601
    %1394 = vmatpush.msra.mxu0 %v599
    %1395 = vmatpush.msra.mxu0 %v597
    %1396 = vmatpush.msra.mxu0 %v595
    %1397 = vmatpush.msra.mxu0 %v593
    %1398 = vmatpush.msra.mxu0 %v591
    %1399 = vmatpush.msra.mxu0 %v589
    %1400 = vmatpush.msra.mxu0 %v587
    %1401 = vmatpush.msra.mxu0 %v585
    %1402 = vmatpush.msra.mxu0 %v583
    %1403 = vmatpush.msra.mxu0 %v581
    %1404 = vmatmul.f32.gmra.mxu0 %v166
    %v1405 = vpop.f32.mrf.mxu0
    %v1406 = vadd.f32 %v1341, %v1405
    %1407 = vmatmul.f32.gmra.mxu0 %v190
    %v1408 = vpop.f32.mrf.mxu0
    %v1409 = vadd.f32 %v1344, %v1408
    %1410 = vmatmul.f32.gmra.mxu0 %v214
    %v1411 = vpop.f32.mrf.mxu0
    %v1412 = vadd.f32 %v1347, %v1411
    %1413 = vmatmul.f32.gmra.mxu0 %v238
    %v1414 = vpop.f32.mrf.mxu0
    %v1415 = vadd.f32 %v1350, %v1414
    %1416 = vmatmul.f32.gmra.mxu0 %v262
    %v1417 = vpop.f32.mrf.mxu0
    %v1418 = vadd.f32 %v1353, %v1417
    %1419 = vmatmul.f32.gmra.mxu0 %v286
    %v1420 = vpop.f32.mrf.mxu0
    %v1421 = vadd.f32 %v1356, %v1420
    %1422 = vmatmul.f32.gmra.mxu0 %v310
    %v1423 = vpop.f32.mrf.mxu0
    %v1424 = vadd.f32 %v1359, %v1423
    %1425 = vmatmul.f32.gmra.mxu0 %v334
    %v1426 = vpop.f32.mrf.mxu0
    %v1427 = vadd.f32 %v1362, %v1426
    %1428 = vmatmul.f32.gmra.mxu0 %v358
    %v1429 = vpop.f32.mrf.mxu0
    %v1430 = vadd.f32 %v1365, %v1429
    %1431 = vmatmul.f32.gmra.mxu0 %v382
    %v1432 = vpop.f32.mrf.mxu0
    %v1433 = vadd.f32 %v1368, %v1432
    %1434 = vmatmul.f32.gmra.mxu0 %v406
    %v1435 = vpop.f32.mrf.mxu0
    %v1436 = vadd.f32 %v1371, %v1435
    %1437 = vmatmul.f32.gmra.mxu0 %v430
    %v1438 = vpop.f32.mrf.mxu0
    %v1439 = vadd.f32 %v1374, %v1438
    %1440 = vmatmul.f32.gmra.mxu0 %v454
    %v1441 = vpop.f32.mrf.mxu0
    %v1442 = vadd.f32 %v1377, %v1441
    %1443 = vmatmul.f32.gmra.mxu0 %v478
    %v1444 = vpop.f32.mrf.mxu0
    %v1445 = vadd.f32 %v1380, %v1444
    %1446 = vmatmul.f32.gmra.mxu0 %v502
    %v1447 = vpop.f32.mrf.mxu0
    %v1448 = vadd.f32 %v1383, %v1447
    %1449 = vmatmul.f32.gmra.mxu0 %v526
    %v1450 = vpop.f32.mrf.mxu0
    %v1451 = vadd.f32 %v1386, %v1450
    %1452 = vdwg.mxu0
    %1453 = vmatpush.msra.mxu0 %v643
    %1454 = vmatpush.msra.mxu0 %v641
    %1455 = vmatpush.msra.mxu0 %v639
    %1456 = vmatpush.msra.mxu0 %v637
    %1457 = vmatpush.msra.mxu0 %v635
    %1458 = vmatpush.msra.mxu0 %v633
    %1459 = vmatpush.msra.mxu0 %v631
    %1460 = vmatpush.msra.mxu0 %v629
    %1461 = vmatpush.msra.mxu0 %v627
    %1462 = vmatpush.msra.mxu0 %v625
    %1463 = vmatpush.msra.mxu0 %v623
    %1464 = vmatpush.msra.mxu0 %v621
    %1465 = vmatpush.msra.mxu0 %v619
    %1466 = vmatpush.msra.mxu0 %v617
    %1467 = vmatpush.msra.mxu0 %v615
    %1468 = vmatpush.msra.mxu0 %v613
    %1469 = vmatmul.f32.gmra.mxu0 %v167
    %v1470 = vpop.f32.mrf.mxu0
    %v1471 = vadd.f32 %v1406, %v1470
    %1472 = vmatmul.f32.gmra.mxu0 %v191
    %v1473 = vpop.f32.mrf.mxu0
    %v1474 = vadd.f32 %v1409, %v1473
    %1475 = vmatmul.f32.gmra.mxu0 %v215
    %v1476 = vpop.f32.mrf.mxu0
    %v1477 = vadd.f32 %v1412, %v1476
    %1478 = vmatmul.f32.gmra.mxu0 %v239
    %v1479 = vpop.f32.mrf.mxu0
    %v1480 = vadd.f32 %v1415, %v1479
    %1481 = vmatmul.f32.gmra.mxu0 %v263
    %v1482 = vpop.f32.mrf.mxu0
    %v1483 = vadd.f32 %v1418, %v1482
    %1484 = vmatmul.f32.gmra.mxu0 %v287
    %v1485 = vpop.f32.mrf.mxu0
    %v1486 = vadd.f32 %v1421, %v1485
    %1487 = vmatmul.f32.gmra.mxu0 %v311
    %v1488 = vpop.f32.mrf.mxu0
    %v1489 = vadd.f32 %v1424, %v1488
    %1490 = vmatmul.f32.gmra.mxu0 %v335
    %v1491 = vpop.f32.mrf.mxu0
    %v1492 = vadd.f32 %v1427, %v1491
    %1493 = vmatmul.f32.gmra.mxu0 %v359
    %v1494 = vpop.f32.mrf.mxu0
    %v1495 = vadd.f32 %v1430, %v1494
    %1496 = vmatmul.f32.gmra.mxu0 %v383
    %v1497 = vpop.f32.mrf.mxu0
    %v1498 = vadd.f32 %v1433, %v1497
    %1499 = vmatmul.f32.gmra.mxu0 %v407
    %v1500 = vpop.f32.mrf.mxu0
    %v1501 = vadd.f32 %v1436, %v1500
    %1502 = vmatmul.f32.gmra.mxu0 %v431
    %v1503 = vpop.f32.mrf.mxu0
    %v1504 = vadd.f32 %v1439, %v1503
    %1505 = vmatmul.f32.gmra.mxu0 %v455
    %v1506 = vpop.f32.mrf.mxu0
    %v1507 = vadd.f32 %v1442, %v1506
    %1508 = vmatmul.f32.gmra.mxu0 %v479
    %v1509 = vpop.f32.mrf.mxu0
    %v1510 = vadd.f32 %v1445, %v1509
    %1511 = vmatmul.f32.gmra.mxu0 %v503
    %v1512 = vpop.f32.mrf.mxu0
    %v1513 = vadd.f32 %v1448, %v1512
    %1514 = vmatmul.f32.gmra.mxu0 %v527
    %v1515 = vpop.f32.mrf.mxu0
    %v1516 = vadd.f32 %v1451, %v1515
    %1517 = vdwg.mxu0
    %1518 = vmatpush.msra.mxu0 %v675
    %1519 = vmatpush.msra.mxu0 %v673
    %1520 = vmatpush.msra.mxu0 %v671
    %1521 = vmatpush.msra.mxu0 %v669
    %1522 = vmatpush.msra.mxu0 %v667
    %1523 = vmatpush.msra.mxu0 %v665
    %1524 = vmatpush.msra.mxu0 %v663
    %1525 = vmatpush.msra.mxu0 %v661
    %1526 = vmatpush.msra.mxu0 %v659
    %1527 = vmatpush.msra.mxu0 %v657
    %1528 = vmatpush.msra.mxu0 %v655
    %1529 = vmatpush.msra.mxu0 %v653
    %1530 = vmatpush.msra.mxu0 %v651
    %1531 = vmatpush.msra.mxu0 %v649
    %1532 = vmatpush.msra.mxu0 %v647
    %1533 = vmatpush.msra.mxu0 %v645
    %1534 = vmatmul.f32.gmra.mxu0 %v168
    %v1535 = vpop.f32.mrf.mxu0
    %v1536 = vadd.f32 %v1471, %v1535
    %1537 = vmatmul.f32.gmra.mxu0 %v192
    %v1538 = vpop.f32.mrf.mxu0
    %v1539 = vadd.f32 %v1474, %v1538
    %1540 = vmatmul.f32.gmra.mxu0 %v216
    %v1541 = vpop.f32.mrf.mxu0
    %v1542 = vadd.f32 %v1477, %v1541
    %1543 = vmatmul.f32.gmra.mxu0 %v240
    %v1544 = vpop.f32.mrf.mxu0
    %v1545 = vadd.f32 %v1480, %v1544
    %1546 = vmatmul.f32.gmra.mxu0 %v264
    %v1547 = vpop.f32.mrf.mxu0
    %v1548 = vadd.f32 %v1483, %v1547
    %1549 = vmatmul.f32.gmra.mxu0 %v288
    %v1550 = vpop.f32.mrf.mxu0
    %v1551 = vadd.f32 %v1486, %v1550
    %1552 = vmatmul.f32.gmra.mxu0 %v312
    %v1553 = vpop.f32.mrf.mxu0
    %v1554 = vadd.f32 %v1489, %v1553
    %1555 = vmatmul.f32.gmra.mxu0 %v336
    %v1556 = vpop.f32.mrf.mxu0
    %v1557 = vadd.f32 %v1492, %v1556
    %1558 = vmatmul.f32.gmra.mxu0 %v360
    %v1559 = vpop.f32.mrf.mxu0
    %v1560 = vadd.f32 %v1495, %v1559
    %1561 = vmatmul.f32.gmra.mxu0 %v384
    %v1562 = vpop.f32.mrf.mxu0
    %v1563 = vadd.f32 %v1498, %v1562
    %1564 = vmatmul.f32.gmra.mxu0 %v408
    %v1565 = vpop.f32.mrf.mxu0
    %v1566 = vadd.f32 %v1501, %v1565
    %1567 = vmatmul.f32.gmra.mxu0 %v432
    %v1568 = vpop.f32.mrf.mxu0
    %v1569 = vadd.f32 %v1504, %v1568
    %1570 = vmatmul.f32.gmra.mxu0 %v456
    %v1571 = vpop.f32.mrf.mxu0
    %v1572 = vadd.f32 %v1507, %v1571
    %1573 = vmatmul.f32.gmra.mxu0 %v480
    %v1574 = vpop.f32.mrf.mxu0
    %v1575 = vadd.f32 %v1510, %v1574
    %1576 = vmatmul.f32.gmra.mxu0 %v504
    %v1577 = vpop.f32.mrf.mxu0
    %v1578 = vadd.f32 %v1513, %v1577
    %1579 = vmatmul.f32.gmra.mxu0 %v528
    %v1580 = vpop.f32.mrf.mxu0
    %v1581 = vadd.f32 %v1516, %v1580
    %1582 = vdwg.mxu0
    %1583 = vmatpush.msra.mxu0 %v707
    %1584 = vmatpush.msra.mxu0 %v705
    %1585 = vmatpush.msra.mxu0 %v703
    %1586 = vmatpush.msra.mxu0 %v701
    %1587 = vmatpush.msra.mxu0 %v699
    %1588 = vmatpush.msra.mxu0 %v697
    %1589 = vmatpush.msra.mxu0 %v695
    %1590 = vmatpush.msra.mxu0 %v693
    %1591 = vmatpush.msra.mxu0 %v691
    %1592 = vmatpush.msra.mxu0 %v689
    %1593 = vmatpush.msra.mxu0 %v687
    %1594 = vmatpush.msra.mxu0 %v685
    %1595 = vmatpush.msra.mxu0 %v683
    %1596 = vmatpush.msra.mxu0 %v681
    %1597 = vmatpush.msra.mxu0 %v679
    %1598 = vmatpush.msra.mxu0 %v677
    %1599 = vmatmul.f32.gmra.mxu0 %v169
    %v1600 = vpop.f32.mrf.mxu0
    %v1601 = vadd.f32 %v1536, %v1600
    %1602 = vmatmul.f32.gmra.mxu0 %v193
    %v1603 = vpop.f32.mrf.mxu0
    %v1604 = vadd.f32 %v1539, %v1603
    %1605 = vmatmul.f32.gmra.mxu0 %v217
    %v1606 = vpop.f32.mrf.mxu0
    %v1607 = vadd.f32 %v1542, %v1606
    %1608 = vmatmul.f32.gmra.mxu0 %v241
    %v1609 = vpop.f32.mrf.mxu0
    %v1610 = vadd.f32 %v1545, %v1609
    %1611 = vmatmul.f32.gmra.mxu0 %v265
    %v1612 = vpop.f32.mrf.mxu0
    %v1613 = vadd.f32 %v1548, %v1612
    %1614 = vmatmul.f32.gmra.mxu0 %v289
    %v1615 = vpop.f32.mrf.mxu0
    %v1616 = vadd.f32 %v1551, %v1615
    %1617 = vmatmul.f32.gmra.mxu0 %v313
    %v1618 = vpop.f32.mrf.mxu0
    %v1619 = vadd.f32 %v1554, %v1618
    %1620 = vmatmul.f32.gmra.mxu0 %v337
    %v1621 = vpop.f32.mrf.mxu0
    %v1622 = vadd.f32 %v1557, %v1621
    %1623 = vmatmul.f32.gmra.mxu0 %v361
    %v1624 = vpop.f32.mrf.mxu0
    %v1625 = vadd.f32 %v1560, %v1624
    %1626 = vmatmul.f32.gmra.mxu0 %v385
    %v1627 = vpop.f32.mrf.mxu0
    %v1628 = vadd.f32 %v1563, %v1627
    %1629 = vmatmul.f32.gmra.mxu0 %v409
    %v1630 = vpop.f32.mrf.mxu0
    %v1631 = vadd.f32 %v1566, %v1630
    %1632 = vmatmul.f32.gmra.mxu0 %v433
    %v1633 = vpop.f32.mrf.mxu0
    %v1634 = vadd.f32 %v1569, %v1633
    %1635 = vmatmul.f32.gmra.mxu0 %v457
    %v1636 = vpop.f32.mrf.mxu0
    %v1637 = vadd.f32 %v1572, %v1636
    %1638 = vmatmul.f32.gmra.mxu0 %v481
    %v1639 = vpop.f32.mrf.mxu0
    %v1640 = vadd.f32 %v1575, %v1639
    %1641 = vmatmul.f32.gmra.mxu0 %v505
    %v1642 = vpop.f32.mrf.mxu0
    %v1643 = vadd.f32 %v1578, %v1642
    %1644 = vmatmul.f32.gmra.mxu0 %v529
    %v1645 = vpop.f32.mrf.mxu0
    %v1646 = vadd.f32 %v1581, %v1645
    %1647 = vdwg.mxu0
    %1648 = vmatpush.msra.mxu0 %v739
    %1649 = vmatpush.msra.mxu0 %v737
    %1650 = vmatpush.msra.mxu0 %v735
    %1651 = vmatpush.msra.mxu0 %v733
    %1652 = vmatpush.msra.mxu0 %v731
    %1653 = vmatpush.msra.mxu0 %v729
    %1654 = vmatpush.msra.mxu0 %v727
    %1655 = vmatpush.msra.mxu0 %v725
    %1656 = vmatpush.msra.mxu0 %v723
    %1657 = vmatpush.msra.mxu0 %v721
    %1658 = vmatpush.msra.mxu0 %v719
    %1659 = vmatpush.msra.mxu0 %v717
    %1660 = vmatpush.msra.mxu0 %v715
    %1661 = vmatpush.msra.mxu0 %v713
    %1662 = vmatpush.msra.mxu0 %v711
    %1663 = vmatpush.msra.mxu0 %v709
    %1664 = vmatmul.f32.gmra.mxu0 %v170
    %v1665 = vpop.f32.mrf.mxu0
    %v1666 = vadd.f32 %v1601, %v1665
    %1667 = vmatmul.f32.gmra.mxu0 %v194
    %v1668 = vpop.f32.mrf.mxu0
    %v1669 = vadd.f32 %v1604, %v1668
    %1670 = vmatmul.f32.gmra.mxu0 %v218
    %v1671 = vpop.f32.mrf.mxu0
    %v1672 = vadd.f32 %v1607, %v1671
    %1673 = vmatmul.f32.gmra.mxu0 %v242
    %v1674 = vpop.f32.mrf.mxu0
    %v1675 = vadd.f32 %v1610, %v1674
    %1676 = vmatmul.f32.gmra.mxu0 %v266
    %v1677 = vpop.f32.mrf.mxu0
    %v1678 = vadd.f32 %v1613, %v1677
    %1679 = vmatmul.f32.gmra.mxu0 %v290
    %v1680 = vpop.f32.mrf.mxu0
    %v1681 = vadd.f32 %v1616, %v1680
    %1682 = vmatmul.f32.gmra.mxu0 %v314
    %v1683 = vpop.f32.mrf.mxu0
    %v1684 = vadd.f32 %v1619, %v1683
    %1685 = vmatmul.f32.gmra.mxu0 %v338
    %v1686 = vpop.f32.mrf.mxu0
    %v1687 = vadd.f32 %v1622, %v1686
    %1688 = vmatmul.f32.gmra.mxu0 %v362
    %v1689 = vpop.f32.mrf.mxu0
    %v1690 = vadd.f32 %v1625, %v1689
    %1691 = vmatmul.f32.gmra.mxu0 %v386
    %v1692 = vpop.f32.mrf.mxu0
    %v1693 = vadd.f32 %v1628, %v1692
    %1694 = vmatmul.f32.gmra.mxu0 %v410
    %v1695 = vpop.f32.mrf.mxu0
    %v1696 = vadd.f32 %v1631, %v1695
    %1697 = vmatmul.f32.gmra.mxu0 %v434
    %v1698 = vpop.f32.mrf.mxu0
    %v1699 = vadd.f32 %v1634, %v1698
    %1700 = vmatmul.f32.gmra.mxu0 %v458
    %v1701 = vpop.f32.mrf.mxu0
    %v1702 = vadd.f32 %v1637, %v1701
    %1703 = vmatmul.f32.gmra.mxu0 %v482
    %v1704 = vpop.f32.mrf.mxu0
    %v1705 = vadd.f32 %v1640, %v1704
    %1706 = vmatmul.f32.gmra.mxu0 %v506
    %v1707 = vpop.f32.mrf.mxu0
    %v1708 = vadd.f32 %v1643, %v1707
    %1709 = vmatmul.f32.gmra.mxu0 %v530
    %v1710 = vpop.f32.mrf.mxu0
    %v1711 = vadd.f32 %v1646, %v1710
    %1712 = vdwg.mxu0
    %1713 = vmatpush.msra.mxu0 %v771
    %1714 = vmatpush.msra.mxu0 %v769
    %1715 = vmatpush.msra.mxu0 %v767
    %1716 = vmatpush.msra.mxu0 %v765
    %1717 = vmatpush.msra.mxu0 %v763
    %1718 = vmatpush.msra.mxu0 %v761
    %1719 = vmatpush.msra.mxu0 %v759
    %1720 = vmatpush.msra.mxu0 %v757
    %1721 = vmatpush.msra.mxu0 %v755
    %1722 = vmatpush.msra.mxu0 %v753
    %1723 = vmatpush.msra.mxu0 %v751
    %1724 = vmatpush.msra.mxu0 %v749
    %1725 = vmatpush.msra.mxu0 %v747
    %1726 = vmatpush.msra.mxu0 %v745
    %1727 = vmatpush.msra.mxu0 %v743
    %1728 = vmatpush.msra.mxu0 %v741
    %1729 = vmatmul.f32.gmra.mxu0 %v171
    %v1730 = vpop.f32.mrf.mxu0
    %v1731 = vadd.f32 %v1666, %v1730
    %1732 = vmatmul.f32.gmra.mxu0 %v195
    %v1733 = vpop.f32.mrf.mxu0
    %v1734 = vadd.f32 %v1669, %v1733
    %1735 = vmatmul.f32.gmra.mxu0 %v219
    %v1736 = vpop.f32.mrf.mxu0
    %v1737 = vadd.f32 %v1672, %v1736
    %1738 = vmatmul.f32.gmra.mxu0 %v243
    %v1739 = vpop.f32.mrf.mxu0
    %v1740 = vadd.f32 %v1675, %v1739
    %1741 = vmatmul.f32.gmra.mxu0 %v267
    %v1742 = vpop.f32.mrf.mxu0
    %v1743 = vadd.f32 %v1678, %v1742
    %1744 = vmatmul.f32.gmra.mxu0 %v291
    %v1745 = vpop.f32.mrf.mxu0
    %v1746 = vadd.f32 %v1681, %v1745
    %1747 = vmatmul.f32.gmra.mxu0 %v315
    %v1748 = vpop.f32.mrf.mxu0
    %v1749 = vadd.f32 %v1684, %v1748
    %1750 = vmatmul.f32.gmra.mxu0 %v339
    %v1751 = vpop.f32.mrf.mxu0
    %v1752 = vadd.f32 %v1687, %v1751
    %1753 = vmatmul.f32.gmra.mxu0 %v363
    %v1754 = vpop.f32.mrf.mxu0
    %v1755 = vadd.f32 %v1690, %v1754
    %1756 = vmatmul.f32.gmra.mxu0 %v387
    %v1757 = vpop.f32.mrf.mxu0
    %v1758 = vadd.f32 %v1693, %v1757
    %1759 = vmatmul.f32.gmra.mxu0 %v411
    %v1760 = vpop.f32.mrf.mxu0
    %v1761 = vadd.f32 %v1696, %v1760
    %1762 = vmatmul.f32.gmra.mxu0 %v435
    %v1763 = vpop.f32.mrf.mxu0
    %v1764 = vadd.f32 %v1699, %v1763
    %1765 = vmatmul.f32.gmra.mxu0 %v459
    %v1766 = vpop.f32.mrf.mxu0
    %v1767 = vadd.f32 %v1702, %v1766
    %1768 = vmatmul.f32.gmra.mxu0 %v483
    %v1769 = vpop.f32.mrf.mxu0
    %v1770 = vadd.f32 %v1705, %v1769
    %1771 = vmatmul.f32.gmra.mxu0 %v507
    %v1772 = vpop.f32.mrf.mxu0
    %v1773 = vadd.f32 %v1708, %v1772
    %1774 = vmatmul.f32.gmra.mxu0 %v531
    %v1775 = vpop.f32.mrf.mxu0
    %v1776 = vadd.f32 %v1711, %v1775
    %1777 = vdwg.mxu0
    %1778 = vmatpush.msra.mxu0 %v803
    %1779 = vmatpush.msra.mxu0 %v801
    %1780 = vmatpush.msra.mxu0 %v799
    %1781 = vmatpush.msra.mxu0 %v797
    %1782 = vmatpush.msra.mxu0 %v795
    %1783 = vmatpush.msra.mxu0 %v793
    %1784 = vmatpush.msra.mxu0 %v791
    %1785 = vmatpush.msra.mxu0 %v789
    %1786 = vmatpush.msra.mxu0 %v787
    %1787 = vmatpush.msra.mxu0 %v785
    %1788 = vmatpush.msra.mxu0 %v783
    %1789 = vmatpush.msra.mxu0 %v781
    %1790 = vmatpush.msra.mxu0 %v779
    %1791 = vmatpush.msra.mxu0 %v777
    %1792 = vmatpush.msra.mxu0 %v775
    %1793 = vmatpush.msra.mxu0 %v773
    %1794 = vmatmul.f32.gmra.mxu0 %v172
    %v1795 = vpop.f32.mrf.mxu0
    %v1796 = vadd.f32 %v1731, %v1795
    %1797 = vmatmul.f32.gmra.mxu0 %v196
    %v1798 = vpop.f32.mrf.mxu0
    %v1799 = vadd.f32 %v1734, %v1798
    %1800 = vmatmul.f32.gmra.mxu0 %v220
    %v1801 = vpop.f32.mrf.mxu0
    %v1802 = vadd.f32 %v1737, %v1801
    %1803 = vmatmul.f32.gmra.mxu0 %v244
    %v1804 = vpop.f32.mrf.mxu0
    %v1805 = vadd.f32 %v1740, %v1804
    %1806 = vmatmul.f32.gmra.mxu0 %v268
    %v1807 = vpop.f32.mrf.mxu0
    %v1808 = vadd.f32 %v1743, %v1807
    %1809 = vmatmul.f32.gmra.mxu0 %v292
    %v1810 = vpop.f32.mrf.mxu0
    %v1811 = vadd.f32 %v1746, %v1810
    %1812 = vmatmul.f32.gmra.mxu0 %v316
    %v1813 = vpop.f32.mrf.mxu0
    %v1814 = vadd.f32 %v1749, %v1813
    %1815 = vmatmul.f32.gmra.mxu0 %v340
    %v1816 = vpop.f32.mrf.mxu0
    %v1817 = vadd.f32 %v1752, %v1816
    %1818 = vmatmul.f32.gmra.mxu0 %v364
    %v1819 = vpop.f32.mrf.mxu0
    %v1820 = vadd.f32 %v1755, %v1819
    %1821 = vmatmul.f32.gmra.mxu0 %v388
    %v1822 = vpop.f32.mrf.mxu0
    %v1823 = vadd.f32 %v1758, %v1822
    %1824 = vmatmul.f32.gmra.mxu0 %v412
    %v1825 = vpop.f32.mrf.mxu0
    %v1826 = vadd.f32 %v1761, %v1825
    %1827 = vmatmul.f32.gmra.mxu0 %v436
    %v1828 = vpop.f32.mrf.mxu0
    %v1829 = vadd.f32 %v1764, %v1828
    %1830 = vmatmul.f32.gmra.mxu0 %v460
    %v1831 = vpop.f32.mrf.mxu0
    %v1832 = vadd.f32 %v1767, %v1831
    %1833 = vmatmul.f32.gmra.mxu0 %v484
    %v1834 = vpop.f32.mrf.mxu0
    %v1835 = vadd.f32 %v1770, %v1834
    %1836 = vmatmul.f32.gmra.mxu0 %v508
    %v1837 = vpop.f32.mrf.mxu0
    %v1838 = vadd.f32 %v1773, %v1837
    %1839 = vmatmul.f32.gmra.mxu0 %v532
    %v1840 = vpop.f32.mrf.mxu0
    %v1841 = vadd.f32 %v1776, %v1840
    %1842 = vdwg.mxu0
    %1843 = vmatpush.msra.mxu0 %v835
    %1844 = vmatpush.msra.mxu0 %v833
    %1845 = vmatpush.msra.mxu0 %v831
    %1846 = vmatpush.msra.mxu0 %v829
    %1847 = vmatpush.msra.mxu0 %v827
    %1848 = vmatpush.msra.mxu0 %v825
    %1849 = vmatpush.msra.mxu0 %v823
    %1850 = vmatpush.msra.mxu0 %v821
    %1851 = vmatpush.msra.mxu0 %v819
    %1852 = vmatpush.msra.mxu0 %v817
    %1853 = vmatpush.msra.mxu0 %v815
    %1854 = vmatpush.msra.mxu0 %v813
    %1855 = vmatpush.msra.mxu0 %v811
    %1856 = vmatpush.msra.mxu0 %v809
    %1857 = vmatpush.msra.mxu0 %v807
    %1858 = vmatpush.msra.mxu0 %v805
    %1859 = vmatmul.f32.gmra.mxu0 %v173
    %v1860 = vpop.f32.mrf.mxu0
    %v1861 = vadd.f32 %v1796, %v1860
    %1862 = vmatmul.f32.gmra.mxu0 %v197
    %v1863 = vpop.f32.mrf.mxu0
    %v1864 = vadd.f32 %v1799, %v1863
    %1865 = vmatmul.f32.gmra.mxu0 %v221
    %v1866 = vpop.f32.mrf.mxu0
    %v1867 = vadd.f32 %v1802, %v1866
    %1868 = vmatmul.f32.gmra.mxu0 %v245
    %v1869 = vpop.f32.mrf.mxu0
    %v1870 = vadd.f32 %v1805, %v1869
    %1871 = vmatmul.f32.gmra.mxu0 %v269
    %v1872 = vpop.f32.mrf.mxu0
    %v1873 = vadd.f32 %v1808, %v1872
    %1874 = vmatmul.f32.gmra.mxu0 %v293
    %v1875 = vpop.f32.mrf.mxu0
    %v1876 = vadd.f32 %v1811, %v1875
    %1877 = vmatmul.f32.gmra.mxu0 %v317
    %v1878 = vpop.f32.mrf.mxu0
    %v1879 = vadd.f32 %v1814, %v1878
    %1880 = vmatmul.f32.gmra.mxu0 %v341
    %v1881 = vpop.f32.mrf.mxu0
    %v1882 = vadd.f32 %v1817, %v1881
    %1883 = vmatmul.f32.gmra.mxu0 %v365
    %v1884 = vpop.f32.mrf.mxu0
    %v1885 = vadd.f32 %v1820, %v1884
    %1886 = vmatmul.f32.gmra.mxu0 %v389
    %v1887 = vpop.f32.mrf.mxu0
    %v1888 = vadd.f32 %v1823, %v1887
    %1889 = vmatmul.f32.gmra.mxu0 %v413
    %v1890 = vpop.f32.mrf.mxu0
    %v1891 = vadd.f32 %v1826, %v1890
    %1892 = vmatmul.f32.gmra.mxu0 %v437
    %v1893 = vpop.f32.mrf.mxu0
    %v1894 = vadd.f32 %v1829, %v1893
    %1895 = vmatmul.f32.gmra.mxu0 %v461
    %v1896 = vpop.f32.mrf.mxu0
    %v1897 = vadd.f32 %v1832, %v1896
    %1898 = vmatmul.f32.gmra.mxu0 %v485
    %v1899 = vpop.f32.mrf.mxu0
    %v1900 = vadd.f32 %v1835, %v1899
    %1901 = vmatmul.f32.gmra.mxu0 %v509
    %v1902 = vpop.f32.mrf.mxu0
    %v1903 = vadd.f32 %v1838, %v1902
    %1904 = vmatmul.f32.gmra.mxu0 %v533
    %v1905 = vpop.f32.mrf.mxu0
    %v1906 = vadd.f32 %v1841, %v1905
    %1907 = vdwg.mxu0
    %1908 = vmatpush.msra.mxu0 %v867
    %1909 = vmatpush.msra.mxu0 %v865
    %1910 = vmatpush.msra.mxu0 %v863
    %1911 = vmatpush.msra.mxu0 %v861
    %1912 = vmatpush.msra.mxu0 %v859
    %1913 = vmatpush.msra.mxu0 %v857
    %1914 = vmatpush.msra.mxu0 %v855
    %1915 = vmatpush.msra.mxu0 %v853
    %1916 = vmatpush.msra.mxu0 %v851
    %1917 = vmatpush.msra.mxu0 %v849
    %1918 = vmatpush.msra.mxu0 %v847
    %1919 = vmatpush.msra.mxu0 %v845
    %1920 = vmatpush.msra.mxu0 %v843
    %1921 = vmatpush.msra.mxu0 %v841
    %1922 = vmatpush.msra.mxu0 %v839
    %1923 = vmatpush.msra.mxu0 %v837
    %1924 = vmatmul.f32.gmra.mxu0 %v174
    %v1925 = vpop.f32.mrf.mxu0
    %v1926 = vadd.f32 %v1861, %v1925
    %1927 = vmatmul.f32.gmra.mxu0 %v198
    %v1928 = vpop.f32.mrf.mxu0
    %v1929 = vadd.f32 %v1864, %v1928
    %1930 = vmatmul.f32.gmra.mxu0 %v222
    %v1931 = vpop.f32.mrf.mxu0
    %v1932 = vadd.f32 %v1867, %v1931
    %1933 = vmatmul.f32.gmra.mxu0 %v246
    %v1934 = vpop.f32.mrf.mxu0
    %v1935 = vadd.f32 %v1870, %v1934
    %1936 = vmatmul.f32.gmra.mxu0 %v270
    %v1937 = vpop.f32.mrf.mxu0
    %v1938 = vadd.f32 %v1873, %v1937
    %1939 = vmatmul.f32.gmra.mxu0 %v294
    %v1940 = vpop.f32.mrf.mxu0
    %v1941 = vadd.f32 %v1876, %v1940
    %1942 = vmatmul.f32.gmra.mxu0 %v318
    %v1943 = vpop.f32.mrf.mxu0
    %v1944 = vadd.f32 %v1879, %v1943
    %1945 = vmatmul.f32.gmra.mxu0 %v342
    %v1946 = vpop.f32.mrf.mxu0
    %v1947 = vadd.f32 %v1882, %v1946
    %1948 = vmatmul.f32.gmra.mxu0 %v366
    %v1949 = vpop.f32.mrf.mxu0
    %v1950 = vadd.f32 %v1885, %v1949
    %1951 = vmatmul.f32.gmra.mxu0 %v390
    %v1952 = vpop.f32.mrf.mxu0
    %v1953 = vadd.f32 %v1888, %v1952
    %1954 = vmatmul.f32.gmra.mxu0 %v414
    %v1955 = vpop.f32.mrf.mxu0
    %v1956 = vadd.f32 %v1891, %v1955
    %1957 = vmatmul.f32.gmra.mxu0 %v438
    %v1958 = vpop.f32.mrf.mxu0
    %v1959 = vadd.f32 %v1894, %v1958
    %1960 = vmatmul.f32.gmra.mxu0 %v462
    %v1961 = vpop.f32.mrf.mxu0
    %v1962 = vadd.f32 %v1897, %v1961
    %1963 = vmatmul.f32.gmra.mxu0 %v486
    %v1964 = vpop.f32.mrf.mxu0
    %v1965 = vadd.f32 %v1900, %v1964
    %1966 = vmatmul.f32.gmra.mxu0 %v510
    %v1967 = vpop.f32.mrf.mxu0
    %v1968 = vadd.f32 %v1903, %v1967
    %1969 = vmatmul.f32.gmra.mxu0 %v534
    %v1970 = vpop.f32.mrf.mxu0
    %v1971 = vadd.f32 %v1906, %v1970
    %1972 = vdwg.mxu0
    %1973 = vmatpush.msra.mxu0 %v899
    %1974 = vmatpush.msra.mxu0 %v897
    %1975 = vmatpush.msra.mxu0 %v895
    %1976 = vmatpush.msra.mxu0 %v893
    %1977 = vmatpush.msra.mxu0 %v891
    %1978 = vmatpush.msra.mxu0 %v889
    %1979 = vmatpush.msra.mxu0 %v887
    %1980 = vmatpush.msra.mxu0 %v885
    %1981 = vmatpush.msra.mxu0 %v883
    %1982 = vmatpush.msra.mxu0 %v881
    %1983 = vmatpush.msra.mxu0 %v879
    %1984 = vmatpush.msra.mxu0 %v877
    %1985 = vmatpush.msra.mxu0 %v875
    %1986 = vmatpush.msra.mxu0 %v873
    %1987 = vmatpush.msra.mxu0 %v871
    %1988 = vmatpush.msra.mxu0 %v869
    %1989 = vmatmul.f32.gmra.mxu0 %v175
    %v1990 = vpop.f32.mrf.mxu0
    %v1991 = vadd.f32 %v1926, %v1990
    %1992 = vmatmul.f32.gmra.mxu0 %v199
    %v1993 = vpop.f32.mrf.mxu0
    %v1994 = vadd.f32 %v1929, %v1993
    %1995 = vmatmul.f32.gmra.mxu0 %v223
    %v1996 = vpop.f32.mrf.mxu0
    %v1997 = vadd.f32 %v1932, %v1996
    %1998 = vmatmul.f32.gmra.mxu0 %v247
    %v1999 = vpop.f32.mrf.mxu0
    %v2000 = vadd.f32 %v1935, %v1999
    %2001 = vmatmul.f32.gmra.mxu0 %v271
    %v2002 = vpop.f32.mrf.mxu0
    %v2003 = vadd.f32 %v1938, %v2002
    %2004 = vmatmul.f32.gmra.mxu0 %v295
    %v2005 = vpop.f32.mrf.mxu0
    %v2006 = vadd.f32 %v1941, %v2005
    %2007 = vmatmul.f32.gmra.mxu0 %v319
    %v2008 = vpop.f32.mrf.mxu0
    %v2009 = vadd.f32 %v1944, %v2008
    %2010 = vmatmul.f32.gmra.mxu0 %v343
    %v2011 = vpop.f32.mrf.mxu0
    %v2012 = vadd.f32 %v1947, %v2011
    %2013 = vmatmul.f32.gmra.mxu0 %v367
    %v2014 = vpop.f32.mrf.mxu0
    %v2015 = vadd.f32 %v1950, %v2014
    %2016 = vmatmul.f32.gmra.mxu0 %v391
    %v2017 = vpop.f32.mrf.mxu0
    %v2018 = vadd.f32 %v1953, %v2017
    %2019 = vmatmul.f32.gmra.mxu0 %v415
    %v2020 = vpop.f32.mrf.mxu0
    %v2021 = vadd.f32 %v1956, %v2020
    %2022 = vmatmul.f32.gmra.mxu0 %v439
    %v2023 = vpop.f32.mrf.mxu0
    %v2024 = vadd.f32 %v1959, %v2023
    %2025 = vmatmul.f32.gmra.mxu0 %v463
    %v2026 = vpop.f32.mrf.mxu0
    %v2027 = vadd.f32 %v1962, %v2026
    %2028 = vmatmul.f32.gmra.mxu0 %v487
    %v2029 = vpop.f32.mrf.mxu0
    %v2030 = vadd.f32 %v1965, %v2029
    %2031 = vmatmul.f32.gmra.mxu0 %v511
    %v2032 = vpop.f32.mrf.mxu0
    %v2033 = vadd.f32 %v1968, %v2032
    %2034 = vmatmul.f32.gmra.mxu0 %v535
    %v2035 = vpop.f32.mrf.mxu0
    %v2036 = vadd.f32 %v1971, %v2035
    %2037 = vdwg.mxu0
    %2038 = vmatpush.msra.mxu0 %v931
    %2039 = vmatpush.msra.mxu0 %v929
    %2040 = vmatpush.msra.mxu0 %v927
    %2041 = vmatpush.msra.mxu0 %v925
    %2042 = vmatpush.msra.mxu0 %v923
    %2043 = vmatpush.msra.mxu0 %v921
    %2044 = vmatpush.msra.mxu0 %v919
    %2045 = vmatpush.msra.mxu0 %v917
    %2046 = vmatpush.msra.mxu0 %v915
    %2047 = vmatpush.msra.mxu0 %v913
    %2048 = vmatpush.msra.mxu0 %v911
    %2049 = vmatpush.msra.mxu0 %v909
    %2050 = vmatpush.msra.mxu0 %v907
    %2051 = vmatpush.msra.mxu0 %v905
    %2052 = vmatpush.msra.mxu0 %v903
    %2053 = vmatpush.msra.mxu0 %v901
    %2054 = vmatmul.f32.gmra.mxu0 %v176
    %v2055 = vpop.f32.mrf.mxu0
    %v2056 = vadd.f32 %v1991, %v2055
    %2057 = vmatmul.f32.gmra.mxu0 %v200
    %v2058 = vpop.f32.mrf.mxu0
    %v2059 = vadd.f32 %v1994, %v2058
    %2060 = vmatmul.f32.gmra.mxu0 %v224
    %v2061 = vpop.f32.mrf.mxu0
    %v2062 = vadd.f32 %v1997, %v2061
    %2063 = vmatmul.f32.gmra.mxu0 %v248
    %v2064 = vpop.f32.mrf.mxu0
    %v2065 = vadd.f32 %v2000, %v2064
    %2066 = vmatmul.f32.gmra.mxu0 %v272
    %v2067 = vpop.f32.mrf.mxu0
    %v2068 = vadd.f32 %v2003, %v2067
    %2069 = vmatmul.f32.gmra.mxu0 %v296
    %v2070 = vpop.f32.mrf.mxu0
    %v2071 = vadd.f32 %v2006, %v2070
    %2072 = vmatmul.f32.gmra.mxu0 %v320
    %v2073 = vpop.f32.mrf.mxu0
    %v2074 = vadd.f32 %v2009, %v2073
    %2075 = vmatmul.f32.gmra.mxu0 %v344
    %v2076 = vpop.f32.mrf.mxu0
    %v2077 = vadd.f32 %v2012, %v2076
    %2078 = vmatmul.f32.gmra.mxu0 %v368
    %v2079 = vpop.f32.mrf.mxu0
    %v2080 = vadd.f32 %v2015, %v2079
    %2081 = vmatmul.f32.gmra.mxu0 %v392
    %v2082 = vpop.f32.mrf.mxu0
    %v2083 = vadd.f32 %v2018, %v2082
    %2084 = vmatmul.f32.gmra.mxu0 %v416
    %v2085 = vpop.f32.mrf.mxu0
    %v2086 = vadd.f32 %v2021, %v2085
    %2087 = vmatmul.f32.gmra.mxu0 %v440
    %v2088 = vpop.f32.mrf.mxu0
    %v2089 = vadd.f32 %v2024, %v2088
    %2090 = vmatmul.f32.gmra.mxu0 %v464
    %v2091 = vpop.f32.mrf.mxu0
    %v2092 = vadd.f32 %v2027, %v2091
    %2093 = vmatmul.f32.gmra.mxu0 %v488
    %v2094 = vpop.f32.mrf.mxu0
    %v2095 = vadd.f32 %v2030, %v2094
    %2096 = vmatmul.f32.gmra.mxu0 %v512
    %v2097 = vpop.f32.mrf.mxu0
    %v2098 = vadd.f32 %v2033, %v2097
    %2099 = vmatmul.f32.gmra.mxu0 %v536
    %v2100 = vpop.f32.mrf.mxu0
    %v2101 = vadd.f32 %v2036, %v2100
    %2102 = vdwg.mxu0
    %2103 = vmatpush.msra.mxu0 %v963
    %2104 = vmatpush.msra.mxu0 %v961
    %2105 = vmatpush.msra.mxu0 %v959
    %2106 = vmatpush.msra.mxu0 %v957
    %2107 = vmatpush.msra.mxu0 %v955
    %2108 = vmatpush.msra.mxu0 %v953
    %2109 = vmatpush.msra.mxu0 %v951
    %2110 = vmatpush.msra.mxu0 %v949
    %2111 = vmatpush.msra.mxu0 %v947
    %2112 = vmatpush.msra.mxu0 %v945
    %2113 = vmatpush.msra.mxu0 %v943
    %2114 = vmatpush.msra.mxu0 %v941
    %2115 = vmatpush.msra.mxu0 %v939
    %2116 = vmatpush.msra.mxu0 %v937
    %2117 = vmatpush.msra.mxu0 %v935
    %2118 = vmatpush.msra.mxu0 %v933
    %2119 = vmatmul.f32.gmra.mxu0 %v177
    %v2120 = vpop.f32.mrf.mxu0
    %v2121 = vadd.f32 %v2056, %v2120
    %2122 = vmatmul.f32.gmra.mxu0 %v201
    %v2123 = vpop.f32.mrf.mxu0
    %v2124 = vadd.f32 %v2059, %v2123
    %2125 = vmatmul.f32.gmra.mxu0 %v225
    %v2126 = vpop.f32.mrf.mxu0
    %v2127 = vadd.f32 %v2062, %v2126
    %2128 = vmatmul.f32.gmra.mxu0 %v249
    %v2129 = vpop.f32.mrf.mxu0
    %v2130 = vadd.f32 %v2065, %v2129
    %2131 = vmatmul.f32.gmra.mxu0 %v273
    %v2132 = vpop.f32.mrf.mxu0
    %v2133 = vadd.f32 %v2068, %v2132
    %2134 = vmatmul.f32.gmra.mxu0 %v297
    %v2135 = vpop.f32.mrf.mxu0
    %v2136 = vadd.f32 %v2071, %v2135
    %2137 = vmatmul.f32.gmra.mxu0 %v321
    %v2138 = vpop.f32.mrf.mxu0
    %v2139 = vadd.f32 %v2074, %v2138
    %2140 = vmatmul.f32.gmra.mxu0 %v345
    %v2141 = vpop.f32.mrf.mxu0
    %v2142 = vadd.f32 %v2077, %v2141
    %2143 = vmatmul.f32.gmra.mxu0 %v369
    %v2144 = vpop.f32.mrf.mxu0
    %v2145 = vadd.f32 %v2080, %v2144
    %2146 = vmatmul.f32.gmra.mxu0 %v393
    %v2147 = vpop.f32.mrf.mxu0
    %v2148 = vadd.f32 %v2083, %v2147
    %2149 = vmatmul.f32.gmra.mxu0 %v417
    %v2150 = vpop.f32.mrf.mxu0
    %v2151 = vadd.f32 %v2086, %v2150
    %2152 = vmatmul.f32.gmra.mxu0 %v441
    %v2153 = vpop.f32.mrf.mxu0
    %v2154 = vadd.f32 %v2089, %v2153
    %2155 = vmatmul.f32.gmra.mxu0 %v465
    %v2156 = vpop.f32.mrf.mxu0
    %v2157 = vadd.f32 %v2092, %v2156
    %2158 = vmatmul.f32.gmra.mxu0 %v489
    %v2159 = vpop.f32.mrf.mxu0
    %v2160 = vadd.f32 %v2095, %v2159
    %2161 = vmatmul.f32.gmra.mxu0 %v513
    %v2162 = vpop.f32.mrf.mxu0
    %v2163 = vadd.f32 %v2098, %v2162
    %2164 = vmatmul.f32.gmra.mxu0 %v537
    %v2165 = vpop.f32.mrf.mxu0
    %v2166 = vadd.f32 %v2101, %v2165
    %2167 = vdwg.mxu0
    %2168 = vmatpush.msra.mxu0 %v995
    %2169 = vmatpush.msra.mxu0 %v993
    %2170 = vmatpush.msra.mxu0 %v991
    %2171 = vmatpush.msra.mxu0 %v989
    %2172 = vmatpush.msra.mxu0 %v987
    %2173 = vmatpush.msra.mxu0 %v985
    %2174 = vmatpush.msra.mxu0 %v983
    %2175 = vmatpush.msra.mxu0 %v981
    %2176 = vmatpush.msra.mxu0 %v979
    %2177 = vmatpush.msra.mxu0 %v977
    %2178 = vmatpush.msra.mxu0 %v975
    %2179 = vmatpush.msra.mxu0 %v973
    %2180 = vmatpush.msra.mxu0 %v971
    %2181 = vmatpush.msra.mxu0 %v969
    %2182 = vmatpush.msra.mxu0 %v967
    %2183 = vmatpush.msra.mxu0 %v965
    %2184 = vmatmul.f32.gmra.mxu0 %v178
    %v2185 = vpop.f32.mrf.mxu0
    %v2186 = vadd.f32 %v2121, %v2185
    %2187 = vmatmul.f32.gmra.mxu0 %v202
    %v2188 = vpop.f32.mrf.mxu0
    %v2189 = vadd.f32 %v2124, %v2188
    %2190 = vmatmul.f32.gmra.mxu0 %v226
    %v2191 = vpop.f32.mrf.mxu0
    %v2192 = vadd.f32 %v2127, %v2191
    %2193 = vmatmul.f32.gmra.mxu0 %v250
    %v2194 = vpop.f32.mrf.mxu0
    %v2195 = vadd.f32 %v2130, %v2194
    %2196 = vmatmul.f32.gmra.mxu0 %v274
    %v2197 = vpop.f32.mrf.mxu0
    %v2198 = vadd.f32 %v2133, %v2197
    %2199 = vmatmul.f32.gmra.mxu0 %v298
    %v2200 = vpop.f32.mrf.mxu0
    %v2201 = vadd.f32 %v2136, %v2200
    %2202 = vmatmul.f32.gmra.mxu0 %v322
    %v2203 = vpop.f32.mrf.mxu0
    %v2204 = vadd.f32 %v2139, %v2203
    %2205 = vmatmul.f32.gmra.mxu0 %v346
    %v2206 = vpop.f32.mrf.mxu0
    %v2207 = vadd.f32 %v2142, %v2206
    %2208 = vmatmul.f32.gmra.mxu0 %v370
    %v2209 = vpop.f32.mrf.mxu0
    %v2210 = vadd.f32 %v2145, %v2209
    %2211 = vmatmul.f32.gmra.mxu0 %v394
    %v2212 = vpop.f32.mrf.mxu0
    %v2213 = vadd.f32 %v2148, %v2212
    %2214 = vmatmul.f32.gmra.mxu0 %v418
    %v2215 = vpop.f32.mrf.mxu0
    %v2216 = vadd.f32 %v2151, %v2215
    %2217 = vmatmul.f32.gmra.mxu0 %v442
    %v2218 = vpop.f32.mrf.mxu0
    %v2219 = vadd.f32 %v2154, %v2218
    %2220 = vmatmul.f32.gmra.mxu0 %v466
    %v2221 = vpop.f32.mrf.mxu0
    %v2222 = vadd.f32 %v2157, %v2221
    %2223 = vmatmul.f32.gmra.mxu0 %v490
    %v2224 = vpop.f32.mrf.mxu0
    %v2225 = vadd.f32 %v2160, %v2224
    %2226 = vmatmul.f32.gmra.mxu0 %v514
    %v2227 = vpop.f32.mrf.mxu0
    %v2228 = vadd.f32 %v2163, %v2227
    %2229 = vmatmul.f32.gmra.mxu0 %v538
    %v2230 = vpop.f32.mrf.mxu0
    %v2231 = vadd.f32 %v2166, %v2230
    %2232 = vdwg.mxu0
    %2233 = vmatpush.msra.mxu0 %v1027
    %2234 = vmatpush.msra.mxu0 %v1025
    %2235 = vmatpush.msra.mxu0 %v1023
    %2236 = vmatpush.msra.mxu0 %v1021
    %2237 = vmatpush.msra.mxu0 %v1019
    %2238 = vmatpush.msra.mxu0 %v1017
    %2239 = vmatpush.msra.mxu0 %v1015
    %2240 = vmatpush.msra.mxu0 %v1013
    %2241 = vmatpush.msra.mxu0 %v1011
    %2242 = vmatpush.msra.mxu0 %v1009
    %2243 = vmatpush.msra.mxu0 %v1007
    %2244 = vmatpush.msra.mxu0 %v1005
    %2245 = vmatpush.msra.mxu0 %v1003
    %2246 = vmatpush.msra.mxu0 %v1001
    %2247 = vmatpush.msra.mxu0 %v999
    %2248 = vmatpush.msra.mxu0 %v997
    %2249 = vmatmul.f32.gmra.mxu0 %v179
    %v2250 = vpop.f32.mrf.mxu0
    %v2251 = vadd.f32 %v2186, %v2250
    %2252 = vmatmul.f32.gmra.mxu0 %v203
    %v2253 = vpop.f32.mrf.mxu0
    %v2254 = vadd.f32 %v2189, %v2253
    %2255 = vmatmul.f32.gmra.mxu0 %v227
    %v2256 = vpop.f32.mrf.mxu0
    %v2257 = vadd.f32 %v2192, %v2256
    %2258 = vmatmul.f32.gmra.mxu0 %v251
    %v2259 = vpop.f32.mrf.mxu0
    %v2260 = vadd.f32 %v2195, %v2259
    %2261 = vmatmul.f32.gmra.mxu0 %v275
    %v2262 = vpop.f32.mrf.mxu0
    %v2263 = vadd.f32 %v2198, %v2262
    %2264 = vmatmul.f32.gmra.mxu0 %v299
    %v2265 = vpop.f32.mrf.mxu0
    %v2266 = vadd.f32 %v2201, %v2265
    %2267 = vmatmul.f32.gmra.mxu0 %v323
    %v2268 = vpop.f32.mrf.mxu0
    %v2269 = vadd.f32 %v2204, %v2268
    %2270 = vmatmul.f32.gmra.mxu0 %v347
    %v2271 = vpop.f32.mrf.mxu0
    %v2272 = vadd.f32 %v2207, %v2271
    %2273 = vmatmul.f32.gmra.mxu0 %v371
    %v2274 = vpop.f32.mrf.mxu0
    %v2275 = vadd.f32 %v2210, %v2274
    %2276 = vmatmul.f32.gmra.mxu0 %v395
    %v2277 = vpop.f32.mrf.mxu0
    %v2278 = vadd.f32 %v2213, %v2277
    %2279 = vmatmul.f32.gmra.mxu0 %v419
    %v2280 = vpop.f32.mrf.mxu0
    %v2281 = vadd.f32 %v2216, %v2280
    %2282 = vmatmul.f32.gmra.mxu0 %v443
    %v2283 = vpop.f32.mrf.mxu0
    %v2284 = vadd.f32 %v2219, %v2283
    %2285 = vmatmul.f32.gmra.mxu0 %v467
    %v2286 = vpop.f32.mrf.mxu0
    %v2287 = vadd.f32 %v2222, %v2286
    %2288 = vmatmul.f32.gmra.mxu0 %v491
    %v2289 = vpop.f32.mrf.mxu0
    %v2290 = vadd.f32 %v2225, %v2289
    %2291 = vmatmul.f32.gmra.mxu0 %v515
    %v2292 = vpop.f32.mrf.mxu0
    %v2293 = vadd.f32 %v2228, %v2292
    %2294 = vmatmul.f32.gmra.mxu0 %v539
    %v2295 = vpop.f32.mrf.mxu0
    %v2296 = vadd.f32 %v2231, %v2295
    %2297 = vdwg.mxu0
    %2298 = vmatpush.msra.mxu0 %v1059
    %2299 = vmatpush.msra.mxu0 %v1057
    %2300 = vmatpush.msra.mxu0 %v1055
    %2301 = vmatpush.msra.mxu0 %v1053
    %2302 = vmatpush.msra.mxu0 %v1051
    %2303 = vmatpush.msra.mxu0 %v1049
    %2304 = vmatpush.msra.mxu0 %v1047
    %2305 = vmatpush.msra.mxu0 %v1045
    %2306 = vmatpush.msra.mxu0 %v1043
    %2307 = vmatpush.msra.mxu0 %v1041
    %2308 = vmatpush.msra.mxu0 %v1039
    %2309 = vmatpush.msra.mxu0 %v1037
    %2310 = vmatpush.msra.mxu0 %v1035
    %2311 = vmatpush.msra.mxu0 %v1033
    %2312 = vmatpush.msra.mxu0 %v1031
    %2313 = vmatpush.msra.mxu0 %v1029
    %2314 = vmatmul.f32.gmra.mxu0 %v180
    %v2315 = vpop.f32.mrf.mxu0
    %v2316 = vadd.f32 %v2251, %v2315
    %2317 = vmatmul.f32.gmra.mxu0 %v204
    %v2318 = vpop.f32.mrf.mxu0
    %v2319 = vadd.f32 %v2254, %v2318
    %2320 = vmatmul.f32.gmra.mxu0 %v228
    %v2321 = vpop.f32.mrf.mxu0
    %v2322 = vadd.f32 %v2257, %v2321
    %2323 = vmatmul.f32.gmra.mxu0 %v252
    %v2324 = vpop.f32.mrf.mxu0
    %v2325 = vadd.f32 %v2260, %v2324
    %2326 = vmatmul.f32.gmra.mxu0 %v276
    %v2327 = vpop.f32.mrf.mxu0
    %v2328 = vadd.f32 %v2263, %v2327
    %2329 = vmatmul.f32.gmra.mxu0 %v300
    %v2330 = vpop.f32.mrf.mxu0
    %v2331 = vadd.f32 %v2266, %v2330
    %2332 = vmatmul.f32.gmra.mxu0 %v324
    %v2333 = vpop.f32.mrf.mxu0
    %v2334 = vadd.f32 %v2269, %v2333
    %2335 = vmatmul.f32.gmra.mxu0 %v348
    %v2336 = vpop.f32.mrf.mxu0
    %v2337 = vadd.f32 %v2272, %v2336
    %2338 = vmatmul.f32.gmra.mxu0 %v372
    %v2339 = vpop.f32.mrf.mxu0
    %v2340 = vadd.f32 %v2275, %v2339
    %2341 = vmatmul.f32.gmra.mxu0 %v396
    %v2342 = vpop.f32.mrf.mxu0
    %v2343 = vadd.f32 %v2278, %v2342
    %2344 = vmatmul.f32.gmra.mxu0 %v420
    %v2345 = vpop.f32.mrf.mxu0
    %v2346 = vadd.f32 %v2281, %v2345
    %2347 = vmatmul.f32.gmra.mxu0 %v444
    %v2348 = vpop.f32.mrf.mxu0
    %v2349 = vadd.f32 %v2284, %v2348
    %2350 = vmatmul.f32.gmra.mxu0 %v468
    %v2351 = vpop.f32.mrf.mxu0
    %v2352 = vadd.f32 %v2287, %v2351
    %2353 = vmatmul.f32.gmra.mxu0 %v492
    %v2354 = vpop.f32.mrf.mxu0
    %v2355 = vadd.f32 %v2290, %v2354
    %2356 = vmatmul.f32.gmra.mxu0 %v516
    %v2357 = vpop.f32.mrf.mxu0
    %v2358 = vadd.f32 %v2293, %v2357
    %2359 = vmatmul.f32.gmra.mxu0 %v540
    %v2360 = vpop.f32.mrf.mxu0
    %v2361 = vadd.f32 %v2296, %v2360
    %2362 = vdwg.mxu0
    %2363 = vmatpush.msra.mxu0 %v1091
    %2364 = vmatpush.msra.mxu0 %v1089
    %2365 = vmatpush.msra.mxu0 %v1087
    %2366 = vmatpush.msra.mxu0 %v1085
    %2367 = vmatpush.msra.mxu0 %v1083
    %2368 = vmatpush.msra.mxu0 %v1081
    %2369 = vmatpush.msra.mxu0 %v1079
    %2370 = vmatpush.msra.mxu0 %v1077
    %2371 = vmatpush.msra.mxu0 %v1075
    %2372 = vmatpush.msra.mxu0 %v1073
    %2373 = vmatpush.msra.mxu0 %v1071
    %2374 = vmatpush.msra.mxu0 %v1069
    %2375 = vmatpush.msra.mxu0 %v1067
    %2376 = vmatpush.msra.mxu0 %v1065
    %2377 = vmatpush.msra.mxu0 %v1063
    %2378 = vmatpush.msra.mxu0 %v1061
    %2379 = vmatmul.f32.gmra.mxu0 %v181
    %v2380 = vpop.f32.mrf.mxu0
    %v2381 = vadd.f32 %v2316, %v2380
    %2382 = vmatmul.f32.gmra.mxu0 %v205
    %v2383 = vpop.f32.mrf.mxu0
    %v2384 = vadd.f32 %v2319, %v2383
    %2385 = vmatmul.f32.gmra.mxu0 %v229
    %v2386 = vpop.f32.mrf.mxu0
    %v2387 = vadd.f32 %v2322, %v2386
    %2388 = vmatmul.f32.gmra.mxu0 %v253
    %v2389 = vpop.f32.mrf.mxu0
    %v2390 = vadd.f32 %v2325, %v2389
    %2391 = vmatmul.f32.gmra.mxu0 %v277
    %v2392 = vpop.f32.mrf.mxu0
    %v2393 = vadd.f32 %v2328, %v2392
    %2394 = vmatmul.f32.gmra.mxu0 %v301
    %v2395 = vpop.f32.mrf.mxu0
    %v2396 = vadd.f32 %v2331, %v2395
    %2397 = vmatmul.f32.gmra.mxu0 %v325
    %v2398 = vpop.f32.mrf.mxu0
    %v2399 = vadd.f32 %v2334, %v2398
    %2400 = vmatmul.f32.gmra.mxu0 %v349
    %v2401 = vpop.f32.mrf.mxu0
    %v2402 = vadd.f32 %v2337, %v2401
    %2403 = vmatmul.f32.gmra.mxu0 %v373
    %v2404 = vpop.f32.mrf.mxu0
    %v2405 = vadd.f32 %v2340, %v2404
    %2406 = vmatmul.f32.gmra.mxu0 %v397
    %v2407 = vpop.f32.mrf.mxu0
    %v2408 = vadd.f32 %v2343, %v2407
    %2409 = vmatmul.f32.gmra.mxu0 %v421
    %v2410 = vpop.f32.mrf.mxu0
    %v2411 = vadd.f32 %v2346, %v2410
    %2412 = vmatmul.f32.gmra.mxu0 %v445
    %v2413 = vpop.f32.mrf.mxu0
    %v2414 = vadd.f32 %v2349, %v2413
    %2415 = vmatmul.f32.gmra.mxu0 %v469
    %v2416 = vpop.f32.mrf.mxu0
    %v2417 = vadd.f32 %v2352, %v2416
    %2418 = vmatmul.f32.gmra.mxu0 %v493
    %v2419 = vpop.f32.mrf.mxu0
    %v2420 = vadd.f32 %v2355, %v2419
    %2421 = vmatmul.f32.gmra.mxu0 %v517
    %v2422 = vpop.f32.mrf.mxu0
    %v2423 = vadd.f32 %v2358, %v2422
    %2424 = vmatmul.f32.gmra.mxu0 %v541
    %v2425 = vpop.f32.mrf.mxu0
    %v2426 = vadd.f32 %v2361, %v2425
    %2427 = vdwg.mxu0
    %2428 = vmatpush.msra.mxu0 %v1123
    %2429 = vmatpush.msra.mxu0 %v1121
    %2430 = vmatpush.msra.mxu0 %v1119
    %2431 = vmatpush.msra.mxu0 %v1117
    %2432 = vmatpush.msra.mxu0 %v1115
    %2433 = vmatpush.msra.mxu0 %v1113
    %2434 = vmatpush.msra.mxu0 %v1111
    %2435 = vmatpush.msra.mxu0 %v1109
    %2436 = vmatpush.msra.mxu0 %v1107
    %2437 = vmatpush.msra.mxu0 %v1105
    %2438 = vmatpush.msra.mxu0 %v1103
    %2439 = vmatpush.msra.mxu0 %v1101
    %2440 = vmatpush.msra.mxu0 %v1099
    %2441 = vmatpush.msra.mxu0 %v1097
    %2442 = vmatpush.msra.mxu0 %v1095
    %2443 = vmatpush.msra.mxu0 %v1093
    %2444 = vmatmul.f32.gmra.mxu0 %v182
    %v2445 = vpop.f32.mrf.mxu0
    %v2446 = vadd.f32 %v2381, %v2445
    %2447 = vmatmul.f32.gmra.mxu0 %v206
    %v2448 = vpop.f32.mrf.mxu0
    %v2449 = vadd.f32 %v2384, %v2448
    %2450 = vmatmul.f32.gmra.mxu0 %v230
    %v2451 = vpop.f32.mrf.mxu0
    %v2452 = vadd.f32 %v2387, %v2451
    %2453 = vmatmul.f32.gmra.mxu0 %v254
    %v2454 = vpop.f32.mrf.mxu0
    %v2455 = vadd.f32 %v2390, %v2454
    %2456 = vmatmul.f32.gmra.mxu0 %v278
    %v2457 = vpop.f32.mrf.mxu0
    %v2458 = vadd.f32 %v2393, %v2457
    %2459 = vmatmul.f32.gmra.mxu0 %v302
    %v2460 = vpop.f32.mrf.mxu0
    %v2461 = vadd.f32 %v2396, %v2460
    %2462 = vmatmul.f32.gmra.mxu0 %v326
    %v2463 = vpop.f32.mrf.mxu0
    %v2464 = vadd.f32 %v2399, %v2463
    %2465 = vmatmul.f32.gmra.mxu0 %v350
    %v2466 = vpop.f32.mrf.mxu0
    %v2467 = vadd.f32 %v2402, %v2466
    %2468 = vmatmul.f32.gmra.mxu0 %v374
    %v2469 = vpop.f32.mrf.mxu0
    %v2470 = vadd.f32 %v2405, %v2469
    %2471 = vmatmul.f32.gmra.mxu0 %v398
    %v2472 = vpop.f32.mrf.mxu0
    %v2473 = vadd.f32 %v2408, %v2472
    %2474 = vmatmul.f32.gmra.mxu0 %v422
    %v2475 = vpop.f32.mrf.mxu0
    %v2476 = vadd.f32 %v2411, %v2475
    %2477 = vmatmul.f32.gmra.mxu0 %v446
    %v2478 = vpop.f32.mrf.mxu0
    %v2479 = vadd.f32 %v2414, %v2478
    %2480 = vmatmul.f32.gmra.mxu0 %v470
    %v2481 = vpop.f32.mrf.mxu0
    %v2482 = vadd.f32 %v2417, %v2481
    %2483 = vmatmul.f32.gmra.mxu0 %v494
    %v2484 = vpop.f32.mrf.mxu0
    %v2485 = vadd.f32 %v2420, %v2484
    %2486 = vmatmul.f32.gmra.mxu0 %v518
    %v2487 = vpop.f32.mrf.mxu0
    %v2488 = vadd.f32 %v2423, %v2487
    %2489 = vmatmul.f32.gmra.mxu0 %v542
    %v2490 = vpop.f32.mrf.mxu0
    %v2491 = vadd.f32 %v2426, %v2490
    %2492 = vdwg.mxu0
    %2493 = vmatpush.msra.mxu0 %v1155
    %2494 = vmatpush.msra.mxu0 %v1153
    %2495 = vmatpush.msra.mxu0 %v1151
    %2496 = vmatpush.msra.mxu0 %v1149
    %2497 = vmatpush.msra.mxu0 %v1147
    %2498 = vmatpush.msra.mxu0 %v1145
    %2499 = vmatpush.msra.mxu0 %v1143
    %2500 = vmatpush.msra.mxu0 %v1141
    %2501 = vmatpush.msra.mxu0 %v1139
    %2502 = vmatpush.msra.mxu0 %v1137
    %2503 = vmatpush.msra.mxu0 %v1135
    %2504 = vmatpush.msra.mxu0 %v1133
    %2505 = vmatpush.msra.mxu0 %v1131
    %2506 = vmatpush.msra.mxu0 %v1129
    %2507 = vmatpush.msra.mxu0 %v1127
    %2508 = vmatpush.msra.mxu0 %v1125
    %2509 = vmatmul.f32.gmra.mxu0 %v183
    %v2510 = vpop.f32.mrf.mxu0
    %v2511 = vadd.f32 %v2446, %v2510
    %2512 = vmatmul.f32.gmra.mxu0 %v207
    %v2513 = vpop.f32.mrf.mxu0
    %v2514 = vadd.f32 %v2449, %v2513
    %2515 = vmatmul.f32.gmra.mxu0 %v231
    %v2516 = vpop.f32.mrf.mxu0
    %v2517 = vadd.f32 %v2452, %v2516
    %2518 = vmatmul.f32.gmra.mxu0 %v255
    %v2519 = vpop.f32.mrf.mxu0
    %v2520 = vadd.f32 %v2455, %v2519
    %2521 = vmatmul.f32.gmra.mxu0 %v279
    %v2522 = vpop.f32.mrf.mxu0
    %v2523 = vadd.f32 %v2458, %v2522
    %2524 = vmatmul.f32.gmra.mxu0 %v303
    %v2525 = vpop.f32.mrf.mxu0
    %v2526 = vadd.f32 %v2461, %v2525
    %2527 = vmatmul.f32.gmra.mxu0 %v327
    %v2528 = vpop.f32.mrf.mxu0
    %v2529 = vadd.f32 %v2464, %v2528
    %2530 = vmatmul.f32.gmra.mxu0 %v351
    %v2531 = vpop.f32.mrf.mxu0
    %v2532 = vadd.f32 %v2467, %v2531
    %2533 = vmatmul.f32.gmra.mxu0 %v375
    %v2534 = vpop.f32.mrf.mxu0
    %v2535 = vadd.f32 %v2470, %v2534
    %2536 = vmatmul.f32.gmra.mxu0 %v399
    %v2537 = vpop.f32.mrf.mxu0
    %v2538 = vadd.f32 %v2473, %v2537
    %2539 = vmatmul.f32.gmra.mxu0 %v423
    %v2540 = vpop.f32.mrf.mxu0
    %v2541 = vadd.f32 %v2476, %v2540
    %2542 = vmatmul.f32.gmra.mxu0 %v447
    %v2543 = vpop.f32.mrf.mxu0
    %v2544 = vadd.f32 %v2479, %v2543
    %2545 = vmatmul.f32.gmra.mxu0 %v471
    %v2546 = vpop.f32.mrf.mxu0
    %v2547 = vadd.f32 %v2482, %v2546
    %2548 = vmatmul.f32.gmra.mxu0 %v495
    %v2549 = vpop.f32.mrf.mxu0
    %v2550 = vadd.f32 %v2485, %v2549
    %2551 = vmatmul.f32.gmra.mxu0 %v519
    %v2552 = vpop.f32.mrf.mxu0
    %v2553 = vadd.f32 %v2488, %v2552
    %2554 = vmatmul.f32.gmra.mxu0 %v543
    %v2555 = vpop.f32.mrf.mxu0
    %v2556 = vadd.f32 %v2491, %v2555
    %2557 = vdwg.mxu0
    %2558 = vmatpush.msra.mxu0 %v1187
    %2559 = vmatpush.msra.mxu0 %v1185
    %2560 = vmatpush.msra.mxu0 %v1183
    %2561 = vmatpush.msra.mxu0 %v1181
    %2562 = vmatpush.msra.mxu0 %v1179
    %2563 = vmatpush.msra.mxu0 %v1177
    %2564 = vmatpush.msra.mxu0 %v1175
    %2565 = vmatpush.msra.mxu0 %v1173
    %2566 = vmatpush.msra.mxu0 %v1171
    %2567 = vmatpush.msra.mxu0 %v1169
    %2568 = vmatpush.msra.mxu0 %v1167
    %2569 = vmatpush.msra.mxu0 %v1165
    %2570 = vmatpush.msra.mxu0 %v1163
    %2571 = vmatpush.msra.mxu0 %v1161
    %2572 = vmatpush.msra.mxu0 %v1159
    %2573 = vmatpush.msra.mxu0 %v1157
    %2574 = vmatmul.f32.gmra.mxu0 %v184
    %v2575 = vpop.f32.mrf.mxu0
    %v2576 = vadd.f32 %v2511, %v2575
    %2577 = vmatmul.f32.gmra.mxu0 %v208
    %v2578 = vpop.f32.mrf.mxu0
    %v2579 = vadd.f32 %v2514, %v2578
    %2580 = vmatmul.f32.gmra.mxu0 %v232
    %v2581 = vpop.f32.mrf.mxu0
    %v2582 = vadd.f32 %v2517, %v2581
    %2583 = vmatmul.f32.gmra.mxu0 %v256
    %v2584 = vpop.f32.mrf.mxu0
    %v2585 = vadd.f32 %v2520, %v2584
    %2586 = vmatmul.f32.gmra.mxu0 %v280
    %v2587 = vpop.f32.mrf.mxu0
    %v2588 = vadd.f32 %v2523, %v2587
    %2589 = vmatmul.f32.gmra.mxu0 %v304
    %v2590 = vpop.f32.mrf.mxu0
    %v2591 = vadd.f32 %v2526, %v2590
    %2592 = vmatmul.f32.gmra.mxu0 %v328
    %v2593 = vpop.f32.mrf.mxu0
    %v2594 = vadd.f32 %v2529, %v2593
    %2595 = vmatmul.f32.gmra.mxu0 %v352
    %v2596 = vpop.f32.mrf.mxu0
    %v2597 = vadd.f32 %v2532, %v2596
    %2598 = vmatmul.f32.gmra.mxu0 %v376
    %v2599 = vpop.f32.mrf.mxu0
    %v2600 = vadd.f32 %v2535, %v2599
    %2601 = vmatmul.f32.gmra.mxu0 %v400
    %v2602 = vpop.f32.mrf.mxu0
    %v2603 = vadd.f32 %v2538, %v2602
    %2604 = vmatmul.f32.gmra.mxu0 %v424
    %v2605 = vpop.f32.mrf.mxu0
    %v2606 = vadd.f32 %v2541, %v2605
    %2607 = vmatmul.f32.gmra.mxu0 %v448
    %v2608 = vpop.f32.mrf.mxu0
    %v2609 = vadd.f32 %v2544, %v2608
    %2610 = vmatmul.f32.gmra.mxu0 %v472
    %v2611 = vpop.f32.mrf.mxu0
    %v2612 = vadd.f32 %v2547, %v2611
    %2613 = vmatmul.f32.gmra.mxu0 %v496
    %v2614 = vpop.f32.mrf.mxu0
    %v2615 = vadd.f32 %v2550, %v2614
    %2616 = vmatmul.f32.gmra.mxu0 %v520
    %v2617 = vpop.f32.mrf.mxu0
    %v2618 = vadd.f32 %v2553, %v2617
    %2619 = vmatmul.f32.gmra.mxu0 %v544
    %v2620 = vpop.f32.mrf.mxu0
    %v2621 = vadd.f32 %v2556, %v2620
    %2622 = vdwg.mxu0
    %2623 = vmatpush.msra.mxu0 %v1219
    %2624 = vmatpush.msra.mxu0 %v1217
    %2625 = vmatpush.msra.mxu0 %v1215
    %2626 = vmatpush.msra.mxu0 %v1213
    %2627 = vmatpush.msra.mxu0 %v1211
    %2628 = vmatpush.msra.mxu0 %v1209
    %2629 = vmatpush.msra.mxu0 %v1207
    %2630 = vmatpush.msra.mxu0 %v1205
    %2631 = vmatpush.msra.mxu0 %v1203
    %2632 = vmatpush.msra.mxu0 %v1201
    %2633 = vmatpush.msra.mxu0 %v1199
    %2634 = vmatpush.msra.mxu0 %v1197
    %2635 = vmatpush.msra.mxu0 %v1195
    %2636 = vmatpush.msra.mxu0 %v1193
    %2637 = vmatpush.msra.mxu0 %v1191
    %2638 = vmatpush.msra.mxu0 %v1189
    %2639 = vmatmul.f32.gmra.mxu0 %v185
    %v2640 = vpop.f32.mrf.mxu0
    %v2641 = vadd.f32 %v2576, %v2640
    %2642 = vmatmul.f32.gmra.mxu0 %v209
    %v2643 = vpop.f32.mrf.mxu0
    %v2644 = vadd.f32 %v2579, %v2643
    %2645 = vmatmul.f32.gmra.mxu0 %v233
    %v2646 = vpop.f32.mrf.mxu0
    %v2647 = vadd.f32 %v2582, %v2646
    %2648 = vmatmul.f32.gmra.mxu0 %v257
    %v2649 = vpop.f32.mrf.mxu0
    %v2650 = vadd.f32 %v2585, %v2649
    %2651 = vmatmul.f32.gmra.mxu0 %v281
    %v2652 = vpop.f32.mrf.mxu0
    %v2653 = vadd.f32 %v2588, %v2652
    %2654 = vmatmul.f32.gmra.mxu0 %v305
    %v2655 = vpop.f32.mrf.mxu0
    %v2656 = vadd.f32 %v2591, %v2655
    %2657 = vmatmul.f32.gmra.mxu0 %v329
    %v2658 = vpop.f32.mrf.mxu0
    %v2659 = vadd.f32 %v2594, %v2658
    %2660 = vmatmul.f32.gmra.mxu0 %v353
    %v2661 = vpop.f32.mrf.mxu0
    %v2662 = vadd.f32 %v2597, %v2661
    %2663 = vmatmul.f32.gmra.mxu0 %v377
    %v2664 = vpop.f32.mrf.mxu0
    %v2665 = vadd.f32 %v2600, %v2664
    %2666 = vmatmul.f32.gmra.mxu0 %v401
    %v2667 = vpop.f32.mrf.mxu0
    %v2668 = vadd.f32 %v2603, %v2667
    %2669 = vmatmul.f32.gmra.mxu0 %v425
    %v2670 = vpop.f32.mrf.mxu0
    %v2671 = vadd.f32 %v2606, %v2670
    %2672 = vmatmul.f32.gmra.mxu0 %v449
    %v2673 = vpop.f32.mrf.mxu0
    %v2674 = vadd.f32 %v2609, %v2673
    %2675 = vmatmul.f32.gmra.mxu0 %v473
    %v2676 = vpop.f32.mrf.mxu0
    %v2677 = vadd.f32 %v2612, %v2676
    %2678 = vmatmul.f32.gmra.mxu0 %v497
    %v2679 = vpop.f32.mrf.mxu0
    %v2680 = vadd.f32 %v2615, %v2679
    %2681 = vmatmul.f32.gmra.mxu0 %v521
    %v2682 = vpop.f32.mrf.mxu0
    %v2683 = vadd.f32 %v2618, %v2682
    %2684 = vmatmul.f32.gmra.mxu0 %v545
    %v2685 = vpop.f32.mrf.mxu0
    %v2686 = vadd.f32 %v2621, %v2685
    %2687 = vdwg.mxu0
    %2688 = vmatpush.msra.mxu0 %v1251
    %2689 = vmatpush.msra.mxu0 %v1249
    %2690 = vmatpush.msra.mxu0 %v1247
    %2691 = vmatpush.msra.mxu0 %v1245
    %2692 = vmatpush.msra.mxu0 %v1243
    %2693 = vmatpush.msra.mxu0 %v1241
    %2694 = vmatpush.msra.mxu0 %v1239
    %2695 = vmatpush.msra.mxu0 %v1237
    %2696 = vmatpush.msra.mxu0 %v1235
    %2697 = vmatpush.msra.mxu0 %v1233
    %2698 = vmatpush.msra.mxu0 %v1231
    %2699 = vmatpush.msra.mxu0 %v1229
    %2700 = vmatpush.msra.mxu0 %v1227
    %2701 = vmatpush.msra.mxu0 %v1225
    %2702 = vmatpush.msra.mxu0 %v1223
    %2703 = vmatpush.msra.mxu0 %v1221
    %2704 = vmatmul.f32.gmra.mxu0 %v186
    %v2705 = vpop.f32.mrf.mxu0
    %v2706 = vadd.f32 %v2641, %v2705
    %2707 = vmatmul.f32.gmra.mxu0 %v210
    %v2708 = vpop.f32.mrf.mxu0
    %v2709 = vadd.f32 %v2644, %v2708
    %2710 = vmatmul.f32.gmra.mxu0 %v234
    %v2711 = vpop.f32.mrf.mxu0
    %v2712 = vadd.f32 %v2647, %v2711
    %2713 = vmatmul.f32.gmra.mxu0 %v258
    %v2714 = vpop.f32.mrf.mxu0
    %v2715 = vadd.f32 %v2650, %v2714
    %2716 = vmatmul.f32.gmra.mxu0 %v282
    %v2717 = vpop.f32.mrf.mxu0
    %v2718 = vadd.f32 %v2653, %v2717
    %2719 = vmatmul.f32.gmra.mxu0 %v306
    %v2720 = vpop.f32.mrf.mxu0
    %v2721 = vadd.f32 %v2656, %v2720
    %2722 = vmatmul.f32.gmra.mxu0 %v330
    %v2723 = vpop.f32.mrf.mxu0
    %v2724 = vadd.f32 %v2659, %v2723
    %2725 = vmatmul.f32.gmra.mxu0 %v354
    %v2726 = vpop.f32.mrf.mxu0
    %v2727 = vadd.f32 %v2662, %v2726
    %2728 = vmatmul.f32.gmra.mxu0 %v378
    %v2729 = vpop.f32.mrf.mxu0
    %v2730 = vadd.f32 %v2665, %v2729
    %2731 = vmatmul.f32.gmra.mxu0 %v402
    %v2732 = vpop.f32.mrf.mxu0
    %v2733 = vadd.f32 %v2668, %v2732
    %2734 = vmatmul.f32.gmra.mxu0 %v426
    %v2735 = vpop.f32.mrf.mxu0
    %v2736 = vadd.f32 %v2671, %v2735
    %2737 = vmatmul.f32.gmra.mxu0 %v450
    %v2738 = vpop.f32.mrf.mxu0
    %v2739 = vadd.f32 %v2674, %v2738
    %2740 = vmatmul.f32.gmra.mxu0 %v474
    %v2741 = vpop.f32.mrf.mxu0
    %v2742 = vadd.f32 %v2677, %v2741
    %2743 = vmatmul.f32.gmra.mxu0 %v498
    %v2744 = vpop.f32.mrf.mxu0
    %v2745 = vadd.f32 %v2680, %v2744
    %2746 = vmatmul.f32.gmra.mxu0 %v522
    %v2747 = vpop.f32.mrf.mxu0
    %v2748 = vadd.f32 %v2683, %v2747
    %2749 = vmatmul.f32.gmra.mxu0 %v546
    %v2750 = vpop.f32.mrf.mxu0
    %v2751 = vadd.f32 %v2686, %v2750
    %2752 = vdwg.mxu0
    %2753 = vmatpush.msra.mxu0 %v1283
    %2754 = vmatpush.msra.mxu0 %v1281
    %2755 = vmatpush.msra.mxu0 %v1279
    %2756 = vmatpush.msra.mxu0 %v1277
    %2757 = vmatpush.msra.mxu0 %v1275
    %2758 = vmatpush.msra.mxu0 %v1273
    %2759 = vmatpush.msra.mxu0 %v1271
    %2760 = vmatpush.msra.mxu0 %v1269
    %2761 = vmatpush.msra.mxu0 %v1267
    %2762 = vmatpush.msra.mxu0 %v1265
    %2763 = vmatpush.msra.mxu0 %v1263
    %2764 = vmatpush.msra.mxu0 %v1261
    %2765 = vmatpush.msra.mxu0 %v1259
    %2766 = vmatpush.msra.mxu0 %v1257
    %2767 = vmatpush.msra.mxu0 %v1255
    %2768 = vmatpush.msra.mxu0 %v1253
    %2769 = vmatmul.f32.gmra.mxu0 %v187
    %v2770 = vpop.f32.mrf.mxu0
    %v2771 = vadd.f32 %v2706, %v2770
    %2772 = vmatmul.f32.gmra.mxu0 %v211
    %v2773 = vpop.f32.mrf.mxu0
    %v2774 = vadd.f32 %v2709, %v2773
    %2775 = vmatmul.f32.gmra.mxu0 %v235
    %v2776 = vpop.f32.mrf.mxu0
    %v2777 = vadd.f32 %v2712, %v2776
    %2778 = vmatmul.f32.gmra.mxu0 %v259
    %v2779 = vpop.f32.mrf.mxu0
    %v2780 = vadd.f32 %v2715, %v2779
    %2781 = vmatmul.f32.gmra.mxu0 %v283
    %v2782 = vpop.f32.mrf.mxu0
    %v2783 = vadd.f32 %v2718, %v2782
    %2784 = vmatmul.f32.gmra.mxu0 %v307
    %v2785 = vpop.f32.mrf.mxu0
    %v2786 = vadd.f32 %v2721, %v2785
    %2787 = vmatmul.f32.gmra.mxu0 %v331
    %v2788 = vpop.f32.mrf.mxu0
    %v2789 = vadd.f32 %v2724, %v2788
    %2790 = vmatmul.f32.gmra.mxu0 %v355
    %v2791 = vpop.f32.mrf.mxu0
    %v2792 = vadd.f32 %v2727, %v2791
    %2793 = vmatmul.f32.gmra.mxu0 %v379
    %v2794 = vpop.f32.mrf.mxu0
    %v2795 = vadd.f32 %v2730, %v2794
    %2796 = vmatmul.f32.gmra.mxu0 %v403
    %v2797 = vpop.f32.mrf.mxu0
    %v2798 = vadd.f32 %v2733, %v2797
    %2799 = vmatmul.f32.gmra.mxu0 %v427
    %v2800 = vpop.f32.mrf.mxu0
    %v2801 = vadd.f32 %v2736, %v2800
    %2802 = vmatmul.f32.gmra.mxu0 %v451
    %v2803 = vpop.f32.mrf.mxu0
    %v2804 = vadd.f32 %v2739, %v2803
    %2805 = vmatmul.f32.gmra.mxu0 %v475
    %v2806 = vpop.f32.mrf.mxu0
    %v2807 = vadd.f32 %v2742, %v2806
    %2808 = vmatmul.f32.gmra.mxu0 %v499
    %v2809 = vpop.f32.mrf.mxu0
    %v2810 = vadd.f32 %v2745, %v2809
    %2811 = vmatmul.f32.gmra.mxu0 %v523
    %v2812 = vpop.f32.mrf.mxu0
    %v2813 = vadd.f32 %v2748, %v2812
    %2814 = vmatmul.f32.gmra.mxu0 %v547
    %v2815 = vpop.f32.mrf.mxu0
    %v2816 = vadd.f32 %v2751, %v2815
    %2817 = vdwg.mxu0
    %2818 = vmatpush.msra.mxu0 %v1315
    %2819 = vmatpush.msra.mxu0 %v1313
    %2820 = vmatpush.msra.mxu0 %v1311
    %2821 = vmatpush.msra.mxu0 %v1309
    %2822 = vmatpush.msra.mxu0 %v1307
    %2823 = vmatpush.msra.mxu0 %v1305
    %2824 = vmatpush.msra.mxu0 %v1303
    %2825 = vmatpush.msra.mxu0 %v1301
    %2826 = vmatpush.msra.mxu0 %v1299
    %2827 = vmatpush.msra.mxu0 %v1297
    %2828 = vmatpush.msra.mxu0 %v1295
    %2829 = vmatpush.msra.mxu0 %v1293
    %2830 = vmatpush.msra.mxu0 %v1291
    %2831 = vmatpush.msra.mxu0 %v1289
    %2832 = vmatpush.msra.mxu0 %v1287
    %2833 = vmatpush.msra.mxu0 %v1285
    %2834 = vmatmul.f32.gmra.mxu0 %v188
    %v2835 = vpop.f32.mrf.mxu0
    %v2836 = vadd.f32 %v2771, %v2835
    %2837 = vmatmul.f32.gmra.mxu0 %v212
    %v2838 = vpop.f32.mrf.mxu0
    %v2839 = vadd.f32 %v2774, %v2838
    %2840 = vmatmul.f32.gmra.mxu0 %v236
    %v2841 = vpop.f32.mrf.mxu0
    %v2842 = vadd.f32 %v2777, %v2841
    %2843 = vmatmul.f32.gmra.mxu0 %v260
    %v2844 = vpop.f32.mrf.mxu0
    %v2845 = vadd.f32 %v2780, %v2844
    %2846 = vmatmul.f32.gmra.mxu0 %v284
    %v2847 = vpop.f32.mrf.mxu0
    %v2848 = vadd.f32 %v2783, %v2847
    %2849 = vmatmul.f32.gmra.mxu0 %v308
    %v2850 = vpop.f32.mrf.mxu0
    %v2851 = vadd.f32 %v2786, %v2850
    %2852 = vmatmul.f32.gmra.mxu0 %v332
    %v2853 = vpop.f32.mrf.mxu0
    %v2854 = vadd.f32 %v2789, %v2853
    %2855 = vmatmul.f32.gmra.mxu0 %v356
    %v2856 = vpop.f32.mrf.mxu0
    %v2857 = vadd.f32 %v2792, %v2856
    %2858 = vmatmul.f32.gmra.mxu0 %v380
    %v2859 = vpop.f32.mrf.mxu0
    %v2860 = vadd.f32 %v2795, %v2859
    %2861 = vmatmul.f32.gmra.mxu0 %v404
    %v2862 = vpop.f32.mrf.mxu0
    %v2863 = vadd.f32 %v2798, %v2862
    %2864 = vmatmul.f32.gmra.mxu0 %v428
    %v2865 = vpop.f32.mrf.mxu0
    %v2866 = vadd.f32 %v2801, %v2865
    %2867 = vmatmul.f32.gmra.mxu0 %v452
    %v2868 = vpop.f32.mrf.mxu0
    %v2869 = vadd.f32 %v2804, %v2868
    %2870 = vmatmul.f32.gmra.mxu0 %v476
    %v2871 = vpop.f32.mrf.mxu0
    %v2872 = vadd.f32 %v2807, %v2871
    %2873 = vmatmul.f32.gmra.mxu0 %v500
    %v2874 = vpop.f32.mrf.mxu0
    %v2875 = vadd.f32 %v2810, %v2874
    %2876 = vmatmul.f32.gmra.mxu0 %v524
    %v2877 = vpop.f32.mrf.mxu0
    %v2878 = vadd.f32 %v2813, %v2877
    %2879 = vmatmul.f32.gmra.mxu0 %v548
    %v2880 = vpop.f32.mrf.mxu0
    %v2881 = vadd.f32 %v2816, %v2880
    %2882 = vdwg.mxu0
    %2883 = vmatpush.msra.mxu0 %v580
    %2884 = vmatpush.msra.mxu0 %v578
    %2885 = vmatpush.msra.mxu0 %v576
    %2886 = vmatpush.msra.mxu0 %v574
    %2887 = vmatpush.msra.mxu0 %v572
    %2888 = vmatpush.msra.mxu0 %v570
    %2889 = vmatpush.msra.mxu0 %v568
    %2890 = vmatpush.msra.mxu0 %v566
    %2891 = vmatpush.msra.mxu0 %v564
    %2892 = vmatpush.msra.mxu0 %v562
    %2893 = vmatpush.msra.mxu0 %v560
    %2894 = vmatpush.msra.mxu0 %v558
    %2895 = vmatpush.msra.mxu0 %v556
    %2896 = vmatpush.msra.mxu0 %v554
    %2897 = vmatpush.msra.mxu0 %v552
    %2898 = vmatpush.msra.mxu0 %v550
    %2899 = vmatmul.f32.gmra.mxu0 %v165
    %v2900 = vpop.f32.mrf.mxu0
    %v2901 = vadd.f32 %v1320, %v2900
    %2902 = vmatmul.f32.gmra.mxu0 %v189
    %v2903 = vpop.f32.mrf.mxu0
    %v2904 = vadd.f32 %v1320, %v2903
    %2905 = vmatmul.f32.gmra.mxu0 %v213
    %v2906 = vpop.f32.mrf.mxu0
    %v2907 = vadd.f32 %v1320, %v2906
    %2908 = vmatmul.f32.gmra.mxu0 %v237
    %v2909 = vpop.f32.mrf.mxu0
    %v2910 = vadd.f32 %v1320, %v2909
    %2911 = vmatmul.f32.gmra.mxu0 %v261
    %v2912 = vpop.f32.mrf.mxu0
    %v2913 = vadd.f32 %v1320, %v2912
    %2914 = vmatmul.f32.gmra.mxu0 %v285
    %v2915 = vpop.f32.mrf.mxu0
    %v2916 = vadd.f32 %v1320, %v2915
    %2917 = vmatmul.f32.gmra.mxu0 %v309
    %v2918 = vpop.f32.mrf.mxu0
    %v2919 = vadd.f32 %v1320, %v2918
    %2920 = vmatmul.f32.gmra.mxu0 %v333
    %v2921 = vpop.f32.mrf.mxu0
    %v2922 = vadd.f32 %v1320, %v2921
    %2923 = vmatmul.f32.gmra.mxu0 %v357
    %v2924 = vpop.f32.mrf.mxu0
    %v2925 = vadd.f32 %v1320, %v2924
    %2926 = vmatmul.f32.gmra.mxu0 %v381
    %v2927 = vpop.f32.mrf.mxu0
    %v2928 = vadd.f32 %v1320, %v2927
    %2929 = vmatmul.f32.gmra.mxu0 %v405
    %v2930 = vpop.f32.mrf.mxu0
    %v2931 = vadd.f32 %v1320, %v2930
    %2932 = vmatmul.f32.gmra.mxu0 %v429
    %v2933 = vpop.f32.mrf.mxu0
    %v2934 = vadd.f32 %v1320, %v2933
    %2935 = vmatmul.f32.gmra.mxu0 %v453
    %v2936 = vpop.f32.mrf.mxu0
    %v2937 = vadd.f32 %v1320, %v2936
    %2938 = vmatmul.f32.gmra.mxu0 %v477
    %v2939 = vpop.f32.mrf.mxu0
    %v2940 = vadd.f32 %v1320, %v2939
    %2941 = vmatmul.f32.gmra.mxu0 %v501
    %v2942 = vpop.f32.mrf.mxu0
    %v2943 = vadd.f32 %v1320, %v2942
    %2944 = vmatmul.f32.gmra.mxu0 %v525
    %v2945 = vpop.f32.mrf.mxu0
    %v2946 = vadd.f32 %v1320, %v2945
    %2947 = vdwg.mxu0
    %2948 = vmatpush.msra.mxu0 %v612
    %2949 = vmatpush.msra.mxu0 %v610
    %2950 = vmatpush.msra.mxu0 %v608
    %2951 = vmatpush.msra.mxu0 %v606
    %2952 = vmatpush.msra.mxu0 %v604
    %2953 = vmatpush.msra.mxu0 %v602
    %2954 = vmatpush.msra.mxu0 %v600
    %2955 = vmatpush.msra.mxu0 %v598
    %2956 = vmatpush.msra.mxu0 %v596
    %2957 = vmatpush.msra.mxu0 %v594
    %2958 = vmatpush.msra.mxu0 %v592
    %2959 = vmatpush.msra.mxu0 %v590
    %2960 = vmatpush.msra.mxu0 %v588
    %2961 = vmatpush.msra.mxu0 %v586
    %2962 = vmatpush.msra.mxu0 %v584
    %2963 = vmatpush.msra.mxu0 %v582
    %2964 = vmatmul.f32.gmra.mxu0 %v166
    %v2965 = vpop.f32.mrf.mxu0
    %v2966 = vadd.f32 %v2901, %v2965
    %2967 = vmatmul.f32.gmra.mxu0 %v190
    %v2968 = vpop.f32.mrf.mxu0
    %v2969 = vadd.f32 %v2904, %v2968
    %2970 = vmatmul.f32.gmra.mxu0 %v214
    %v2971 = vpop.f32.mrf.mxu0
    %v2972 = vadd.f32 %v2907, %v2971
    %2973 = vmatmul.f32.gmra.mxu0 %v238
    %v2974 = vpop.f32.mrf.mxu0
    %v2975 = vadd.f32 %v2910, %v2974
    %2976 = vmatmul.f32.gmra.mxu0 %v262
    %v2977 = vpop.f32.mrf.mxu0
    %v2978 = vadd.f32 %v2913, %v2977
    %2979 = vmatmul.f32.gmra.mxu0 %v286
    %v2980 = vpop.f32.mrf.mxu0
    %v2981 = vadd.f32 %v2916, %v2980
    %2982 = vmatmul.f32.gmra.mxu0 %v310
    %v2983 = vpop.f32.mrf.mxu0
    %v2984 = vadd.f32 %v2919, %v2983
    %2985 = vmatmul.f32.gmra.mxu0 %v334
    %v2986 = vpop.f32.mrf.mxu0
    %v2987 = vadd.f32 %v2922, %v2986
    %2988 = vmatmul.f32.gmra.mxu0 %v358
    %v2989 = vpop.f32.mrf.mxu0
    %v2990 = vadd.f32 %v2925, %v2989
    %2991 = vmatmul.f32.gmra.mxu0 %v382
    %v2992 = vpop.f32.mrf.mxu0
    %v2993 = vadd.f32 %v2928, %v2992
    %2994 = vmatmul.f32.gmra.mxu0 %v406
    %v2995 = vpop.f32.mrf.mxu0
    %v2996 = vadd.f32 %v2931, %v2995
    %2997 = vmatmul.f32.gmra.mxu0 %v430
    %v2998 = vpop.f32.mrf.mxu0
    %v2999 = vadd.f32 %v2934, %v2998
    %3000 = vmatmul.f32.gmra.mxu0 %v454
    %v3001 = vpop.f32.mrf.mxu0
    %v3002 = vadd.f32 %v2937, %v3001
    %3003 = vmatmul.f32.gmra.mxu0 %v478
    %v3004 = vpop.f32.mrf.mxu0
    %v3005 = vadd.f32 %v2940, %v3004
    %3006 = vmatmul.f32.gmra.mxu0 %v502
    %v3007 = vpop.f32.mrf.mxu0
    %v3008 = vadd.f32 %v2943, %v3007
    %3009 = vmatmul.f32.gmra.mxu0 %v526
    %v3010 = vpop.f32.mrf.mxu0
    %v3011 = vadd.f32 %v2946, %v3010
    %3012 = vdwg.mxu0
    %3013 = vmatpush.msra.mxu0 %v644
    %3014 = vmatpush.msra.mxu0 %v642
    %3015 = vmatpush.msra.mxu0 %v640
    %3016 = vmatpush.msra.mxu0 %v638
    %3017 = vmatpush.msra.mxu0 %v636
    %3018 = vmatpush.msra.mxu0 %v634
    %3019 = vmatpush.msra.mxu0 %v632
    %3020 = vmatpush.msra.mxu0 %v630
    %3021 = vmatpush.msra.mxu0 %v628
    %3022 = vmatpush.msra.mxu0 %v626
    %3023 = vmatpush.msra.mxu0 %v624
    %3024 = vmatpush.msra.mxu0 %v622
    %3025 = vmatpush.msra.mxu0 %v620
    %3026 = vmatpush.msra.mxu0 %v618
    %3027 = vmatpush.msra.mxu0 %v616
    %3028 = vmatpush.msra.mxu0 %v614
    %3029 = vmatmul.f32.gmra.mxu0 %v167
    %v3030 = vpop.f32.mrf.mxu0
    %v3031 = vadd.f32 %v2966, %v3030
    %3032 = vmatmul.f32.gmra.mxu0 %v191
    %v3033 = vpop.f32.mrf.mxu0
    %v3034 = vadd.f32 %v2969, %v3033
    %3035 = vmatmul.f32.gmra.mxu0 %v215
    %v3036 = vpop.f32.mrf.mxu0
    %v3037 = vadd.f32 %v2972, %v3036
    %3038 = vmatmul.f32.gmra.mxu0 %v239
    %v3039 = vpop.f32.mrf.mxu0
    %v3040 = vadd.f32 %v2975, %v3039
    %3041 = vmatmul.f32.gmra.mxu0 %v263
    %v3042 = vpop.f32.mrf.mxu0
    %v3043 = vadd.f32 %v2978, %v3042
    %3044 = vmatmul.f32.gmra.mxu0 %v287
    %v3045 = vpop.f32.mrf.mxu0
    %v3046 = vadd.f32 %v2981, %v3045
    %3047 = vmatmul.f32.gmra.mxu0 %v311
    %v3048 = vpop.f32.mrf.mxu0
    %v3049 = vadd.f32 %v2984, %v3048
    %3050 = vmatmul.f32.gmra.mxu0 %v335
    %v3051 = vpop.f32.mrf.mxu0
    %v3052 = vadd.f32 %v2987, %v3051
    %3053 = vmatmul.f32.gmra.mxu0 %v359
    %v3054 = vpop.f32.mrf.mxu0
    %v3055 = vadd.f32 %v2990, %v3054
    %3056 = vmatmul.f32.gmra.mxu0 %v383
    %v3057 = vpop.f32.mrf.mxu0
    %v3058 = vadd.f32 %v2993, %v3057
    %3059 = vmatmul.f32.gmra.mxu0 %v407
    %v3060 = vpop.f32.mrf.mxu0
    %v3061 = vadd.f32 %v2996, %v3060
    %3062 = vmatmul.f32.gmra.mxu0 %v431
    %v3063 = vpop.f32.mrf.mxu0
    %v3064 = vadd.f32 %v2999, %v3063
    %3065 = vmatmul.f32.gmra.mxu0 %v455
    %v3066 = vpop.f32.mrf.mxu0
    %v3067 = vadd.f32 %v3002, %v3066
    %3068 = vmatmul.f32.gmra.mxu0 %v479
    %v3069 = vpop.f32.mrf.mxu0
    %v3070 = vadd.f32 %v3005, %v3069
    %3071 = vmatmul.f32.gmra.mxu0 %v503
    %v3072 = vpop.f32.mrf.mxu0
    %v3073 = vadd.f32 %v3008, %v3072
    %3074 = vmatmul.f32.gmra.mxu0 %v527
    %v3075 = vpop.f32.mrf.mxu0
    %v3076 = vadd.f32 %v3011, %v3075
    %3077 = vdwg.mxu0
    %3078 = vmatpush.msra.mxu0 %v676
    %3079 = vmatpush.msra.mxu0 %v674
    %3080 = vmatpush.msra.mxu0 %v672
    %3081 = vmatpush.msra.mxu0 %v670
    %3082 = vmatpush.msra.mxu0 %v668
    %3083 = vmatpush.msra.mxu0 %v666
    %3084 = vmatpush.msra.mxu0 %v664
    %3085 = vmatpush.msra.mxu0 %v662
    %3086 = vmatpush.msra.mxu0 %v660
    %3087 = vmatpush.msra.mxu0 %v658
    %3088 = vmatpush.msra.mxu0 %v656
    %3089 = vmatpush.msra.mxu0 %v654
    %3090 = vmatpush.msra.mxu0 %v652
    %3091 = vmatpush.msra.mxu0 %v650
    %3092 = vmatpush.msra.mxu0 %v648
    %3093 = vmatpush.msra.mxu0 %v646
    %3094 = vmatmul.f32.gmra.mxu0 %v168
    %v3095 = vpop.f32.mrf.mxu0
    %v3096 = vadd.f32 %v3031, %v3095
    %3097 = vmatmul.f32.gmra.mxu0 %v192
    %v3098 = vpop.f32.mrf.mxu0
    %v3099 = vadd.f32 %v3034, %v3098
    %3100 = vmatmul.f32.gmra.mxu0 %v216
    %v3101 = vpop.f32.mrf.mxu0
    %v3102 = vadd.f32 %v3037, %v3101
    %3103 = vmatmul.f32.gmra.mxu0 %v240
    %v3104 = vpop.f32.mrf.mxu0
    %v3105 = vadd.f32 %v3040, %v3104
    %3106 = vmatmul.f32.gmra.mxu0 %v264
    %v3107 = vpop.f32.mrf.mxu0
    %v3108 = vadd.f32 %v3043, %v3107
    %3109 = vmatmul.f32.gmra.mxu0 %v288
    %v3110 = vpop.f32.mrf.mxu0
    %v3111 = vadd.f32 %v3046, %v3110
    %3112 = vmatmul.f32.gmra.mxu0 %v312
    %v3113 = vpop.f32.mrf.mxu0
    %v3114 = vadd.f32 %v3049, %v3113
    %3115 = vmatmul.f32.gmra.mxu0 %v336
    %v3116 = vpop.f32.mrf.mxu0
    %v3117 = vadd.f32 %v3052, %v3116
    %3118 = vmatmul.f32.gmra.mxu0 %v360
    %v3119 = vpop.f32.mrf.mxu0
    %v3120 = vadd.f32 %v3055, %v3119
    %3121 = vmatmul.f32.gmra.mxu0 %v384
    %v3122 = vpop.f32.mrf.mxu0
    %v3123 = vadd.f32 %v3058, %v3122
    %3124 = vmatmul.f32.gmra.mxu0 %v408
    %v3125 = vpop.f32.mrf.mxu0
    %v3126 = vadd.f32 %v3061, %v3125
    %3127 = vmatmul.f32.gmra.mxu0 %v432
    %v3128 = vpop.f32.mrf.mxu0
    %v3129 = vadd.f32 %v3064, %v3128
    %3130 = vmatmul.f32.gmra.mxu0 %v456
    %v3131 = vpop.f32.mrf.mxu0
    %v3132 = vadd.f32 %v3067, %v3131
    %3133 = vmatmul.f32.gmra.mxu0 %v480
    %v3134 = vpop.f32.mrf.mxu0
    %v3135 = vadd.f32 %v3070, %v3134
    %3136 = vmatmul.f32.gmra.mxu0 %v504
    %v3137 = vpop.f32.mrf.mxu0
    %v3138 = vadd.f32 %v3073, %v3137
    %3139 = vmatmul.f32.gmra.mxu0 %v528
    %v3140 = vpop.f32.mrf.mxu0
    %v3141 = vadd.f32 %v3076, %v3140
    %3142 = vdwg.mxu0
    %3143 = vmatpush.msra.mxu0 %v708
    %3144 = vmatpush.msra.mxu0 %v706
    %3145 = vmatpush.msra.mxu0 %v704
    %3146 = vmatpush.msra.mxu0 %v702
    %3147 = vmatpush.msra.mxu0 %v700
    %3148 = vmatpush.msra.mxu0 %v698
    %3149 = vmatpush.msra.mxu0 %v696
    %3150 = vmatpush.msra.mxu0 %v694
    %3151 = vmatpush.msra.mxu0 %v692
    %3152 = vmatpush.msra.mxu0 %v690
    %3153 = vmatpush.msra.mxu0 %v688
    %3154 = vmatpush.msra.mxu0 %v686
    %3155 = vmatpush.msra.mxu0 %v684
    %3156 = vmatpush.msra.mxu0 %v682
    %3157 = vmatpush.msra.mxu0 %v680
    %3158 = vmatpush.msra.mxu0 %v678
    %3159 = vmatmul.f32.gmra.mxu0 %v169
    %v3160 = vpop.f32.mrf.mxu0
    %v3161 = vadd.f32 %v3096, %v3160
    %3162 = vmatmul.f32.gmra.mxu0 %v193
    %v3163 = vpop.f32.mrf.mxu0
    %v3164 = vadd.f32 %v3099, %v3163
    %3165 = vmatmul.f32.gmra.mxu0 %v217
    %v3166 = vpop.f32.mrf.mxu0
    %v3167 = vadd.f32 %v3102, %v3166
    %3168 = vmatmul.f32.gmra.mxu0 %v241
    %v3169 = vpop.f32.mrf.mxu0
    %v3170 = vadd.f32 %v3105, %v3169
    %3171 = vmatmul.f32.gmra.mxu0 %v265
    %v3172 = vpop.f32.mrf.mxu0
    %v3173 = vadd.f32 %v3108, %v3172
    %3174 = vmatmul.f32.gmra.mxu0 %v289
    %v3175 = vpop.f32.mrf.mxu0
    %v3176 = vadd.f32 %v3111, %v3175
    %3177 = vmatmul.f32.gmra.mxu0 %v313
    %v3178 = vpop.f32.mrf.mxu0
    %v3179 = vadd.f32 %v3114, %v3178
    %3180 = vmatmul.f32.gmra.mxu0 %v337
    %v3181 = vpop.f32.mrf.mxu0
    %v3182 = vadd.f32 %v3117, %v3181
    %3183 = vmatmul.f32.gmra.mxu0 %v361
    %v3184 = vpop.f32.mrf.mxu0
    %v3185 = vadd.f32 %v3120, %v3184
    %3186 = vmatmul.f32.gmra.mxu0 %v385
    %v3187 = vpop.f32.mrf.mxu0
    %v3188 = vadd.f32 %v3123, %v3187
    %3189 = vmatmul.f32.gmra.mxu0 %v409
    %v3190 = vpop.f32.mrf.mxu0
    %v3191 = vadd.f32 %v3126, %v3190
    %3192 = vmatmul.f32.gmra.mxu0 %v433
    %v3193 = vpop.f32.mrf.mxu0
    %v3194 = vadd.f32 %v3129, %v3193
    %3195 = vmatmul.f32.gmra.mxu0 %v457
    %v3196 = vpop.f32.mrf.mxu0
    %v3197 = vadd.f32 %v3132, %v3196
    %3198 = vmatmul.f32.gmra.mxu0 %v481
    %v3199 = vpop.f32.mrf.mxu0
    %v3200 = vadd.f32 %v3135, %v3199
    %3201 = vmatmul.f32.gmra.mxu0 %v505
    %v3202 = vpop.f32.mrf.mxu0
    %v3203 = vadd.f32 %v3138, %v3202
    %3204 = vmatmul.f32.gmra.mxu0 %v529
    %v3205 = vpop.f32.mrf.mxu0
    %v3206 = vadd.f32 %v3141, %v3205
    %3207 = vdwg.mxu0
    %3208 = vmatpush.msra.mxu0 %v740
    %3209 = vmatpush.msra.mxu0 %v738
    %3210 = vmatpush.msra.mxu0 %v736
    %3211 = vmatpush.msra.mxu0 %v734
    %3212 = vmatpush.msra.mxu0 %v732
    %3213 = vmatpush.msra.mxu0 %v730
    %3214 = vmatpush.msra.mxu0 %v728
    %3215 = vmatpush.msra.mxu0 %v726
    %3216 = vmatpush.msra.mxu0 %v724
    %3217 = vmatpush.msra.mxu0 %v722
    %3218 = vmatpush.msra.mxu0 %v720
    %3219 = vmatpush.msra.mxu0 %v718
    %3220 = vmatpush.msra.mxu0 %v716
    %3221 = vmatpush.msra.mxu0 %v714
    %3222 = vmatpush.msra.mxu0 %v712
    %3223 = vmatpush.msra.mxu0 %v710
    %3224 = vmatmul.f32.gmra.mxu0 %v170
    %v3225 = vpop.f32.mrf.mxu0
    %v3226 = vadd.f32 %v3161, %v3225
    %3227 = vmatmul.f32.gmra.mxu0 %v194
    %v3228 = vpop.f32.mrf.mxu0
    %v3229 = vadd.f32 %v3164, %v3228
    %3230 = vmatmul.f32.gmra.mxu0 %v218
    %v3231 = vpop.f32.mrf.mxu0
    %v3232 = vadd.f32 %v3167, %v3231
    %3233 = vmatmul.f32.gmra.mxu0 %v242
    %v3234 = vpop.f32.mrf.mxu0
    %v3235 = vadd.f32 %v3170, %v3234
    %3236 = vmatmul.f32.gmra.mxu0 %v266
    %v3237 = vpop.f32.mrf.mxu0
    %v3238 = vadd.f32 %v3173, %v3237
    %3239 = vmatmul.f32.gmra.mxu0 %v290
    %v3240 = vpop.f32.mrf.mxu0
    %v3241 = vadd.f32 %v3176, %v3240
    %3242 = vmatmul.f32.gmra.mxu0 %v314
    %v3243 = vpop.f32.mrf.mxu0
    %v3244 = vadd.f32 %v3179, %v3243
    %3245 = vmatmul.f32.gmra.mxu0 %v338
    %v3246 = vpop.f32.mrf.mxu0
    %v3247 = vadd.f32 %v3182, %v3246
    %3248 = vmatmul.f32.gmra.mxu0 %v362
    %v3249 = vpop.f32.mrf.mxu0
    %v3250 = vadd.f32 %v3185, %v3249
    %3251 = vmatmul.f32.gmra.mxu0 %v386
    %v3252 = vpop.f32.mrf.mxu0
    %v3253 = vadd.f32 %v3188, %v3252
    %3254 = vmatmul.f32.gmra.mxu0 %v410
    %v3255 = vpop.f32.mrf.mxu0
    %v3256 = vadd.f32 %v3191, %v3255
    %3257 = vmatmul.f32.gmra.mxu0 %v434
    %v3258 = vpop.f32.mrf.mxu0
    %v3259 = vadd.f32 %v3194, %v3258
    %3260 = vmatmul.f32.gmra.mxu0 %v458
    %v3261 = vpop.f32.mrf.mxu0
    %v3262 = vadd.f32 %v3197, %v3261
    %3263 = vmatmul.f32.gmra.mxu0 %v482
    %v3264 = vpop.f32.mrf.mxu0
    %v3265 = vadd.f32 %v3200, %v3264
    %3266 = vmatmul.f32.gmra.mxu0 %v506
    %v3267 = vpop.f32.mrf.mxu0
    %v3268 = vadd.f32 %v3203, %v3267
    %3269 = vmatmul.f32.gmra.mxu0 %v530
    %v3270 = vpop.f32.mrf.mxu0
    %v3271 = vadd.f32 %v3206, %v3270
    %3272 = vdwg.mxu0
    %3273 = vmatpush.msra.mxu0 %v772
    %3274 = vmatpush.msra.mxu0 %v770
    %3275 = vmatpush.msra.mxu0 %v768
    %3276 = vmatpush.msra.mxu0 %v766
    %3277 = vmatpush.msra.mxu0 %v764
    %3278 = vmatpush.msra.mxu0 %v762
    %3279 = vmatpush.msra.mxu0 %v760
    %3280 = vmatpush.msra.mxu0 %v758
    %3281 = vmatpush.msra.mxu0 %v756
    %3282 = vmatpush.msra.mxu0 %v754
    %3283 = vmatpush.msra.mxu0 %v752
    %3284 = vmatpush.msra.mxu0 %v750
    %3285 = vmatpush.msra.mxu0 %v748
    %3286 = vmatpush.msra.mxu0 %v746
    %3287 = vmatpush.msra.mxu0 %v744
    %3288 = vmatpush.msra.mxu0 %v742
    %3289 = vmatmul.f32.gmra.mxu0 %v171
    %v3290 = vpop.f32.mrf.mxu0
    %v3291 = vadd.f32 %v3226, %v3290
    %3292 = vmatmul.f32.gmra.mxu0 %v195
    %v3293 = vpop.f32.mrf.mxu0
    %v3294 = vadd.f32 %v3229, %v3293
    %3295 = vmatmul.f32.gmra.mxu0 %v219
    %v3296 = vpop.f32.mrf.mxu0
    %v3297 = vadd.f32 %v3232, %v3296
    %3298 = vmatmul.f32.gmra.mxu0 %v243
    %v3299 = vpop.f32.mrf.mxu0
    %v3300 = vadd.f32 %v3235, %v3299
    %3301 = vmatmul.f32.gmra.mxu0 %v267
    %v3302 = vpop.f32.mrf.mxu0
    %v3303 = vadd.f32 %v3238, %v3302
    %3304 = vmatmul.f32.gmra.mxu0 %v291
    %v3305 = vpop.f32.mrf.mxu0
    %v3306 = vadd.f32 %v3241, %v3305
    %3307 = vmatmul.f32.gmra.mxu0 %v315
    %v3308 = vpop.f32.mrf.mxu0
    %v3309 = vadd.f32 %v3244, %v3308
    %3310 = vmatmul.f32.gmra.mxu0 %v339
    %v3311 = vpop.f32.mrf.mxu0
    %v3312 = vadd.f32 %v3247, %v3311
    %3313 = vmatmul.f32.gmra.mxu0 %v363
    %v3314 = vpop.f32.mrf.mxu0
    %v3315 = vadd.f32 %v3250, %v3314
    %3316 = vmatmul.f32.gmra.mxu0 %v387
    %v3317 = vpop.f32.mrf.mxu0
    %v3318 = vadd.f32 %v3253, %v3317
    %3319 = vmatmul.f32.gmra.mxu0 %v411
    %v3320 = vpop.f32.mrf.mxu0
    %v3321 = vadd.f32 %v3256, %v3320
    %3322 = vmatmul.f32.gmra.mxu0 %v435
    %v3323 = vpop.f32.mrf.mxu0
    %v3324 = vadd.f32 %v3259, %v3323
    %3325 = vmatmul.f32.gmra.mxu0 %v459
    %v3326 = vpop.f32.mrf.mxu0
    %v3327 = vadd.f32 %v3262, %v3326
    %3328 = vmatmul.f32.gmra.mxu0 %v483
    %v3329 = vpop.f32.mrf.mxu0
    %v3330 = vadd.f32 %v3265, %v3329
    %3331 = vmatmul.f32.gmra.mxu0 %v507
    %v3332 = vpop.f32.mrf.mxu0
    %v3333 = vadd.f32 %v3268, %v3332
    %3334 = vmatmul.f32.gmra.mxu0 %v531
    %v3335 = vpop.f32.mrf.mxu0
    %v3336 = vadd.f32 %v3271, %v3335
    %3337 = vdwg.mxu0
    %3338 = vmatpush.msra.mxu0 %v804
    %3339 = vmatpush.msra.mxu0 %v802
    %3340 = vmatpush.msra.mxu0 %v800
    %3341 = vmatpush.msra.mxu0 %v798
    %3342 = vmatpush.msra.mxu0 %v796
    %3343 = vmatpush.msra.mxu0 %v794
    %3344 = vmatpush.msra.mxu0 %v792
    %3345 = vmatpush.msra.mxu0 %v790
    %3346 = vmatpush.msra.mxu0 %v788
    %3347 = vmatpush.msra.mxu0 %v786
    %3348 = vmatpush.msra.mxu0 %v784
    %3349 = vmatpush.msra.mxu0 %v782
    %3350 = vmatpush.msra.mxu0 %v780
    %3351 = vmatpush.msra.mxu0 %v778
    %3352 = vmatpush.msra.mxu0 %v776
    %3353 = vmatpush.msra.mxu0 %v774
    %3354 = vmatmul.f32.gmra.mxu0 %v172
    %v3355 = vpop.f32.mrf.mxu0
    %v3356 = vadd.f32 %v3291, %v3355
    %3357 = vmatmul.f32.gmra.mxu0 %v196
    %v3358 = vpop.f32.mrf.mxu0
    %v3359 = vadd.f32 %v3294, %v3358
    %3360 = vmatmul.f32.gmra.mxu0 %v220
    %v3361 = vpop.f32.mrf.mxu0
    %v3362 = vadd.f32 %v3297, %v3361
    %3363 = vmatmul.f32.gmra.mxu0 %v244
    %v3364 = vpop.f32.mrf.mxu0
    %v3365 = vadd.f32 %v3300, %v3364
    %3366 = vmatmul.f32.gmra.mxu0 %v268
    %v3367 = vpop.f32.mrf.mxu0
    %v3368 = vadd.f32 %v3303, %v3367
    %3369 = vmatmul.f32.gmra.mxu0 %v292
    %v3370 = vpop.f32.mrf.mxu0
    %v3371 = vadd.f32 %v3306, %v3370
    %3372 = vmatmul.f32.gmra.mxu0 %v316
    %v3373 = vpop.f32.mrf.mxu0
    %v3374 = vadd.f32 %v3309, %v3373
    %3375 = vmatmul.f32.gmra.mxu0 %v340
    %v3376 = vpop.f32.mrf.mxu0
    %v3377 = vadd.f32 %v3312, %v3376
    %3378 = vmatmul.f32.gmra.mxu0 %v364
    %v3379 = vpop.f32.mrf.mxu0
    %v3380 = vadd.f32 %v3315, %v3379
    %3381 = vmatmul.f32.gmra.mxu0 %v388
    %v3382 = vpop.f32.mrf.mxu0
    %v3383 = vadd.f32 %v3318, %v3382
    %3384 = vmatmul.f32.gmra.mxu0 %v412
    %v3385 = vpop.f32.mrf.mxu0
    %v3386 = vadd.f32 %v3321, %v3385
    %3387 = vmatmul.f32.gmra.mxu0 %v436
    %v3388 = vpop.f32.mrf.mxu0
    %v3389 = vadd.f32 %v3324, %v3388
    %3390 = vmatmul.f32.gmra.mxu0 %v460
    %v3391 = vpop.f32.mrf.mxu0
    %v3392 = vadd.f32 %v3327, %v3391
    %3393 = vmatmul.f32.gmra.mxu0 %v484
    %v3394 = vpop.f32.mrf.mxu0
    %v3395 = vadd.f32 %v3330, %v3394
    %3396 = vmatmul.f32.gmra.mxu0 %v508
    %v3397 = vpop.f32.mrf.mxu0
    %v3398 = vadd.f32 %v3333, %v3397
    %3399 = vmatmul.f32.gmra.mxu0 %v532
    %v3400 = vpop.f32.mrf.mxu0
    %v3401 = vadd.f32 %v3336, %v3400
    %3402 = vdwg.mxu0
    %3403 = vmatpush.msra.mxu0 %v836
    %3404 = vmatpush.msra.mxu0 %v834
    %3405 = vmatpush.msra.mxu0 %v832
    %3406 = vmatpush.msra.mxu0 %v830
    %3407 = vmatpush.msra.mxu0 %v828
    %3408 = vmatpush.msra.mxu0 %v826
    %3409 = vmatpush.msra.mxu0 %v824
    %3410 = vmatpush.msra.mxu0 %v822
    %3411 = vmatpush.msra.mxu0 %v820
    %3412 = vmatpush.msra.mxu0 %v818
    %3413 = vmatpush.msra.mxu0 %v816
    %3414 = vmatpush.msra.mxu0 %v814
    %3415 = vmatpush.msra.mxu0 %v812
    %3416 = vmatpush.msra.mxu0 %v810
    %3417 = vmatpush.msra.mxu0 %v808
    %3418 = vmatpush.msra.mxu0 %v806
    %3419 = vmatmul.f32.gmra.mxu0 %v173
    %v3420 = vpop.f32.mrf.mxu0
    %v3421 = vadd.f32 %v3356, %v3420
    %3422 = vmatmul.f32.gmra.mxu0 %v197
    %v3423 = vpop.f32.mrf.mxu0
    %v3424 = vadd.f32 %v3359, %v3423
    %3425 = vmatmul.f32.gmra.mxu0 %v221
    %v3426 = vpop.f32.mrf.mxu0
    %v3427 = vadd.f32 %v3362, %v3426
    %3428 = vmatmul.f32.gmra.mxu0 %v245
    %v3429 = vpop.f32.mrf.mxu0
    %v3430 = vadd.f32 %v3365, %v3429
    %3431 = vmatmul.f32.gmra.mxu0 %v269
    %v3432 = vpop.f32.mrf.mxu0
    %v3433 = vadd.f32 %v3368, %v3432
    %3434 = vmatmul.f32.gmra.mxu0 %v293
    %v3435 = vpop.f32.mrf.mxu0
    %v3436 = vadd.f32 %v3371, %v3435
    %3437 = vmatmul.f32.gmra.mxu0 %v317
    %v3438 = vpop.f32.mrf.mxu0
    %v3439 = vadd.f32 %v3374, %v3438
    %3440 = vmatmul.f32.gmra.mxu0 %v341
    %v3441 = vpop.f32.mrf.mxu0
    %v3442 = vadd.f32 %v3377, %v3441
    %3443 = vmatmul.f32.gmra.mxu0 %v365
    %v3444 = vpop.f32.mrf.mxu0
    %v3445 = vadd.f32 %v3380, %v3444
    %3446 = vmatmul.f32.gmra.mxu0 %v389
    %v3447 = vpop.f32.mrf.mxu0
    %v3448 = vadd.f32 %v3383, %v3447
    %3449 = vmatmul.f32.gmra.mxu0 %v413
    %v3450 = vpop.f32.mrf.mxu0
    %v3451 = vadd.f32 %v3386, %v3450
    %3452 = vmatmul.f32.gmra.mxu0 %v437
    %v3453 = vpop.f32.mrf.mxu0
    %v3454 = vadd.f32 %v3389, %v3453
    %3455 = vmatmul.f32.gmra.mxu0 %v461
    %v3456 = vpop.f32.mrf.mxu0
    %v3457 = vadd.f32 %v3392, %v3456
    %3458 = vmatmul.f32.gmra.mxu0 %v485
    %v3459 = vpop.f32.mrf.mxu0
    %v3460 = vadd.f32 %v3395, %v3459
    %3461 = vmatmul.f32.gmra.mxu0 %v509
    %v3462 = vpop.f32.mrf.mxu0
    %v3463 = vadd.f32 %v3398, %v3462
    %3464 = vmatmul.f32.gmra.mxu0 %v533
    %v3465 = vpop.f32.mrf.mxu0
    %v3466 = vadd.f32 %v3401, %v3465
    %3467 = vdwg.mxu0
    %3468 = vmatpush.msra.mxu0 %v868
    %3469 = vmatpush.msra.mxu0 %v866
    %3470 = vmatpush.msra.mxu0 %v864
    %3471 = vmatpush.msra.mxu0 %v862
    %3472 = vmatpush.msra.mxu0 %v860
    %3473 = vmatpush.msra.mxu0 %v858
    %3474 = vmatpush.msra.mxu0 %v856
    %3475 = vmatpush.msra.mxu0 %v854
    %3476 = vmatpush.msra.mxu0 %v852
    %3477 = vmatpush.msra.mxu0 %v850
    %3478 = vmatpush.msra.mxu0 %v848
    %3479 = vmatpush.msra.mxu0 %v846
    %3480 = vmatpush.msra.mxu0 %v844
    %3481 = vmatpush.msra.mxu0 %v842
    %3482 = vmatpush.msra.mxu0 %v840
    %3483 = vmatpush.msra.mxu0 %v838
    %3484 = vmatmul.f32.gmra.mxu0 %v174
    %v3485 = vpop.f32.mrf.mxu0
    %v3486 = vadd.f32 %v3421, %v3485
    %3487 = vmatmul.f32.gmra.mxu0 %v198
    %v3488 = vpop.f32.mrf.mxu0
    %v3489 = vadd.f32 %v3424, %v3488
    %3490 = vmatmul.f32.gmra.mxu0 %v222
    %v3491 = vpop.f32.mrf.mxu0
    %v3492 = vadd.f32 %v3427, %v3491
    %3493 = vmatmul.f32.gmra.mxu0 %v246
    %v3494 = vpop.f32.mrf.mxu0
    %v3495 = vadd.f32 %v3430, %v3494
    %3496 = vmatmul.f32.gmra.mxu0 %v270
    %v3497 = vpop.f32.mrf.mxu0
    %v3498 = vadd.f32 %v3433, %v3497
    %3499 = vmatmul.f32.gmra.mxu0 %v294
    %v3500 = vpop.f32.mrf.mxu0
    %v3501 = vadd.f32 %v3436, %v3500
    %3502 = vmatmul.f32.gmra.mxu0 %v318
    %v3503 = vpop.f32.mrf.mxu0
    %v3504 = vadd.f32 %v3439, %v3503
    %3505 = vmatmul.f32.gmra.mxu0 %v342
    %v3506 = vpop.f32.mrf.mxu0
    %v3507 = vadd.f32 %v3442, %v3506
    %3508 = vmatmul.f32.gmra.mxu0 %v366
    %v3509 = vpop.f32.mrf.mxu0
    %v3510 = vadd.f32 %v3445, %v3509
    %3511 = vmatmul.f32.gmra.mxu0 %v390
    %v3512 = vpop.f32.mrf.mxu0
    %v3513 = vadd.f32 %v3448, %v3512
    %3514 = vmatmul.f32.gmra.mxu0 %v414
    %v3515 = vpop.f32.mrf.mxu0
    %v3516 = vadd.f32 %v3451, %v3515
    %3517 = vmatmul.f32.gmra.mxu0 %v438
    %v3518 = vpop.f32.mrf.mxu0
    %v3519 = vadd.f32 %v3454, %v3518
    %3520 = vmatmul.f32.gmra.mxu0 %v462
    %v3521 = vpop.f32.mrf.mxu0
    %v3522 = vadd.f32 %v3457, %v3521
    %3523 = vmatmul.f32.gmra.mxu0 %v486
    %v3524 = vpop.f32.mrf.mxu0
    %v3525 = vadd.f32 %v3460, %v3524
    %3526 = vmatmul.f32.gmra.mxu0 %v510
    %v3527 = vpop.f32.mrf.mxu0
    %v3528 = vadd.f32 %v3463, %v3527
    %3529 = vmatmul.f32.gmra.mxu0 %v534
    %v3530 = vpop.f32.mrf.mxu0
    %v3531 = vadd.f32 %v3466, %v3530
    %3532 = vdwg.mxu0
    %3533 = vmatpush.msra.mxu0 %v900
    %3534 = vmatpush.msra.mxu0 %v898
    %3535 = vmatpush.msra.mxu0 %v896
    %3536 = vmatpush.msra.mxu0 %v894
    %3537 = vmatpush.msra.mxu0 %v892
    %3538 = vmatpush.msra.mxu0 %v890
    %3539 = vmatpush.msra.mxu0 %v888
    %3540 = vmatpush.msra.mxu0 %v886
    %3541 = vmatpush.msra.mxu0 %v884
    %3542 = vmatpush.msra.mxu0 %v882
    %3543 = vmatpush.msra.mxu0 %v880
    %3544 = vmatpush.msra.mxu0 %v878
    %3545 = vmatpush.msra.mxu0 %v876
    %3546 = vmatpush.msra.mxu0 %v874
    %3547 = vmatpush.msra.mxu0 %v872
    %3548 = vmatpush.msra.mxu0 %v870
    %3549 = vmatmul.f32.gmra.mxu0 %v175
    %v3550 = vpop.f32.mrf.mxu0
    %v3551 = vadd.f32 %v3486, %v3550
    %3552 = vmatmul.f32.gmra.mxu0 %v199
    %v3553 = vpop.f32.mrf.mxu0
    %v3554 = vadd.f32 %v3489, %v3553
    %3555 = vmatmul.f32.gmra.mxu0 %v223
    %v3556 = vpop.f32.mrf.mxu0
    %v3557 = vadd.f32 %v3492, %v3556
    %3558 = vmatmul.f32.gmra.mxu0 %v247
    %v3559 = vpop.f32.mrf.mxu0
    %v3560 = vadd.f32 %v3495, %v3559
    %3561 = vmatmul.f32.gmra.mxu0 %v271
    %v3562 = vpop.f32.mrf.mxu0
    %v3563 = vadd.f32 %v3498, %v3562
    %3564 = vmatmul.f32.gmra.mxu0 %v295
    %v3565 = vpop.f32.mrf.mxu0
    %v3566 = vadd.f32 %v3501, %v3565
    %3567 = vmatmul.f32.gmra.mxu0 %v319
    %v3568 = vpop.f32.mrf.mxu0
    %v3569 = vadd.f32 %v3504, %v3568
    %3570 = vmatmul.f32.gmra.mxu0 %v343
    %v3571 = vpop.f32.mrf.mxu0
    %v3572 = vadd.f32 %v3507, %v3571
    %3573 = vmatmul.f32.gmra.mxu0 %v367
    %v3574 = vpop.f32.mrf.mxu0
    %v3575 = vadd.f32 %v3510, %v3574
    %3576 = vmatmul.f32.gmra.mxu0 %v391
    %v3577 = vpop.f32.mrf.mxu0
    %v3578 = vadd.f32 %v3513, %v3577
    %3579 = vmatmul.f32.gmra.mxu0 %v415
    %v3580 = vpop.f32.mrf.mxu0
    %v3581 = vadd.f32 %v3516, %v3580
    %3582 = vmatmul.f32.gmra.mxu0 %v439
    %v3583 = vpop.f32.mrf.mxu0
    %v3584 = vadd.f32 %v3519, %v3583
    %3585 = vmatmul.f32.gmra.mxu0 %v463
    %v3586 = vpop.f32.mrf.mxu0
    %v3587 = vadd.f32 %v3522, %v3586
    %3588 = vmatmul.f32.gmra.mxu0 %v487
    %v3589 = vpop.f32.mrf.mxu0
    %v3590 = vadd.f32 %v3525, %v3589
    %3591 = vmatmul.f32.gmra.mxu0 %v511
    %v3592 = vpop.f32.mrf.mxu0
    %v3593 = vadd.f32 %v3528, %v3592
    %3594 = vmatmul.f32.gmra.mxu0 %v535
    %v3595 = vpop.f32.mrf.mxu0
    %v3596 = vadd.f32 %v3531, %v3595
    %3597 = vdwg.mxu0
    %3598 = vmatpush.msra.mxu0 %v932
    %3599 = vmatpush.msra.mxu0 %v930
    %3600 = vmatpush.msra.mxu0 %v928
    %3601 = vmatpush.msra.mxu0 %v926
    %3602 = vmatpush.msra.mxu0 %v924
    %3603 = vmatpush.msra.mxu0 %v922
    %3604 = vmatpush.msra.mxu0 %v920
    %3605 = vmatpush.msra.mxu0 %v918
    %3606 = vmatpush.msra.mxu0 %v916
    %3607 = vmatpush.msra.mxu0 %v914
    %3608 = vmatpush.msra.mxu0 %v912
    %3609 = vmatpush.msra.mxu0 %v910
    %3610 = vmatpush.msra.mxu0 %v908
    %3611 = vmatpush.msra.mxu0 %v906
    %3612 = vmatpush.msra.mxu0 %v904
    %3613 = vmatpush.msra.mxu0 %v902
    %3614 = vmatmul.f32.gmra.mxu0 %v176
    %v3615 = vpop.f32.mrf.mxu0
    %v3616 = vadd.f32 %v3551, %v3615
    %3617 = vmatmul.f32.gmra.mxu0 %v200
    %v3618 = vpop.f32.mrf.mxu0
    %v3619 = vadd.f32 %v3554, %v3618
    %3620 = vmatmul.f32.gmra.mxu0 %v224
    %v3621 = vpop.f32.mrf.mxu0
    %v3622 = vadd.f32 %v3557, %v3621
    %3623 = vmatmul.f32.gmra.mxu0 %v248
    %v3624 = vpop.f32.mrf.mxu0
    %v3625 = vadd.f32 %v3560, %v3624
    %3626 = vmatmul.f32.gmra.mxu0 %v272
    %v3627 = vpop.f32.mrf.mxu0
    %v3628 = vadd.f32 %v3563, %v3627
    %3629 = vmatmul.f32.gmra.mxu0 %v296
    %v3630 = vpop.f32.mrf.mxu0
    %v3631 = vadd.f32 %v3566, %v3630
    %3632 = vmatmul.f32.gmra.mxu0 %v320
    %v3633 = vpop.f32.mrf.mxu0
    %v3634 = vadd.f32 %v3569, %v3633
    %3635 = vmatmul.f32.gmra.mxu0 %v344
    %v3636 = vpop.f32.mrf.mxu0
    %v3637 = vadd.f32 %v3572, %v3636
    %3638 = vmatmul.f32.gmra.mxu0 %v368
    %v3639 = vpop.f32.mrf.mxu0
    %v3640 = vadd.f32 %v3575, %v3639
    %3641 = vmatmul.f32.gmra.mxu0 %v392
    %v3642 = vpop.f32.mrf.mxu0
    %v3643 = vadd.f32 %v3578, %v3642
    %3644 = vmatmul.f32.gmra.mxu0 %v416
    %v3645 = vpop.f32.mrf.mxu0
    %v3646 = vadd.f32 %v3581, %v3645
    %3647 = vmatmul.f32.gmra.mxu0 %v440
    %v3648 = vpop.f32.mrf.mxu0
    %v3649 = vadd.f32 %v3584, %v3648
    %3650 = vmatmul.f32.gmra.mxu0 %v464
    %v3651 = vpop.f32.mrf.mxu0
    %v3652 = vadd.f32 %v3587, %v3651
    %3653 = vmatmul.f32.gmra.mxu0 %v488
    %v3654 = vpop.f32.mrf.mxu0
    %v3655 = vadd.f32 %v3590, %v3654
    %3656 = vmatmul.f32.gmra.mxu0 %v512
    %v3657 = vpop.f32.mrf.mxu0
    %v3658 = vadd.f32 %v3593, %v3657
    %3659 = vmatmul.f32.gmra.mxu0 %v536
    %v3660 = vpop.f32.mrf.mxu0
    %v3661 = vadd.f32 %v3596, %v3660
    %3662 = vdwg.mxu0
    %3663 = vmatpush.msra.mxu0 %v964
    %3664 = vmatpush.msra.mxu0 %v962
    %3665 = vmatpush.msra.mxu0 %v960
    %3666 = vmatpush.msra.mxu0 %v958
    %3667 = vmatpush.msra.mxu0 %v956
    %3668 = vmatpush.msra.mxu0 %v954
    %3669 = vmatpush.msra.mxu0 %v952
    %3670 = vmatpush.msra.mxu0 %v950
    %3671 = vmatpush.msra.mxu0 %v948
    %3672 = vmatpush.msra.mxu0 %v946
    %3673 = vmatpush.msra.mxu0 %v944
    %3674 = vmatpush.msra.mxu0 %v942
    %3675 = vmatpush.msra.mxu0 %v940
    %3676 = vmatpush.msra.mxu0 %v938
    %3677 = vmatpush.msra.mxu0 %v936
    %3678 = vmatpush.msra.mxu0 %v934
    %3679 = vmatmul.f32.gmra.mxu0 %v177
    %v3680 = vpop.f32.mrf.mxu0
    %v3681 = vadd.f32 %v3616, %v3680
    %3682 = vmatmul.f32.gmra.mxu0 %v201
    %v3683 = vpop.f32.mrf.mxu0
    %v3684 = vadd.f32 %v3619, %v3683
    %3685 = vmatmul.f32.gmra.mxu0 %v225
    %v3686 = vpop.f32.mrf.mxu0
    %v3687 = vadd.f32 %v3622, %v3686
    %3688 = vmatmul.f32.gmra.mxu0 %v249
    %v3689 = vpop.f32.mrf.mxu0
    %v3690 = vadd.f32 %v3625, %v3689
    %3691 = vmatmul.f32.gmra.mxu0 %v273
    %v3692 = vpop.f32.mrf.mxu0
    %v3693 = vadd.f32 %v3628, %v3692
    %3694 = vmatmul.f32.gmra.mxu0 %v297
    %v3695 = vpop.f32.mrf.mxu0
    %v3696 = vadd.f32 %v3631, %v3695
    %3697 = vmatmul.f32.gmra.mxu0 %v321
    %v3698 = vpop.f32.mrf.mxu0
    %v3699 = vadd.f32 %v3634, %v3698
    %3700 = vmatmul.f32.gmra.mxu0 %v345
    %v3701 = vpop.f32.mrf.mxu0
    %v3702 = vadd.f32 %v3637, %v3701
    %3703 = vmatmul.f32.gmra.mxu0 %v369
    %v3704 = vpop.f32.mrf.mxu0
    %v3705 = vadd.f32 %v3640, %v3704
    %3706 = vmatmul.f32.gmra.mxu0 %v393
    %v3707 = vpop.f32.mrf.mxu0
    %v3708 = vadd.f32 %v3643, %v3707
    %3709 = vmatmul.f32.gmra.mxu0 %v417
    %v3710 = vpop.f32.mrf.mxu0
    %v3711 = vadd.f32 %v3646, %v3710
    %3712 = vmatmul.f32.gmra.mxu0 %v441
    %v3713 = vpop.f32.mrf.mxu0
    %v3714 = vadd.f32 %v3649, %v3713
    %3715 = vmatmul.f32.gmra.mxu0 %v465
    %v3716 = vpop.f32.mrf.mxu0
    %v3717 = vadd.f32 %v3652, %v3716
    %3718 = vmatmul.f32.gmra.mxu0 %v489
    %v3719 = vpop.f32.mrf.mxu0
    %v3720 = vadd.f32 %v3655, %v3719
    %3721 = vmatmul.f32.gmra.mxu0 %v513
    %v3722 = vpop.f32.mrf.mxu0
    %v3723 = vadd.f32 %v3658, %v3722
    %3724 = vmatmul.f32.gmra.mxu0 %v537
    %v3725 = vpop.f32.mrf.mxu0
    %v3726 = vadd.f32 %v3661, %v3725
    %3727 = vdwg.mxu0
    %3728 = vmatpush.msra.mxu0 %v996
    %3729 = vmatpush.msra.mxu0 %v994
    %3730 = vmatpush.msra.mxu0 %v992
    %3731 = vmatpush.msra.mxu0 %v990
    %3732 = vmatpush.msra.mxu0 %v988
    %3733 = vmatpush.msra.mxu0 %v986
    %3734 = vmatpush.msra.mxu0 %v984
    %3735 = vmatpush.msra.mxu0 %v982
    %3736 = vmatpush.msra.mxu0 %v980
    %3737 = vmatpush.msra.mxu0 %v978
    %3738 = vmatpush.msra.mxu0 %v976
    %3739 = vmatpush.msra.mxu0 %v974
    %3740 = vmatpush.msra.mxu0 %v972
    %3741 = vmatpush.msra.mxu0 %v970
    %3742 = vmatpush.msra.mxu0 %v968
    %3743 = vmatpush.msra.mxu0 %v966
    %3744 = vmatmul.f32.gmra.mxu0 %v178
    %v3745 = vpop.f32.mrf.mxu0
    %v3746 = vadd.f32 %v3681, %v3745
    %3747 = vmatmul.f32.gmra.mxu0 %v202
    %v3748 = vpop.f32.mrf.mxu0
    %v3749 = vadd.f32 %v3684, %v3748
    %3750 = vmatmul.f32.gmra.mxu0 %v226
    %v3751 = vpop.f32.mrf.mxu0
    %v3752 = vadd.f32 %v3687, %v3751
    %3753 = vmatmul.f32.gmra.mxu0 %v250
    %v3754 = vpop.f32.mrf.mxu0
    %v3755 = vadd.f32 %v3690, %v3754
    %3756 = vmatmul.f32.gmra.mxu0 %v274
    %v3757 = vpop.f32.mrf.mxu0
    %v3758 = vadd.f32 %v3693, %v3757
    %3759 = vmatmul.f32.gmra.mxu0 %v298
    %v3760 = vpop.f32.mrf.mxu0
    %v3761 = vadd.f32 %v3696, %v3760
    %3762 = vmatmul.f32.gmra.mxu0 %v322
    %v3763 = vpop.f32.mrf.mxu0
    %v3764 = vadd.f32 %v3699, %v3763
    %3765 = vmatmul.f32.gmra.mxu0 %v346
    %v3766 = vpop.f32.mrf.mxu0
    %v3767 = vadd.f32 %v3702, %v3766
    %3768 = vmatmul.f32.gmra.mxu0 %v370
    %v3769 = vpop.f32.mrf.mxu0
    %v3770 = vadd.f32 %v3705, %v3769
    %3771 = vmatmul.f32.gmra.mxu0 %v394
    %v3772 = vpop.f32.mrf.mxu0
    %v3773 = vadd.f32 %v3708, %v3772
    %3774 = vmatmul.f32.gmra.mxu0 %v418
    %v3775 = vpop.f32.mrf.mxu0
    %v3776 = vadd.f32 %v3711, %v3775
    %3777 = vmatmul.f32.gmra.mxu0 %v442
    %v3778 = vpop.f32.mrf.mxu0
    %v3779 = vadd.f32 %v3714, %v3778
    %3780 = vmatmul.f32.gmra.mxu0 %v466
    %v3781 = vpop.f32.mrf.mxu0
    %v3782 = vadd.f32 %v3717, %v3781
    %3783 = vmatmul.f32.gmra.mxu0 %v490
    %v3784 = vpop.f32.mrf.mxu0
    %v3785 = vadd.f32 %v3720, %v3784
    %3786 = vmatmul.f32.gmra.mxu0 %v514
    %v3787 = vpop.f32.mrf.mxu0
    %v3788 = vadd.f32 %v3723, %v3787
    %3789 = vmatmul.f32.gmra.mxu0 %v538
    %v3790 = vpop.f32.mrf.mxu0
    %v3791 = vadd.f32 %v3726, %v3790
    %3792 = vdwg.mxu0
    %3793 = vmatpush.msra.mxu0 %v1028
    %3794 = vmatpush.msra.mxu0 %v1026
    %3795 = vmatpush.msra.mxu0 %v1024
    %3796 = vmatpush.msra.mxu0 %v1022
    %3797 = vmatpush.msra.mxu0 %v1020
    %3798 = vmatpush.msra.mxu0 %v1018
    %3799 = vmatpush.msra.mxu0 %v1016
    %3800 = vmatpush.msra.mxu0 %v1014
    %3801 = vmatpush.msra.mxu0 %v1012
    %3802 = vmatpush.msra.mxu0 %v1010
    %3803 = vmatpush.msra.mxu0 %v1008
    %3804 = vmatpush.msra.mxu0 %v1006
    %3805 = vmatpush.msra.mxu0 %v1004
    %3806 = vmatpush.msra.mxu0 %v1002
    %3807 = vmatpush.msra.mxu0 %v1000
    %3808 = vmatpush.msra.mxu0 %v998
    %3809 = vmatmul.f32.gmra.mxu0 %v179
    %v3810 = vpop.f32.mrf.mxu0
    %v3811 = vadd.f32 %v3746, %v3810
    %3812 = vmatmul.f32.gmra.mxu0 %v203
    %v3813 = vpop.f32.mrf.mxu0
    %v3814 = vadd.f32 %v3749, %v3813
    %3815 = vmatmul.f32.gmra.mxu0 %v227
    %v3816 = vpop.f32.mrf.mxu0
    %v3817 = vadd.f32 %v3752, %v3816
    %3818 = vmatmul.f32.gmra.mxu0 %v251
    %v3819 = vpop.f32.mrf.mxu0
    %v3820 = vadd.f32 %v3755, %v3819
    %3821 = vmatmul.f32.gmra.mxu0 %v275
    %v3822 = vpop.f32.mrf.mxu0
    %v3823 = vadd.f32 %v3758, %v3822
    %3824 = vmatmul.f32.gmra.mxu0 %v299
    %v3825 = vpop.f32.mrf.mxu0
    %v3826 = vadd.f32 %v3761, %v3825
    %3827 = vmatmul.f32.gmra.mxu0 %v323
    %v3828 = vpop.f32.mrf.mxu0
    %v3829 = vadd.f32 %v3764, %v3828
    %3830 = vmatmul.f32.gmra.mxu0 %v347
    %v3831 = vpop.f32.mrf.mxu0
    %v3832 = vadd.f32 %v3767, %v3831
    %3833 = vmatmul.f32.gmra.mxu0 %v371
    %v3834 = vpop.f32.mrf.mxu0
    %v3835 = vadd.f32 %v3770, %v3834
    %3836 = vmatmul.f32.gmra.mxu0 %v395
    %v3837 = vpop.f32.mrf.mxu0
    %v3838 = vadd.f32 %v3773, %v3837
    %3839 = vmatmul.f32.gmra.mxu0 %v419
    %v3840 = vpop.f32.mrf.mxu0
    %v3841 = vadd.f32 %v3776, %v3840
    %3842 = vmatmul.f32.gmra.mxu0 %v443
    %v3843 = vpop.f32.mrf.mxu0
    %v3844 = vadd.f32 %v3779, %v3843
    %3845 = vmatmul.f32.gmra.mxu0 %v467
    %v3846 = vpop.f32.mrf.mxu0
    %v3847 = vadd.f32 %v3782, %v3846
    %3848 = vmatmul.f32.gmra.mxu0 %v491
    %v3849 = vpop.f32.mrf.mxu0
    %v3850 = vadd.f32 %v3785, %v3849
    %3851 = vmatmul.f32.gmra.mxu0 %v515
    %v3852 = vpop.f32.mrf.mxu0
    %v3853 = vadd.f32 %v3788, %v3852
    %3854 = vmatmul.f32.gmra.mxu0 %v539
    %v3855 = vpop.f32.mrf.mxu0
    %v3856 = vadd.f32 %v3791, %v3855
    %3857 = vdwg.mxu0
    %3858 = vmatpush.msra.mxu0 %v1060
    %3859 = vmatpush.msra.mxu0 %v1058
    %3860 = vmatpush.msra.mxu0 %v1056
    %3861 = vmatpush.msra.mxu0 %v1054
    %3862 = vmatpush.msra.mxu0 %v1052
    %3863 = vmatpush.msra.mxu0 %v1050
    %3864 = vmatpush.msra.mxu0 %v1048
    %3865 = vmatpush.msra.mxu0 %v1046
    %3866 = vmatpush.msra.mxu0 %v1044
    %3867 = vmatpush.msra.mxu0 %v1042
    %3868 = vmatpush.msra.mxu0 %v1040
    %3869 = vmatpush.msra.mxu0 %v1038
    %3870 = vmatpush.msra.mxu0 %v1036
    %3871 = vmatpush.msra.mxu0 %v1034
    %3872 = vmatpush.msra.mxu0 %v1032
    %3873 = vmatpush.msra.mxu0 %v1030
    %3874 = vmatmul.f32.gmra.mxu0 %v180
    %v3875 = vpop.f32.mrf.mxu0
    %v3876 = vadd.f32 %v3811, %v3875
    %3877 = vmatmul.f32.gmra.mxu0 %v204
    %v3878 = vpop.f32.mrf.mxu0
    %v3879 = vadd.f32 %v3814, %v3878
    %3880 = vmatmul.f32.gmra.mxu0 %v228
    %v3881 = vpop.f32.mrf.mxu0
    %v3882 = vadd.f32 %v3817, %v3881
    %3883 = vmatmul.f32.gmra.mxu0 %v252
    %v3884 = vpop.f32.mrf.mxu0
    %v3885 = vadd.f32 %v3820, %v3884
    %3886 = vmatmul.f32.gmra.mxu0 %v276
    %v3887 = vpop.f32.mrf.mxu0
    %v3888 = vadd.f32 %v3823, %v3887
    %3889 = vmatmul.f32.gmra.mxu0 %v300
    %v3890 = vpop.f32.mrf.mxu0
    %v3891 = vadd.f32 %v3826, %v3890
    %3892 = vmatmul.f32.gmra.mxu0 %v324
    %v3893 = vpop.f32.mrf.mxu0
    %v3894 = vadd.f32 %v3829, %v3893
    %3895 = vmatmul.f32.gmra.mxu0 %v348
    %v3896 = vpop.f32.mrf.mxu0
    %v3897 = vadd.f32 %v3832, %v3896
    %3898 = vmatmul.f32.gmra.mxu0 %v372
    %v3899 = vpop.f32.mrf.mxu0
    %v3900 = vadd.f32 %v3835, %v3899
    %3901 = vmatmul.f32.gmra.mxu0 %v396
    %v3902 = vpop.f32.mrf.mxu0
    %v3903 = vadd.f32 %v3838, %v3902
    %3904 = vmatmul.f32.gmra.mxu0 %v420
    %v3905 = vpop.f32.mrf.mxu0
    %v3906 = vadd.f32 %v3841, %v3905
    %3907 = vmatmul.f32.gmra.mxu0 %v444
    %v3908 = vpop.f32.mrf.mxu0
    %v3909 = vadd.f32 %v3844, %v3908
    %3910 = vmatmul.f32.gmra.mxu0 %v468
    %v3911 = vpop.f32.mrf.mxu0
    %v3912 = vadd.f32 %v3847, %v3911
    %3913 = vmatmul.f32.gmra.mxu0 %v492
    %v3914 = vpop.f32.mrf.mxu0
    %v3915 = vadd.f32 %v3850, %v3914
    %3916 = vmatmul.f32.gmra.mxu0 %v516
    %v3917 = vpop.f32.mrf.mxu0
    %v3918 = vadd.f32 %v3853, %v3917
    %3919 = vmatmul.f32.gmra.mxu0 %v540
    %v3920 = vpop.f32.mrf.mxu0
    %v3921 = vadd.f32 %v3856, %v3920
    %3922 = vdwg.mxu0
    %3923 = vmatpush.msra.mxu0 %v1092
    %3924 = vmatpush.msra.mxu0 %v1090
    %3925 = vmatpush.msra.mxu0 %v1088
    %3926 = vmatpush.msra.mxu0 %v1086
    %3927 = vmatpush.msra.mxu0 %v1084
    %3928 = vmatpush.msra.mxu0 %v1082
    %3929 = vmatpush.msra.mxu0 %v1080
    %3930 = vmatpush.msra.mxu0 %v1078
    %3931 = vmatpush.msra.mxu0 %v1076
    %3932 = vmatpush.msra.mxu0 %v1074
    %3933 = vmatpush.msra.mxu0 %v1072
    %3934 = vmatpush.msra.mxu0 %v1070
    %3935 = vmatpush.msra.mxu0 %v1068
    %3936 = vmatpush.msra.mxu0 %v1066
    %3937 = vmatpush.msra.mxu0 %v1064
    %3938 = vmatpush.msra.mxu0 %v1062
    %3939 = vmatmul.f32.gmra.mxu0 %v181
    %v3940 = vpop.f32.mrf.mxu0
    %v3941 = vadd.f32 %v3876, %v3940
    %3942 = vmatmul.f32.gmra.mxu0 %v205
    %v3943 = vpop.f32.mrf.mxu0
    %v3944 = vadd.f32 %v3879, %v3943
    %3945 = vmatmul.f32.gmra.mxu0 %v229
    %v3946 = vpop.f32.mrf.mxu0
    %v3947 = vadd.f32 %v3882, %v3946
    %3948 = vmatmul.f32.gmra.mxu0 %v253
    %v3949 = vpop.f32.mrf.mxu0
    %v3950 = vadd.f32 %v3885, %v3949
    %3951 = vmatmul.f32.gmra.mxu0 %v277
    %v3952 = vpop.f32.mrf.mxu0
    %v3953 = vadd.f32 %v3888, %v3952
    %3954 = vmatmul.f32.gmra.mxu0 %v301
    %v3955 = vpop.f32.mrf.mxu0
    %v3956 = vadd.f32 %v3891, %v3955
    %3957 = vmatmul.f32.gmra.mxu0 %v325
    %v3958 = vpop.f32.mrf.mxu0
    %v3959 = vadd.f32 %v3894, %v3958
    %3960 = vmatmul.f32.gmra.mxu0 %v349
    %v3961 = vpop.f32.mrf.mxu0
    %v3962 = vadd.f32 %v3897, %v3961
    %3963 = vmatmul.f32.gmra.mxu0 %v373
    %v3964 = vpop.f32.mrf.mxu0
    %v3965 = vadd.f32 %v3900, %v3964
    %3966 = vmatmul.f32.gmra.mxu0 %v397
    %v3967 = vpop.f32.mrf.mxu0
    %v3968 = vadd.f32 %v3903, %v3967
    %3969 = vmatmul.f32.gmra.mxu0 %v421
    %v3970 = vpop.f32.mrf.mxu0
    %v3971 = vadd.f32 %v3906, %v3970
    %3972 = vmatmul.f32.gmra.mxu0 %v445
    %v3973 = vpop.f32.mrf.mxu0
    %v3974 = vadd.f32 %v3909, %v3973
    %3975 = vmatmul.f32.gmra.mxu0 %v469
    %v3976 = vpop.f32.mrf.mxu0
    %v3977 = vadd.f32 %v3912, %v3976
    %3978 = vmatmul.f32.gmra.mxu0 %v493
    %v3979 = vpop.f32.mrf.mxu0
    %v3980 = vadd.f32 %v3915, %v3979
    %3981 = vmatmul.f32.gmra.mxu0 %v517
    %v3982 = vpop.f32.mrf.mxu0
    %v3983 = vadd.f32 %v3918, %v3982
    %3984 = vmatmul.f32.gmra.mxu0 %v541
    %v3985 = vpop.f32.mrf.mxu0
    %v3986 = vadd.f32 %v3921, %v3985
    %3987 = vdwg.mxu0
    %3988 = vmatpush.msra.mxu0 %v1124
    %3989 = vmatpush.msra.mxu0 %v1122
    %3990 = vmatpush.msra.mxu0 %v1120
    %3991 = vmatpush.msra.mxu0 %v1118
    %3992 = vmatpush.msra.mxu0 %v1116
    %3993 = vmatpush.msra.mxu0 %v1114
    %3994 = vmatpush.msra.mxu0 %v1112
    %3995 = vmatpush.msra.mxu0 %v1110
    %3996 = vmatpush.msra.mxu0 %v1108
    %3997 = vmatpush.msra.mxu0 %v1106
    %3998 = vmatpush.msra.mxu0 %v1104
    %3999 = vmatpush.msra.mxu0 %v1102
    %4000 = vmatpush.msra.mxu0 %v1100
    %4001 = vmatpush.msra.mxu0 %v1098
    %4002 = vmatpush.msra.mxu0 %v1096
    %4003 = vmatpush.msra.mxu0 %v1094
    %4004 = vmatmul.f32.gmra.mxu0 %v182
    %v4005 = vpop.f32.mrf.mxu0
    %v4006 = vadd.f32 %v3941, %v4005
    %4007 = vmatmul.f32.gmra.mxu0 %v206
    %v4008 = vpop.f32.mrf.mxu0
    %v4009 = vadd.f32 %v3944, %v4008
    %4010 = vmatmul.f32.gmra.mxu0 %v230
    %v4011 = vpop.f32.mrf.mxu0
    %v4012 = vadd.f32 %v3947, %v4011
    %4013 = vmatmul.f32.gmra.mxu0 %v254
    %v4014 = vpop.f32.mrf.mxu0
    %v4015 = vadd.f32 %v3950, %v4014
    %4016 = vmatmul.f32.gmra.mxu0 %v278
    %v4017 = vpop.f32.mrf.mxu0
    %v4018 = vadd.f32 %v3953, %v4017
    %4019 = vmatmul.f32.gmra.mxu0 %v302
    %v4020 = vpop.f32.mrf.mxu0
    %v4021 = vadd.f32 %v3956, %v4020
    %4022 = vmatmul.f32.gmra.mxu0 %v326
    %v4023 = vpop.f32.mrf.mxu0
    %v4024 = vadd.f32 %v3959, %v4023
    %4025 = vmatmul.f32.gmra.mxu0 %v350
    %v4026 = vpop.f32.mrf.mxu0
    %v4027 = vadd.f32 %v3962, %v4026
    %4028 = vmatmul.f32.gmra.mxu0 %v374
    %v4029 = vpop.f32.mrf.mxu0
    %v4030 = vadd.f32 %v3965, %v4029
    %4031 = vmatmul.f32.gmra.mxu0 %v398
    %v4032 = vpop.f32.mrf.mxu0
    %v4033 = vadd.f32 %v3968, %v4032
    %4034 = vmatmul.f32.gmra.mxu0 %v422
    %v4035 = vpop.f32.mrf.mxu0
    %v4036 = vadd.f32 %v3971, %v4035
    %4037 = vmatmul.f32.gmra.mxu0 %v446
    %v4038 = vpop.f32.mrf.mxu0
    %v4039 = vadd.f32 %v3974, %v4038
    %4040 = vmatmul.f32.gmra.mxu0 %v470
    %v4041 = vpop.f32.mrf.mxu0
    %v4042 = vadd.f32 %v3977, %v4041
    %4043 = vmatmul.f32.gmra.mxu0 %v494
    %v4044 = vpop.f32.mrf.mxu0
    %v4045 = vadd.f32 %v3980, %v4044
    %4046 = vmatmul.f32.gmra.mxu0 %v518
    %v4047 = vpop.f32.mrf.mxu0
    %v4048 = vadd.f32 %v3983, %v4047
    %4049 = vmatmul.f32.gmra.mxu0 %v542
    %v4050 = vpop.f32.mrf.mxu0
    %v4051 = vadd.f32 %v3986, %v4050
    %4052 = vdwg.mxu0
    %4053 = vmatpush.msra.mxu0 %v1156
    %4054 = vmatpush.msra.mxu0 %v1154
    %4055 = vmatpush.msra.mxu0 %v1152
    %4056 = vmatpush.msra.mxu0 %v1150
    %4057 = vmatpush.msra.mxu0 %v1148
    %4058 = vmatpush.msra.mxu0 %v1146
    %4059 = vmatpush.msra.mxu0 %v1144
    %4060 = vmatpush.msra.mxu0 %v1142
    %4061 = vmatpush.msra.mxu0 %v1140
    %4062 = vmatpush.msra.mxu0 %v1138
    %4063 = vmatpush.msra.mxu0 %v1136
    %4064 = vmatpush.msra.mxu0 %v1134
    %4065 = vmatpush.msra.mxu0 %v1132
    %4066 = vmatpush.msra.mxu0 %v1130
    %4067 = vmatpush.msra.mxu0 %v1128
    %4068 = vmatpush.msra.mxu0 %v1126
    %4069 = vmatmul.f32.gmra.mxu0 %v183
    %v4070 = vpop.f32.mrf.mxu0
    %v4071 = vadd.f32 %v4006, %v4070
    %4072 = vmatmul.f32.gmra.mxu0 %v207
    %v4073 = vpop.f32.mrf.mxu0
    %v4074 = vadd.f32 %v4009, %v4073
    %4075 = vmatmul.f32.gmra.mxu0 %v231
    %v4076 = vpop.f32.mrf.mxu0
    %v4077 = vadd.f32 %v4012, %v4076
    %4078 = vmatmul.f32.gmra.mxu0 %v255
    %v4079 = vpop.f32.mrf.mxu0
    %v4080 = vadd.f32 %v4015, %v4079
    %4081 = vmatmul.f32.gmra.mxu0 %v279
    %v4082 = vpop.f32.mrf.mxu0
    %v4083 = vadd.f32 %v4018, %v4082
    %4084 = vmatmul.f32.gmra.mxu0 %v303
    %v4085 = vpop.f32.mrf.mxu0
    %v4086 = vadd.f32 %v4021, %v4085
    %4087 = vmatmul.f32.gmra.mxu0 %v327
    %v4088 = vpop.f32.mrf.mxu0
    %v4089 = vadd.f32 %v4024, %v4088
    %4090 = vmatmul.f32.gmra.mxu0 %v351
    %v4091 = vpop.f32.mrf.mxu0
    %v4092 = vadd.f32 %v4027, %v4091
    %4093 = vmatmul.f32.gmra.mxu0 %v375
    %v4094 = vpop.f32.mrf.mxu0
    %v4095 = vadd.f32 %v4030, %v4094
    %4096 = vmatmul.f32.gmra.mxu0 %v399
    %v4097 = vpop.f32.mrf.mxu0
    %v4098 = vadd.f32 %v4033, %v4097
    %4099 = vmatmul.f32.gmra.mxu0 %v423
    %v4100 = vpop.f32.mrf.mxu0
    %v4101 = vadd.f32 %v4036, %v4100
    %4102 = vmatmul.f32.gmra.mxu0 %v447
    %v4103 = vpop.f32.mrf.mxu0
    %v4104 = vadd.f32 %v4039, %v4103
    %4105 = vmatmul.f32.gmra.mxu0 %v471
    %v4106 = vpop.f32.mrf.mxu0
    %v4107 = vadd.f32 %v4042, %v4106
    %4108 = vmatmul.f32.gmra.mxu0 %v495
    %v4109 = vpop.f32.mrf.mxu0
    %v4110 = vadd.f32 %v4045, %v4109
    %4111 = vmatmul.f32.gmra.mxu0 %v519
    %v4112 = vpop.f32.mrf.mxu0
    %v4113 = vadd.f32 %v4048, %v4112
    %4114 = vmatmul.f32.gmra.mxu0 %v543
    %v4115 = vpop.f32.mrf.mxu0
    %v4116 = vadd.f32 %v4051, %v4115
    %4117 = vdwg.mxu0
    %4118 = vmatpush.msra.mxu0 %v1188
    %4119 = vmatpush.msra.mxu0 %v1186
    %4120 = vmatpush.msra.mxu0 %v1184
    %4121 = vmatpush.msra.mxu0 %v1182
    %4122 = vmatpush.msra.mxu0 %v1180
    %4123 = vmatpush.msra.mxu0 %v1178
    %4124 = vmatpush.msra.mxu0 %v1176
    %4125 = vmatpush.msra.mxu0 %v1174
    %4126 = vmatpush.msra.mxu0 %v1172
    %4127 = vmatpush.msra.mxu0 %v1170
    %4128 = vmatpush.msra.mxu0 %v1168
    %4129 = vmatpush.msra.mxu0 %v1166
    %4130 = vmatpush.msra.mxu0 %v1164
    %4131 = vmatpush.msra.mxu0 %v1162
    %4132 = vmatpush.msra.mxu0 %v1160
    %4133 = vmatpush.msra.mxu0 %v1158
    %4134 = vmatmul.f32.gmra.mxu0 %v184
    %v4135 = vpop.f32.mrf.mxu0
    %v4136 = vadd.f32 %v4071, %v4135
    %4137 = vmatmul.f32.gmra.mxu0 %v208
    %v4138 = vpop.f32.mrf.mxu0
    %v4139 = vadd.f32 %v4074, %v4138
    %4140 = vmatmul.f32.gmra.mxu0 %v232
    %v4141 = vpop.f32.mrf.mxu0
    %v4142 = vadd.f32 %v4077, %v4141
    %4143 = vmatmul.f32.gmra.mxu0 %v256
    %v4144 = vpop.f32.mrf.mxu0
    %v4145 = vadd.f32 %v4080, %v4144
    %4146 = vmatmul.f32.gmra.mxu0 %v280
    %v4147 = vpop.f32.mrf.mxu0
    %v4148 = vadd.f32 %v4083, %v4147
    %4149 = vmatmul.f32.gmra.mxu0 %v304
    %v4150 = vpop.f32.mrf.mxu0
    %v4151 = vadd.f32 %v4086, %v4150
    %4152 = vmatmul.f32.gmra.mxu0 %v328
    %v4153 = vpop.f32.mrf.mxu0
    %v4154 = vadd.f32 %v4089, %v4153
    %4155 = vmatmul.f32.gmra.mxu0 %v352
    %v4156 = vpop.f32.mrf.mxu0
    %v4157 = vadd.f32 %v4092, %v4156
    %4158 = vmatmul.f32.gmra.mxu0 %v376
    %v4159 = vpop.f32.mrf.mxu0
    %v4160 = vadd.f32 %v4095, %v4159
    %4161 = vmatmul.f32.gmra.mxu0 %v400
    %v4162 = vpop.f32.mrf.mxu0
    %v4163 = vadd.f32 %v4098, %v4162
    %4164 = vmatmul.f32.gmra.mxu0 %v424
    %v4165 = vpop.f32.mrf.mxu0
    %v4166 = vadd.f32 %v4101, %v4165
    %4167 = vmatmul.f32.gmra.mxu0 %v448
    %v4168 = vpop.f32.mrf.mxu0
    %v4169 = vadd.f32 %v4104, %v4168
    %4170 = vmatmul.f32.gmra.mxu0 %v472
    %v4171 = vpop.f32.mrf.mxu0
    %v4172 = vadd.f32 %v4107, %v4171
    %4173 = vmatmul.f32.gmra.mxu0 %v496
    %v4174 = vpop.f32.mrf.mxu0
    %v4175 = vadd.f32 %v4110, %v4174
    %4176 = vmatmul.f32.gmra.mxu0 %v520
    %v4177 = vpop.f32.mrf.mxu0
    %v4178 = vadd.f32 %v4113, %v4177
    %4179 = vmatmul.f32.gmra.mxu0 %v544
    %v4180 = vpop.f32.mrf.mxu0
    %v4181 = vadd.f32 %v4116, %v4180
    %4182 = vdwg.mxu0
    %4183 = vmatpush.msra.mxu0 %v1220
    %4184 = vmatpush.msra.mxu0 %v1218
    %4185 = vmatpush.msra.mxu0 %v1216
    %4186 = vmatpush.msra.mxu0 %v1214
    %4187 = vmatpush.msra.mxu0 %v1212
    %4188 = vmatpush.msra.mxu0 %v1210
    %4189 = vmatpush.msra.mxu0 %v1208
    %4190 = vmatpush.msra.mxu0 %v1206
    %4191 = vmatpush.msra.mxu0 %v1204
    %4192 = vmatpush.msra.mxu0 %v1202
    %4193 = vmatpush.msra.mxu0 %v1200
    %4194 = vmatpush.msra.mxu0 %v1198
    %4195 = vmatpush.msra.mxu0 %v1196
    %4196 = vmatpush.msra.mxu0 %v1194
    %4197 = vmatpush.msra.mxu0 %v1192
    %4198 = vmatpush.msra.mxu0 %v1190
    %4199 = vmatmul.f32.gmra.mxu0 %v185
    %v4200 = vpop.f32.mrf.mxu0
    %v4201 = vadd.f32 %v4136, %v4200
    %4202 = vmatmul.f32.gmra.mxu0 %v209
    %v4203 = vpop.f32.mrf.mxu0
    %v4204 = vadd.f32 %v4139, %v4203
    %4205 = vmatmul.f32.gmra.mxu0 %v233
    %v4206 = vpop.f32.mrf.mxu0
    %v4207 = vadd.f32 %v4142, %v4206
    %4208 = vmatmul.f32.gmra.mxu0 %v257
    %v4209 = vpop.f32.mrf.mxu0
    %v4210 = vadd.f32 %v4145, %v4209
    %4211 = vmatmul.f32.gmra.mxu0 %v281
    %v4212 = vpop.f32.mrf.mxu0
    %v4213 = vadd.f32 %v4148, %v4212
    %4214 = vmatmul.f32.gmra.mxu0 %v305
    %v4215 = vpop.f32.mrf.mxu0
    %v4216 = vadd.f32 %v4151, %v4215
    %4217 = vmatmul.f32.gmra.mxu0 %v329
    %v4218 = vpop.f32.mrf.mxu0
    %v4219 = vadd.f32 %v4154, %v4218
    %4220 = vmatmul.f32.gmra.mxu0 %v353
    %v4221 = vpop.f32.mrf.mxu0
    %v4222 = vadd.f32 %v4157, %v4221
    %4223 = vmatmul.f32.gmra.mxu0 %v377
    %v4224 = vpop.f32.mrf.mxu0
    %v4225 = vadd.f32 %v4160, %v4224
    %4226 = vmatmul.f32.gmra.mxu0 %v401
    %v4227 = vpop.f32.mrf.mxu0
    %v4228 = vadd.f32 %v4163, %v4227
    %4229 = vmatmul.f32.gmra.mxu0 %v425
    %v4230 = vpop.f32.mrf.mxu0
    %v4231 = vadd.f32 %v4166, %v4230
    %4232 = vmatmul.f32.gmra.mxu0 %v449
    %v4233 = vpop.f32.mrf.mxu0
    %v4234 = vadd.f32 %v4169, %v4233
    %4235 = vmatmul.f32.gmra.mxu0 %v473
    %v4236 = vpop.f32.mrf.mxu0
    %v4237 = vadd.f32 %v4172, %v4236
    %4238 = vmatmul.f32.gmra.mxu0 %v497
    %v4239 = vpop.f32.mrf.mxu0
    %v4240 = vadd.f32 %v4175, %v4239
    %4241 = vmatmul.f32.gmra.mxu0 %v521
    %v4242 = vpop.f32.mrf.mxu0
    %v4243 = vadd.f32 %v4178, %v4242
    %4244 = vmatmul.f32.gmra.mxu0 %v545
    %v4245 = vpop.f32.mrf.mxu0
    %v4246 = vadd.f32 %v4181, %v4245
    %4247 = vdwg.mxu0
    %4248 = vmatpush.msra.mxu0 %v1252
    %4249 = vmatpush.msra.mxu0 %v1250
    %4250 = vmatpush.msra.mxu0 %v1248
    %4251 = vmatpush.msra.mxu0 %v1246
    %4252 = vmatpush.msra.mxu0 %v1244
    %4253 = vmatpush.msra.mxu0 %v1242
    %4254 = vmatpush.msra.mxu0 %v1240
    %4255 = vmatpush.msra.mxu0 %v1238
    %4256 = vmatpush.msra.mxu0 %v1236
    %4257 = vmatpush.msra.mxu0 %v1234
    %4258 = vmatpush.msra.mxu0 %v1232
    %4259 = vmatpush.msra.mxu0 %v1230
    %4260 = vmatpush.msra.mxu0 %v1228
    %4261 = vmatpush.msra.mxu0 %v1226
    %4262 = vmatpush.msra.mxu0 %v1224
    %4263 = vmatpush.msra.mxu0 %v1222
    %4264 = vmatmul.f32.gmra.mxu0 %v186
    %v4265 = vpop.f32.mrf.mxu0
    %v4266 = vadd.f32 %v4201, %v4265
    %4267 = vmatmul.f32.gmra.mxu0 %v210
    %v4268 = vpop.f32.mrf.mxu0
    %v4269 = vadd.f32 %v4204, %v4268
    %4270 = vmatmul.f32.gmra.mxu0 %v234
    %v4271 = vpop.f32.mrf.mxu0
    %v4272 = vadd.f32 %v4207, %v4271
    %4273 = vmatmul.f32.gmra.mxu0 %v258
    %v4274 = vpop.f32.mrf.mxu0
    %v4275 = vadd.f32 %v4210, %v4274
    %4276 = vmatmul.f32.gmra.mxu0 %v282
    %v4277 = vpop.f32.mrf.mxu0
    %v4278 = vadd.f32 %v4213, %v4277
    %4279 = vmatmul.f32.gmra.mxu0 %v306
    %v4280 = vpop.f32.mrf.mxu0
    %v4281 = vadd.f32 %v4216, %v4280
    %4282 = vmatmul.f32.gmra.mxu0 %v330
    %v4283 = vpop.f32.mrf.mxu0
    %v4284 = vadd.f32 %v4219, %v4283
    %4285 = vmatmul.f32.gmra.mxu0 %v354
    %v4286 = vpop.f32.mrf.mxu0
    %v4287 = vadd.f32 %v4222, %v4286
    %4288 = vmatmul.f32.gmra.mxu0 %v378
    %v4289 = vpop.f32.mrf.mxu0
    %v4290 = vadd.f32 %v4225, %v4289
    %4291 = vmatmul.f32.gmra.mxu0 %v402
    %v4292 = vpop.f32.mrf.mxu0
    %v4293 = vadd.f32 %v4228, %v4292
    %4294 = vmatmul.f32.gmra.mxu0 %v426
    %v4295 = vpop.f32.mrf.mxu0
    %v4296 = vadd.f32 %v4231, %v4295
    %4297 = vmatmul.f32.gmra.mxu0 %v450
    %v4298 = vpop.f32.mrf.mxu0
    %v4299 = vadd.f32 %v4234, %v4298
    %4300 = vmatmul.f32.gmra.mxu0 %v474
    %v4301 = vpop.f32.mrf.mxu0
    %v4302 = vadd.f32 %v4237, %v4301
    %4303 = vmatmul.f32.gmra.mxu0 %v498
    %v4304 = vpop.f32.mrf.mxu0
    %v4305 = vadd.f32 %v4240, %v4304
    %4306 = vmatmul.f32.gmra.mxu0 %v522
    %v4307 = vpop.f32.mrf.mxu0
    %v4308 = vadd.f32 %v4243, %v4307
    %4309 = vmatmul.f32.gmra.mxu0 %v546
    %v4310 = vpop.f32.mrf.mxu0
    %v4311 = vadd.f32 %v4246, %v4310
    %4312 = vdwg.mxu0
    %4313 = vmatpush.msra.mxu0 %v1284
    %4314 = vmatpush.msra.mxu0 %v1282
    %4315 = vmatpush.msra.mxu0 %v1280
    %4316 = vmatpush.msra.mxu0 %v1278
    %4317 = vmatpush.msra.mxu0 %v1276
    %4318 = vmatpush.msra.mxu0 %v1274
    %4319 = vmatpush.msra.mxu0 %v1272
    %4320 = vmatpush.msra.mxu0 %v1270
    %4321 = vmatpush.msra.mxu0 %v1268
    %4322 = vmatpush.msra.mxu0 %v1266
    %4323 = vmatpush.msra.mxu0 %v1264
    %4324 = vmatpush.msra.mxu0 %v1262
    %4325 = vmatpush.msra.mxu0 %v1260
    %4326 = vmatpush.msra.mxu0 %v1258
    %4327 = vmatpush.msra.mxu0 %v1256
    %4328 = vmatpush.msra.mxu0 %v1254
    %4329 = vmatmul.f32.gmra.mxu0 %v187
    %v4330 = vpop.f32.mrf.mxu0
    %v4331 = vadd.f32 %v4266, %v4330
    %4332 = vmatmul.f32.gmra.mxu0 %v211
    %v4333 = vpop.f32.mrf.mxu0
    %v4334 = vadd.f32 %v4269, %v4333
    %4335 = vmatmul.f32.gmra.mxu0 %v235
    %v4336 = vpop.f32.mrf.mxu0
    %v4337 = vadd.f32 %v4272, %v4336
    %4338 = vmatmul.f32.gmra.mxu0 %v259
    %v4339 = vpop.f32.mrf.mxu0
    %v4340 = vadd.f32 %v4275, %v4339
    %4341 = vmatmul.f32.gmra.mxu0 %v283
    %v4342 = vpop.f32.mrf.mxu0
    %v4343 = vadd.f32 %v4278, %v4342
    %4344 = vmatmul.f32.gmra.mxu0 %v307
    %v4345 = vpop.f32.mrf.mxu0
    %v4346 = vadd.f32 %v4281, %v4345
    %4347 = vmatmul.f32.gmra.mxu0 %v331
    %v4348 = vpop.f32.mrf.mxu0
    %v4349 = vadd.f32 %v4284, %v4348
    %4350 = vmatmul.f32.gmra.mxu0 %v355
    %v4351 = vpop.f32.mrf.mxu0
    %v4352 = vadd.f32 %v4287, %v4351
    %4353 = vmatmul.f32.gmra.mxu0 %v379
    %v4354 = vpop.f32.mrf.mxu0
    %v4355 = vadd.f32 %v4290, %v4354
    %4356 = vmatmul.f32.gmra.mxu0 %v403
    %v4357 = vpop.f32.mrf.mxu0
    %v4358 = vadd.f32 %v4293, %v4357
    %4359 = vmatmul.f32.gmra.mxu0 %v427
    %v4360 = vpop.f32.mrf.mxu0
    %v4361 = vadd.f32 %v4296, %v4360
    %4362 = vmatmul.f32.gmra.mxu0 %v451
    %v4363 = vpop.f32.mrf.mxu0
    %v4364 = vadd.f32 %v4299, %v4363
    %4365 = vmatmul.f32.gmra.mxu0 %v475
    %v4366 = vpop.f32.mrf.mxu0
    %v4367 = vadd.f32 %v4302, %v4366
    %4368 = vmatmul.f32.gmra.mxu0 %v499
    %v4369 = vpop.f32.mrf.mxu0
    %v4370 = vadd.f32 %v4305, %v4369
    %4371 = vmatmul.f32.gmra.mxu0 %v523
    %v4372 = vpop.f32.mrf.mxu0
    %v4373 = vadd.f32 %v4308, %v4372
    %4374 = vmatmul.f32.gmra.mxu0 %v547
    %v4375 = vpop.f32.mrf.mxu0
    %v4376 = vadd.f32 %v4311, %v4375
    %4377 = vdwg.mxu0
    %4378 = vmatpush.msra.mxu0 %v1316
    %4379 = vmatpush.msra.mxu0 %v1314
    %4380 = vmatpush.msra.mxu0 %v1312
    %4381 = vmatpush.msra.mxu0 %v1310
    %4382 = vmatpush.msra.mxu0 %v1308
    %4383 = vmatpush.msra.mxu0 %v1306
    %4384 = vmatpush.msra.mxu0 %v1304
    %4385 = vmatpush.msra.mxu0 %v1302
    %4386 = vmatpush.msra.mxu0 %v1300
    %4387 = vmatpush.msra.mxu0 %v1298
    %4388 = vmatpush.msra.mxu0 %v1296
    %4389 = vmatpush.msra.mxu0 %v1294
    %4390 = vmatpush.msra.mxu0 %v1292
    %4391 = vmatpush.msra.mxu0 %v1290
    %4392 = vmatpush.msra.mxu0 %v1288
    %4393 = vmatpush.msra.mxu0 %v1286
    %4394 = vmatmul.f32.gmra.mxu0 %v188
    %v4395 = vpop.f32.mrf.mxu0
    %v4396 = vadd.f32 %v4331, %v4395
    %4397 = vmatmul.f32.gmra.mxu0 %v212
    %v4398 = vpop.f32.mrf.mxu0
    %v4399 = vadd.f32 %v4334, %v4398
    %4400 = vmatmul.f32.gmra.mxu0 %v236
    %v4401 = vpop.f32.mrf.mxu0
    %v4402 = vadd.f32 %v4337, %v4401
    %4403 = vmatmul.f32.gmra.mxu0 %v260
    %v4404 = vpop.f32.mrf.mxu0
    %v4405 = vadd.f32 %v4340, %v4404
    %4406 = vmatmul.f32.gmra.mxu0 %v284
    %v4407 = vpop.f32.mrf.mxu0
    %v4408 = vadd.f32 %v4343, %v4407
    %4409 = vmatmul.f32.gmra.mxu0 %v308
    %v4410 = vpop.f32.mrf.mxu0
    %v4411 = vadd.f32 %v4346, %v4410
    %4412 = vmatmul.f32.gmra.mxu0 %v332
    %v4413 = vpop.f32.mrf.mxu0
    %v4414 = vadd.f32 %v4349, %v4413
    %4415 = vmatmul.f32.gmra.mxu0 %v356
    %v4416 = vpop.f32.mrf.mxu0
    %v4417 = vadd.f32 %v4352, %v4416
    %4418 = vmatmul.f32.gmra.mxu0 %v380
    %v4419 = vpop.f32.mrf.mxu0
    %v4420 = vadd.f32 %v4355, %v4419
    %4421 = vmatmul.f32.gmra.mxu0 %v404
    %v4422 = vpop.f32.mrf.mxu0
    %v4423 = vadd.f32 %v4358, %v4422
    %4424 = vmatmul.f32.gmra.mxu0 %v428
    %v4425 = vpop.f32.mrf.mxu0
    %v4426 = vadd.f32 %v4361, %v4425
    %4427 = vmatmul.f32.gmra.mxu0 %v452
    %v4428 = vpop.f32.mrf.mxu0
    %v4429 = vadd.f32 %v4364, %v4428
    %4430 = vmatmul.f32.gmra.mxu0 %v476
    %v4431 = vpop.f32.mrf.mxu0
    %v4432 = vadd.f32 %v4367, %v4431
    %4433 = vmatmul.f32.gmra.mxu0 %v500
    %v4434 = vpop.f32.mrf.mxu0
    %v4435 = vadd.f32 %v4370, %v4434
    %4436 = vmatmul.f32.gmra.mxu0 %v524
    %v4437 = vpop.f32.mrf.mxu0
    %v4438 = vadd.f32 %v4373, %v4437
    %4439 = vmatmul.f32.gmra.mxu0 %v548
    %v4440 = vpop.f32.mrf.mxu0
    %v4441 = vadd.f32 %v4376, %v4440
    %4442 = vdwg.mxu0
    %v4443 = vmax.f32 %v2836, 0.0
    %v4444 = vmax.f32 %v4396, 0.0
    %v4445 = vmax.f32 %v2839, 0.0
    %v4446 = vmax.f32 %v4399, 0.0
    %v4447 = vmax.f32 %v2842, 0.0
    %v4448 = vmax.f32 %v4402, 0.0
    %v4449 = vmax.f32 %v2845, 0.0
    %v4450 = vmax.f32 %v4405, 0.0
    %v4451 = vmax.f32 %v2848, 0.0
    %v4452 = vmax.f32 %v4408, 0.0
    %v4453 = vmax.f32 %v2851, 0.0
    %v4454 = vmax.f32 %v4411, 0.0
    %v4455 = vmax.f32 %v2854, 0.0
    %v4456 = vmax.f32 %v4414, 0.0
    %v4457 = vmax.f32 %v2857, 0.0
    %v4458 = vmax.f32 %v4417, 0.0
    %v4459 = vmax.f32 %v2860, 0.0
    %v4460 = vmax.f32 %v4420, 0.0
    %v4461 = vmax.f32 %v2863, 0.0
    %v4462 = vmax.f32 %v4423, 0.0
    %v4463 = vmax.f32 %v2866, 0.0
    %v4464 = vmax.f32 %v4426, 0.0
    %v4465 = vmax.f32 %v2869, 0.0
    %v4466 = vmax.f32 %v4429, 0.0
    %v4467 = vmax.f32 %v2872, 0.0
    %v4468 = vmax.f32 %v4432, 0.0
    %v4469 = vmax.f32 %v2875, 0.0
    %v4470 = vmax.f32 %v4435, 0.0
    %v4471 = vmax.f32 %v2878, 0.0
    %v4472 = vmax.f32 %v4438, 0.0
    %v4473 = vmax.f32 %v2881, 0.0
    %v4474 = vmax.f32 %v4441, 0.0
    %v4475 = vld [vmem:[#allocation8] sm:$0xff]
    %v4476 = vld [vmem:[#allocation8 + $0x8] sm:$0xff]
    %v4477 = vld [vmem:[#allocation8 + $0x10] sm:$0xff]
    %v4478 = vld [vmem:[#allocation8 + $0x18] sm:$0xff]
    %v4479 = vld [vmem:[#allocation8 + $0x20] sm:$0xff]
    %v4480 = vld [vmem:[#allocation8 + $0x28] sm:$0xff]
    %v4481 = vld [vmem:[#allocation8 + $0x30] sm:$0xff]
    %v4482 = vld [vmem:[#allocation8 + $0x38] sm:$0xff]
    %v4483 = vld [vmem:[#allocation8 + $0x40] sm:$0xff]
    %v4484 = vld [vmem:[#allocation8 + $0x48] sm:$0xff]
    %v4485 = vld [vmem:[#allocation8 + $0x50] sm:$0xff]
    %v4486 = vld [vmem:[#allocation8 + $0x58] sm:$0xff]
    %v4487 = vld [vmem:[#allocation8 + $0x60] sm:$0xff]
    %v4488 = vld [vmem:[#allocation8 + $0x68] sm:$0xff]
    %v4489 = vld [vmem:[#allocation8 + $0x70] sm:$0xff]
    %v4490 = vld [vmem:[#allocation8 + $0x78] sm:$0xff]
    %v4491 = vld [vmem:[#allocation8 + $0x80] sm:$0xff]
    %v4492 = vld [vmem:[#allocation8 + $0x88] sm:$0xff]
    %v4493 = vld [vmem:[#allocation8 + $0x90] sm:$0xff]
    %v4494 = vld [vmem:[#allocation8 + $0x98] sm:$0xff]
    %v4495 = vld [vmem:[#allocation8 + $0xa0] sm:$0xff]
    %v4496 = vld [vmem:[#allocation8 + $0xa8] sm:$0xff]
    %v4497 = vld [vmem:[#allocation8 + $0xb0] sm:$0xff]
    %v4498 = vld [vmem:[#allocation8 + $0xb8] sm:$0xff]
    %v4499 = vld [vmem:[#allocation8 + $0xc0] sm:$0xff]
    %v4500 = vld [vmem:[#allocation8 + $0xc8] sm:$0xff]
    %v4501 = vld [vmem:[#allocation8 + $0xd0] sm:$0xff]
    %v4502 = vld [vmem:[#allocation8 + $0xd8] sm:$0xff]
    %v4503 = vld [vmem:[#allocation8 + $0xe0] sm:$0xff]
    %v4504 = vld [vmem:[#allocation8 + $0xe8] sm:$0xff]
    %v4505 = vld [vmem:[#allocation8 + $0xf0] sm:$0xff]
    %v4506 = vld [vmem:[#allocation8 + $0xf8] sm:$0xff]
    %v4507 = vld [vmem:[#allocation10] sm:$0x1]
    %v4509 = vperm.slane %v4507, 0
    %4511 = vmatpush.msra.mxu0 %v4490
    %4512 = vmatpush.msra.mxu0 %v4489
    %4513 = vmatpush.msra.mxu0 %v4488
    %4514 = vmatpush.msra.mxu0 %v4487
    %4515 = vmatpush.msra.mxu0 %v4486
    %4516 = vmatpush.msra.mxu0 %v4485
    %4517 = vmatpush.msra.mxu0 %v4484
    %4518 = vmatpush.msra.mxu0 %v4483
    %4519 = vmatpush.msra.mxu0 %v4482
    %4520 = vmatpush.msra.mxu0 %v4481
    %4521 = vmatpush.msra.mxu0 %v4480
    %4522 = vmatpush.msra.mxu0 %v4479
    %4523 = vmatpush.msra.mxu0 %v4478
    %4524 = vmatpush.msra.mxu0 %v4477
    %4525 = vmatpush.msra.mxu0 %v4476
    %4526 = vmatpush.msra.mxu0 %v4475
    %4527 = vmatmul.f32.gmra.mxu0 %v4443
    %v4528 = vpop.f32.mrf.mxu0
    %v4529 = vadd.f32 %v4509, %v4528
    %4530 = vmatmul.f32.gmra.mxu0 %v4445
    %v4531 = vpop.f32.mrf.mxu0
    %v4532 = vadd.f32 %v4509, %v4531
    %4533 = vmatmul.f32.gmra.mxu0 %v4447
    %v4534 = vpop.f32.mrf.mxu0
    %v4535 = vadd.f32 %v4509, %v4534
    %4536 = vmatmul.f32.gmra.mxu0 %v4449
    %v4537 = vpop.f32.mrf.mxu0
    %v4538 = vadd.f32 %v4509, %v4537
    %4539 = vmatmul.f32.gmra.mxu0 %v4451
    %v4540 = vpop.f32.mrf.mxu0
    %v4541 = vadd.f32 %v4509, %v4540
    %4542 = vmatmul.f32.gmra.mxu0 %v4453
    %v4543 = vpop.f32.mrf.mxu0
    %v4544 = vadd.f32 %v4509, %v4543
    %4545 = vmatmul.f32.gmra.mxu0 %v4455
    %v4546 = vpop.f32.mrf.mxu0
    %v4547 = vadd.f32 %v4509, %v4546
    %4548 = vmatmul.f32.gmra.mxu0 %v4457
    %v4549 = vpop.f32.mrf.mxu0
    %v4550 = vadd.f32 %v4509, %v4549
    %4551 = vmatmul.f32.gmra.mxu0 %v4459
    %v4552 = vpop.f32.mrf.mxu0
    %v4553 = vadd.f32 %v4509, %v4552
    %4554 = vmatmul.f32.gmra.mxu0 %v4461
    %v4555 = vpop.f32.mrf.mxu0
    %v4556 = vadd.f32 %v4509, %v4555
    %4557 = vmatmul.f32.gmra.mxu0 %v4463
    %v4558 = vpop.f32.mrf.mxu0
    %v4559 = vadd.f32 %v4509, %v4558
    %4560 = vmatmul.f32.gmra.mxu0 %v4465
    %v4561 = vpop.f32.mrf.mxu0
    %v4562 = vadd.f32 %v4509, %v4561
    %4563 = vmatmul.f32.gmra.mxu0 %v4467
    %v4564 = vpop.f32.mrf.mxu0
    %v4565 = vadd.f32 %v4509, %v4564
    %4566 = vmatmul.f32.gmra.mxu0 %v4469
    %v4567 = vpop.f32.mrf.mxu0
    %v4568 = vadd.f32 %v4509, %v4567
    %4569 = vmatmul.f32.gmra.mxu0 %v4471
    %v4570 = vpop.f32.mrf.mxu0
    %v4571 = vadd.f32 %v4509, %v4570
    %4572 = vmatmul.f32.gmra.mxu0 %v4473
    %v4573 = vpop.f32.mrf.mxu0
    %v4574 = vadd.f32 %v4509, %v4573
    %4575 = vdwg.mxu0
    %4576 = vmatpush.msra.mxu0 %v4506
    %4577 = vmatpush.msra.mxu0 %v4505
    %4578 = vmatpush.msra.mxu0 %v4504
    %4579 = vmatpush.msra.mxu0 %v4503
    %4580 = vmatpush.msra.mxu0 %v4502
    %4581 = vmatpush.msra.mxu0 %v4501
    %4582 = vmatpush.msra.mxu0 %v4500
    %4583 = vmatpush.msra.mxu0 %v4499
    %4584 = vmatpush.msra.mxu0 %v4498
    %4585 = vmatpush.msra.mxu0 %v4497
    %4586 = vmatpush.msra.mxu0 %v4496
    %4587 = vmatpush.msra.mxu0 %v4495
    %4588 = vmatpush.msra.mxu0 %v4494
    %4589 = vmatpush.msra.mxu0 %v4493
    %4590 = vmatpush.msra.mxu0 %v4492
    %4591 = vmatpush.msra.mxu0 %v4491
    %4592 = vmatmul.f32.gmra.mxu0 %v4444
    %v4593 = vpop.f32.mrf.mxu0
    %v4594 = vadd.f32 %v4529, %v4593
    %4595 = vmatmul.f32.gmra.mxu0 %v4446
    %v4596 = vpop.f32.mrf.mxu0
    %v4597 = vadd.f32 %v4532, %v4596
    %4598 = vmatmul.f32.gmra.mxu0 %v4448
    %v4599 = vpop.f32.mrf.mxu0
    %v4600 = vadd.f32 %v4535, %v4599
    %4601 = vmatmul.f32.gmra.mxu0 %v4450
    %v4602 = vpop.f32.mrf.mxu0
    %v4603 = vadd.f32 %v4538, %v4602
    %4604 = vmatmul.f32.gmra.mxu0 %v4452
    %v4605 = vpop.f32.mrf.mxu0
    %v4606 = vadd.f32 %v4541, %v4605
    %4607 = vmatmul.f32.gmra.mxu0 %v4454
    %v4608 = vpop.f32.mrf.mxu0
    %v4609 = vadd.f32 %v4544, %v4608
    %4610 = vmatmul.f32.gmra.mxu0 %v4456
    %v4611 = vpop.f32.mrf.mxu0
    %v4612 = vadd.f32 %v4547, %v4611
    %4613 = vmatmul.f32.gmra.mxu0 %v4458
    %v4614 = vpop.f32.mrf.mxu0
    %v4615 = vadd.f32 %v4550, %v4614
    %4616 = vmatmul.f32.gmra.mxu0 %v4460
    %v4617 = vpop.f32.mrf.mxu0
    %v4618 = vadd.f32 %v4553, %v4617
    %4619 = vmatmul.f32.gmra.mxu0 %v4462
    %v4620 = vpop.f32.mrf.mxu0
    %v4621 = vadd.f32 %v4556, %v4620
    %4622 = vmatmul.f32.gmra.mxu0 %v4464
    %v4623 = vpop.f32.mrf.mxu0
    %v4624 = vadd.f32 %v4559, %v4623
    %4625 = vmatmul.f32.gmra.mxu0 %v4466
    %v4626 = vpop.f32.mrf.mxu0
    %v4627 = vadd.f32 %v4562, %v4626
    %4628 = vmatmul.f32.gmra.mxu0 %v4468
    %v4629 = vpop.f32.mrf.mxu0
    %v4630 = vadd.f32 %v4565, %v4629
    %4631 = vmatmul.f32.gmra.mxu0 %v4470
    %v4632 = vpop.f32.mrf.mxu0
    %v4633 = vadd.f32 %v4568, %v4632
    %4634 = vmatmul.f32.gmra.mxu0 %v4472
    %v4635 = vpop.f32.mrf.mxu0
    %v4636 = vadd.f32 %v4571, %v4635
    %4637 = vmatmul.f32.gmra.mxu0 %v4474
    %v4638 = vpop.f32.mrf.mxu0
    %v4639 = vadd.f32 %v4574, %v4638
    %4640 = vdwg.mxu0
    %v4641 = vmax.f32 %v4594, 0.0
    %v4642 = vmax.f32 %v4597, 0.0
    %v4643 = vmax.f32 %v4600, 0.0
    %v4644 = vmax.f32 %v4603, 0.0
    %v4645 = vmax.f32 %v4606, 0.0
    %v4646 = vmax.f32 %v4609, 0.0
    %v4647 = vmax.f32 %v4612, 0.0
    %v4648 = vmax.f32 %v4615, 0.0
    %v4649 = vmax.f32 %v4618, 0.0
    %v4650 = vmax.f32 %v4621, 0.0
    %v4651 = vmax.f32 %v4624, 0.0
    %v4652 = vmax.f32 %v4627, 0.0
    %v4653 = vmax.f32 %v4630, 0.0
    %v4654 = vmax.f32 %v4633, 0.0
    %v4655 = vmax.f32 %v4636, 0.0
    %v4656 = vmax.f32 %v4639, 0.0
    %v4657 = vld [vmem:[#allocation11] sm:$0xff]
    %v4658 = vld [vmem:[#allocation11 + $0x8] sm:$0xff]
    %v4659 = vld [vmem:[#allocation11 + $0x10] sm:$0xff]
    %v4660 = vld [vmem:[#allocation11 + $0x18] sm:$0xff]
    %v4661 = vld [vmem:[#allocation11 + $0x20] sm:$0xff]
    %v4662 = vld [vmem:[#allocation11 + $0x28] sm:$0xff]
    %v4663 = vld [vmem:[#allocation11 + $0x30] sm:$0xff]
    %v4664 = vld [vmem:[#allocation11 + $0x38] sm:$0xff]
    %v4665 = vld [vmem:[#allocation11 + $0x40] sm:$0xff]
    %v4666 = vld [vmem:[#allocation11 + $0x48] sm:$0xff]
    %v4667 = vld [vmem:[#allocation11 + $0x50] sm:$0xff]
    %v4668 = vld [vmem:[#allocation11 + $0x58] sm:$0xff]
    %v4669 = vld [vmem:[#allocation11 + $0x60] sm:$0xff]
    %v4670 = vld [vmem:[#allocation11 + $0x68] sm:$0xff]
    %v4671 = vld [vmem:[#allocation11 + $0x70] sm:$0xff]
    %v4672 = vld [vmem:[#allocation11 + $0x78] sm:$0xff]
    %v4673 = vld [vmem:[#allocation13] sm:$0x1]
    %v4675 = vperm.slane %v4673, 0
    %4677 = vmatpush.msra.mxu0 %v4672
    %4678 = vmatpush.msra.mxu0 %v4671
    %4679 = vmatpush.msra.mxu0 %v4670
    %4680 = vmatpush.msra.mxu0 %v4669
    %4681 = vmatpush.msra.mxu0 %v4668
    %4682 = vmatpush.msra.mxu0 %v4667
    %4683 = vmatpush.msra.mxu0 %v4666
    %4684 = vmatpush.msra.mxu0 %v4665
    %4685 = vmatpush.msra.mxu0 %v4664
    %4686 = vmatpush.msra.mxu0 %v4663
    %4687 = vmatpush.msra.mxu0 %v4662
    %4688 = vmatpush.msra.mxu0 %v4661
    %4689 = vmatpush.msra.mxu0 %v4660
    %4690 = vmatpush.msra.mxu0 %v4659
    %4691 = vmatpush.msra.mxu0 %v4658
    %4692 = vmatpush.msra.mxu0 %v4657
    %4693 = vmatmul.f32.gmra.mxu0 %v4641
    %v4694 = vpop.f32.mrf.mxu0
    %v4695 = vadd.f32 %v4675, %v4694
    %4696 = vmatmul.f32.gmra.mxu0 %v4642
    %v4697 = vpop.f32.mrf.mxu0
    %v4698 = vadd.f32 %v4675, %v4697
    %4699 = vmatmul.f32.gmra.mxu0 %v4643
    %v4700 = vpop.f32.mrf.mxu0
    %v4701 = vadd.f32 %v4675, %v4700
    %4702 = vmatmul.f32.gmra.mxu0 %v4644
    %v4703 = vpop.f32.mrf.mxu0
    %v4704 = vadd.f32 %v4675, %v4703
    %4705 = vmatmul.f32.gmra.mxu0 %v4645
    %v4706 = vpop.f32.mrf.mxu0
    %v4707 = vadd.f32 %v4675, %v4706
    %4708 = vmatmul.f32.gmra.mxu0 %v4646
    %v4709 = vpop.f32.mrf.mxu0
    %v4710 = vadd.f32 %v4675, %v4709
    %4711 = vmatmul.f32.gmra.mxu0 %v4647
    %v4712 = vpop.f32.mrf.mxu0
    %v4713 = vadd.f32 %v4675, %v4712
    %4714 = vmatmul.f32.gmra.mxu0 %v4648
    %v4715 = vpop.f32.mrf.mxu0
    %v4716 = vadd.f32 %v4675, %v4715
    %4717 = vmatmul.f32.gmra.mxu0 %v4649
    %v4718 = vpop.f32.mrf.mxu0
    %v4719 = vadd.f32 %v4675, %v4718
    %4720 = vmatmul.f32.gmra.mxu0 %v4650
    %v4721 = vpop.f32.mrf.mxu0
    %v4722 = vadd.f32 %v4675, %v4721
    %4723 = vmatmul.f32.gmra.mxu0 %v4651
    %v4724 = vpop.f32.mrf.mxu0
    %v4725 = vadd.f32 %v4675, %v4724
    %4726 = vmatmul.f32.gmra.mxu0 %v4652
    %v4727 = vpop.f32.mrf.mxu0
    %v4728 = vadd.f32 %v4675, %v4727
    %4729 = vmatmul.f32.gmra.mxu0 %v4653
    %v4730 = vpop.f32.mrf.mxu0
    %v4731 = vadd.f32 %v4675, %v4730
    %4732 = vmatmul.f32.gmra.mxu0 %v4654
    %v4733 = vpop.f32.mrf.mxu0
    %v4734 = vadd.f32 %v4675, %v4733
    %4735 = vmatmul.f32.gmra.mxu0 %v4655
    %v4736 = vpop.f32.mrf.mxu0
    %v4737 = vadd.f32 %v4675, %v4736
    %4738 = vmatmul.f32.gmra.mxu0 %v4656
    %v4739 = vpop.f32.mrf.mxu0
    %v4740 = vadd.f32 %v4675, %v4739
    %4741 = vdwg.mxu0
    %v4742 = vmax.f32 %v4695, 0.0
    %v4743 = vmax.f32 %v4698, 0.0
    %v4744 = vmax.f32 %v4701, 0.0
    %v4745 = vmax.f32 %v4704, 0.0
    %v4746 = vmax.f32 %v4707, 0.0
    %v4747 = vmax.f32 %v4710, 0.0
    %v4748 = vmax.f32 %v4713, 0.0
    %v4749 = vmax.f32 %v4716, 0.0
    %v4750 = vmax.f32 %v4719, 0.0
    %v4751 = vmax.f32 %v4722, 0.0
    %v4752 = vmax.f32 %v4725, 0.0
    %v4753 = vmax.f32 %v4728, 0.0
    %v4754 = vmax.f32 %v4731, 0.0
    %v4755 = vmax.f32 %v4734, 0.0
    %v4756 = vmax.f32 %v4737, 0.0
    %v4757 = vmax.f32 %v4740, 0.0
    %v4758 = vld [vmem:[#allocation14] sm:$0xff]
    %v4759 = vld [vmem:[#allocation14 + $0x8] sm:$0xff]
    %v4760 = vld [vmem:[#allocation14 + $0x10] sm:$0xff]
    %v4761 = vld [vmem:[#allocation14 + $0x18] sm:$0xff]
    %v4762 = vld [vmem:[#allocation14 + $0x20] sm:$0xff]
    %v4763 = vld [vmem:[#allocation14 + $0x28] sm:$0xff]
    %v4764 = vld [vmem:[#allocation14 + $0x30] sm:$0xff]
    %v4765 = vld [vmem:[#allocation14 + $0x38] sm:$0xff]
    %v4766 = vld [vmem:[#allocation14 + $0x40] sm:$0xff]
    %v4767 = vld [vmem:[#allocation14 + $0x48] sm:$0xff]
    %v4768 = vld [vmem:[#allocation14 + $0x50] sm:$0xff]
    %v4769 = vld [vmem:[#allocation14 + $0x58] sm:$0xff]
    %v4770 = vld [vmem:[#allocation14 + $0x60] sm:$0xff]
    %v4771 = vld [vmem:[#allocation14 + $0x68] sm:$0xff]
    %v4772 = vld [vmem:[#allocation14 + $0x70] sm:$0xff]
    %v4773 = vld [vmem:[#allocation14 + $0x78] sm:$0xff]
    %v4774 = vld [vmem:[#allocation16] sm:$0x1]
    %v4776 = vperm.slane %v4774, 0
    %4778 = vmatpush.msra.mxu0 %v4773
    %4779 = vmatpush.msra.mxu0 %v4772
    %4780 = vmatpush.msra.mxu0 %v4771
    %4781 = vmatpush.msra.mxu0 %v4770
    %4782 = vmatpush.msra.mxu0 %v4769
    %4783 = vmatpush.msra.mxu0 %v4768
    %4784 = vmatpush.msra.mxu0 %v4767
    %4785 = vmatpush.msra.mxu0 %v4766
    %4786 = vmatpush.msra.mxu0 %v4765
    %4787 = vmatpush.msra.mxu0 %v4764
    %4788 = vmatpush.msra.mxu0 %v4763
    %4789 = vmatpush.msra.mxu0 %v4762
    %4790 = vmatpush.msra.mxu0 %v4761
    %4791 = vmatpush.msra.mxu0 %v4760
    %4792 = vmatpush.msra.mxu0 %v4759
    %4793 = vmatpush.msra.mxu0 %v4758
    %4794 = vmatmul.f32.gmra.mxu0 %v4742
    %v4795 = vpop.f32.mrf.mxu0
    %v4796 = vadd.f32 %v4776, %v4795
    %4797 = vmatmul.f32.gmra.mxu0 %v4743
    %v4798 = vpop.f32.mrf.mxu0
    %v4799 = vadd.f32 %v4776, %v4798
    %4800 = vmatmul.f32.gmra.mxu0 %v4744
    %v4801 = vpop.f32.mrf.mxu0
    %v4802 = vadd.f32 %v4776, %v4801
    %4803 = vmatmul.f32.gmra.mxu0 %v4745
    %v4804 = vpop.f32.mrf.mxu0
    %v4805 = vadd.f32 %v4776, %v4804
    %4806 = vmatmul.f32.gmra.mxu0 %v4746
    %v4807 = vpop.f32.mrf.mxu0
    %v4808 = vadd.f32 %v4776, %v4807
    %4809 = vmatmul.f32.gmra.mxu0 %v4747
    %v4810 = vpop.f32.mrf.mxu0
    %v4811 = vadd.f32 %v4776, %v4810
    %4812 = vmatmul.f32.gmra.mxu0 %v4748
    %v4813 = vpop.f32.mrf.mxu0
    %v4814 = vadd.f32 %v4776, %v4813
    %4815 = vmatmul.f32.gmra.mxu0 %v4749
    %v4816 = vpop.f32.mrf.mxu0
    %v4817 = vadd.f32 %v4776, %v4816
    %4818 = vmatmul.f32.gmra.mxu0 %v4750
    %v4819 = vpop.f32.mrf.mxu0
    %v4820 = vadd.f32 %v4776, %v4819
    %4821 = vmatmul.f32.gmra.mxu0 %v4751
    %v4822 = vpop.f32.mrf.mxu0
    %v4823 = vadd.f32 %v4776, %v4822
    %4824 = vmatmul.f32.gmra.mxu0 %v4752
    %v4825 = vpop.f32.mrf.mxu0
    %v4826 = vadd.f32 %v4776, %v4825
    %4827 = vmatmul.f32.gmra.mxu0 %v4753
    %v4828 = vpop.f32.mrf.mxu0
    %v4829 = vadd.f32 %v4776, %v4828
    %4830 = vmatmul.f32.gmra.mxu0 %v4754
    %v4831 = vpop.f32.mrf.mxu0
    %v4832 = vadd.f32 %v4776, %v4831
    %4833 = vmatmul.f32.gmra.mxu0 %v4755
    %v4834 = vpop.f32.mrf.mxu0
    %v4835 = vadd.f32 %v4776, %v4834
    %4836 = vmatmul.f32.gmra.mxu0 %v4756
    %v4837 = vpop.f32.mrf.mxu0
    %v4838 = vadd.f32 %v4776, %v4837
    %4839 = vmatmul.f32.gmra.mxu0 %v4757
    %v4840 = vpop.f32.mrf.mxu0
    %v4841 = vadd.f32 %v4776, %v4840
    %4842 = vdwg.mxu0
    %4843 = vst [vmem:[#allocation17] sm:$0xff] %v4796
    %4844 = vst [vmem:[#allocation17 + $0x8] sm:$0xff] %v4799
    %4845 = vst [vmem:[#allocation17 + $0x10] sm:$0xff] %v4802
    %4846 = vst [vmem:[#allocation17 + $0x18] sm:$0xff] %v4805
    %4847 = vst [vmem:[#allocation17 + $0x20] sm:$0xff] %v4808
    %4848 = vst [vmem:[#allocation17 + $0x28] sm:$0xff] %v4811
    %4849 = vst [vmem:[#allocation17 + $0x30] sm:$0xff] %v4814
    %4850 = vst [vmem:[#allocation17 + $0x38] sm:$0xff] %v4817
    %4851 = vst [vmem:[#allocation17 + $0x40] sm:$0xff] %v4820
    %4852 = vst [vmem:[#allocation17 + $0x48] sm:$0xff] %v4823
    %4853 = vst [vmem:[#allocation17 + $0x50] sm:$0xff] %v4826
    %4854 = vst [vmem:[#allocation17 + $0x58] sm:$0xff] %v4829
    %4855 = vst [vmem:[#allocation17 + $0x60] sm:$0xff] %v4832
    %4856 = vst [vmem:[#allocation17 + $0x68] sm:$0xff] %v4835
    %4857 = vst [vmem:[#allocation17 + $0x70] sm:$0xff] %v4838
    %4858 = vst [vmem:[#allocation17 + $0x78] sm:$0xff] %v4841
    // Predicated region
    $region74: #{tpu_custom_call.1} parent=1 // pred_check
      _
    $region75: #{tpu_custom_call.1} parent=1 // pred_check_branch
      %4860 = sbr.rel (0) target = $region77
    $region76: #{tpu_custom_call.1} parent=1 // pred_region
      %4862 = vsyncadd [#allocation4], 0
      %s4863 = sshll.u32 [#allocation17], 4
      %s4864 = int_to_ptr.vmem [resolvable:$true] %s4863
      %s4865 = sshll.u32 %s9, 4
      %s4866 = int_to_ptr.hbm [resolvable:$true] %s4865
      %4871 = dma.vmem_to_hbm [thread:$0]  %s4864, 2048, %s4866, [#allocation4], 128, 128, 8
    $region77: #{tpu_custom_call.1} parent=1 // pred_fallthru
      _
    // Predicated region
    $region78: #{tpu_custom_call.1} parent=1 // pred_check
      _
    $region79: #{tpu_custom_call.1} parent=1 // pred_check_branch
      %4873 = sbr.rel (0) target = $region81
    $region80: #{tpu_custom_call.1} parent=1 // pred_region
      %4875 = dma.done [#allocation4], 2048
    $region81: #{tpu_custom_call.1} parent=1 // pred_fallthru
      _
    %4876 = vsyncpa [#allocation3], 1
    %4877 = vsyncpa [#allocation6], 1
    %4878 = vsyncpa [#allocation9], 1
    %4879 = vsyncpa [#allocation12], 1
    %4880 = vsyncpa [#allocation15], 1
    %4881 = vsyncpa [#allocation4], 1

</llo_original>
